<compile_context>
chip_gen: v5e
topology: v5e:2x2
jax: 0.10.0
libtpu: 0.0.40
codegen_flags: <defaults>
</compile_context>

<pallas_src>
import jax
import jax.numpy as jnp
from jax import lax
from jax.experimental import pallas as pl
from jax.experimental.pallas import tpu as pltpu

IN_DIM = 28 * 28          # 784
IN_PAD = 7 * 128          # 896 lane-dense padding of the 784 axis
H1 = 256
H2 = 128
BN_EPS = 1e-5
DROP_P = 0.5

# Rows of the packed (8, IN_PAD) f32 parameter slab.
ROW_G1, ROW_BE1, ROW_G2, ROW_BE2, ROW_G3, ROW_BE3, ROW_B4, ROW_PAD = range(8)


def _bn_relu(h, gamma, beta):
    """Training-mode BatchNorm1d (biased batch stats) + ReLU.

    One-pass stats: sum and sum-of-squares issued back-to-back, then
    var = E[x^2] - mean^2.  gamma folded into the rsqrt scale, beta - mean*scale
    folded into a single shift.  All f32.
    """
    inv_n = 1.0 / h.shape[0]
    s1 = jnp.sum(h, axis=0, keepdims=True)
    s2 = jnp.sum(h * h, axis=0, keepdims=True)
    mean = s1 * inv_n
    var = s2 * inv_n - mean * mean
    scale = lax.rsqrt(var + BN_EPS) * gamma
    shift = beta - mean * scale
    return jnp.maximum(h * scale + shift, 0.0)


def autoencoder_kernel(x_ref, mask_ref, w1_ref, w2_ref, w3_ref, w4_ref, v_ref, o_ref):
    # Packed parameter slab (8, 896) f32: lane slices are 128-aligned.
    g1  = v_ref[ROW_G1:ROW_G1 + 1, :H1]
    be1 = v_ref[ROW_BE1:ROW_BE1 + 1, :H1]
    g2  = v_ref[ROW_G2:ROW_G2 + 1, :H2]
    be2 = v_ref[ROW_BE2:ROW_BE2 + 1, :H2]
    g3  = v_ref[ROW_G3:ROW_G3 + 1, :H1]
    be3 = v_ref[ROW_BE3:ROW_BE3 + 1, :H1]
    b4  = v_ref[ROW_B4:ROW_B4 + 1, :]

    # --- encoder layer 1: Linear(784->256, bias cancelled by BN) + BN + ReLU + Dropout ---
    h = jnp.dot(x_ref[...], w1_ref[...], preferred_element_type=jnp.float32)
    h = _bn_relu(h, g1, be1)
    h = h * mask_ref[...].astype(jnp.float32)   # inverted dropout: mask is 0 or 1/(1-p)

    # --- encoder layer 2: Linear(256->128, bias cancelled) + BN + ReLU ---
    h = jnp.dot(h.astype(jnp.bfloat16), w2_ref[...], preferred_element_type=jnp.float32)
    h = _bn_relu(h, g2, be2)

    # --- decoder layer 1: Linear(128->256, bias cancelled) + BN + ReLU ---
    h = jnp.dot(h.astype(jnp.bfloat16), w3_ref[...], preferred_element_type=jnp.float32)
    h = _bn_relu(h, g3, be3)

    # --- decoder layer 2: Linear(256->784 pad 896) + bias + Sigmoid ---
    h = jnp.dot(h.astype(jnp.bfloat16), w4_ref[...], preferred_element_type=jnp.float32) + b4
    o_ref[...] = jax.nn.sigmoid(h)              # lane-dense (B, 896) store


def prepare_params(params):
    """One-time weight preparation (bf16 cast, 784->896 pad, small-vector packing).

    Run once when params are created/updated; NOT on the per-call path.
    Returns (w1_p, w2_b, w3_b, w4_p, vec_slab).
    """
    (w1, b1, g1, be1,
     w2, b2, g2, be2,
     w3, b3, g3, be3,
     w4, b4) = params
    del b1, b2, b3  # exactly cancelled by training-mode BN mean subtraction
    bf = lambda a: a.astype(jnp.bfloat16)

    w1_p = jnp.zeros((IN_PAD, H1), jnp.bfloat16).at[:IN_DIM, :].set(bf(w1))
    w4_p = jnp.zeros((H1, IN_PAD), jnp.bfloat16).at[:, :IN_DIM].set(bf(w4))

    slab = jnp.zeros((8, IN_PAD), jnp.float32)
    slab = slab.at[ROW_G1,  :H1].set(g1.reshape(-1))
    slab = slab.at[ROW_BE1, :H1].set(be1.reshape(-1))
    slab = slab.at[ROW_G2,  :H2].set(g2.reshape(-1))
    slab = slab.at[ROW_BE2, :H2].set(be2.reshape(-1))
    slab = slab.at[ROW_G3,  :H1].set(g3.reshape(-1))
    slab = slab.at[ROW_BE3, :H1].set(be3.reshape(-1))
    slab = slab.at[ROW_B4,  :IN_DIM].set(b4.reshape(-1))

    return (w1_p, bf(w2), bf(w3), w4_p, slab)


@jax.jit
def autoencoder_forward(x, kparams, dropout_mask):
    """x: (B, 784) f32; kparams: output of prepare_params; dropout_mask: (B, 256) bf16.

    Returns the lane-dense padded output (B, 896) f32; columns 784..895 hold
    sigmoid(0)=0.5 and must be ignored/masked by the consumer.
    """
    w1_p, w2_b, w3_b, w4_p, slab = kparams
    batch = x.shape[0]

    # Only the actual input needs a per-call pad/cast (784 -> 896 lane-dense bf16).
    x_p = jnp.zeros((batch, IN_PAD), jnp.bfloat16).at[:, :IN_DIM].set(x.astype(jnp.bfloat16))

    vmem = pl.BlockSpec(memory_space=pltpu.MemorySpace.VMEM)

    return pl.pallas_call(
        autoencoder_kernel,
        out_shape=jax.ShapeDtypeStruct((batch, IN_PAD), jnp.float32),
        in_specs=[vmem] * 7,
        out_specs=vmem,
    )(x_p, dropout_mask, w1_p, w2_b, w3_b, w4_p, slab)


def reference_forward(x, params, dropout_mask):
    """Pure-JAX reference mirroring the kernel's precision choices (original math, biases kept)."""
    (w1, b1, g1, be1,
     w2, b2, g2, be2,
     w3, b3, g3, be3,
     w4, b4) = params
    bf = lambda a: a.astype(jnp.bfloat16)

    def bn_relu(h, g, be):
        m = jnp.mean(h, axis=0, keepdims=True)
        v = jnp.mean((h - m) ** 2, axis=0, keepdims=True)
        return jnp.maximum((h - m) * lax.rsqrt(v + BN_EPS) * g + be, 0.0)

    h = jnp.dot(bf(x), bf(w1), preferred_element_type=jnp.float32) + b1
    h = bn_relu(h, g1, be1) * dropout_mask.astype(jnp.float32)
    h = jnp.dot(bf(h), bf(w2), preferred_element_type=jnp.float32) + b2
    h = bn_relu(h, g2, be2)
    h = jnp.dot(bf(h), bf(w3), preferred_element_type=jnp.float32) + b3
    h = bn_relu(h, g3, be3)
    h = jnp.dot(bf(h), bf(w4), preferred_element_type=jnp.float32) + b4
    return jax.nn.sigmoid(h)


def init_params(key):
    """PyTorch-style init. Linear: U(-1/sqrt(fan_in), ...); BN: gamma=1, beta=0.
    Weights stored as (in_features, out_features)."""
    def linear(k, fan_in, fan_out):
        kw, kb = jax.random.split(k)
        bound = 1.0 / jnp.sqrt(float(fan_in))
        w = jax.random.uniform(kw, (fan_in, fan_out), jnp.float32, -bound, bound)
        b = jax.random.uniform(kb, (1, fan_out), jnp.float32, -bound, bound)
        return w, b

    def bn(n):
        return jnp.ones((1, n), jnp.float32), jnp.zeros((1, n), jnp.float32)

    k1, k2, k3, k4 = jax.random.split(key, 4)
    w1, b1 = linear(k1, IN_DIM, H1); g1, be1 = bn(H1)
    w2, b2 = linear(k2, H1, H2);     g2, be2 = bn(H2)
    w3, b3 = linear(k3, H2, H1);     g3, be3 = bn(H1)
    w4, b4 = linear(k4, H1, IN_DIM)
    return (w1, b1, g1, be1,
            w2, b2, g2, be2,
            w3, b3, g3, be3,
            w4, b4)


if __name__ == "__main__":
    key = jax.random.PRNGKey(0)
    k_x, k_p, k_d = jax.random.split(key, 3)

    batch = 128  # full-height MXU tiles; training-mode BN stats over this batch
    x = jax.random.uniform(k_x, (batch, IN_DIM), jnp.float32)   # flattened 28x28 images
    params = init_params(k_p)
    kparams = prepare_params(params)   # one-time pad/cast/pack (hoisted off the hot path)

    # Training-mode inverted dropout mask (p=0.5): values 0.0 or 2.0, bf16-exact.
    keep = jax.random.bernoulli(k_d, 1.0 - DROP_P, (batch, H1))
    dropout_mask = (keep.astype(jnp.float32) / (1.0 - DROP_P)).astype(jnp.bfloat16)

    out_padded = autoencoder_forward(x, kparams, dropout_mask)
    out_padded = jax.block_until_ready(out_padded)
    assert out_padded.shape == (batch, IN_PAD)
    assert out_padded.dtype == jnp.float32

    # Test-only slice: a real consumer (e.g. reconstruction loss) would just mask
    # / ignore the padded columns and keep the buffer lane-dense end-to-end.
    out = out_padded[:, :IN_DIM]
    assert bool(jnp.all(jnp.isfinite(out)))
    assert bool(jnp.all((out >= 0.0) & (out <= 1.0)))           # sigmoid range

    ref = reference_forward(x, params, dropout_mask)
    max_err = float(jnp.max(jnp.abs(out - ref)))
    assert max_err < 1e-2, f"mismatch vs reference: {max_err}"

    print("KERNEL_OK")
</pallas_src>

<mosaic_0001>
module attributes {stable_mosaic.version = 11 : i64} {
  func.func @autoencoder_kernel(%arg0: memref<128x896xbf16, #tpu.memory_space<vmem>>, %arg1: memref<128x256xbf16, #tpu.memory_space<vmem>>, %arg2: memref<896x256xbf16, #tpu.memory_space<vmem>>, %arg3: memref<256x128xbf16, #tpu.memory_space<vmem>>, %arg4: memref<128x256xbf16, #tpu.memory_space<vmem>>, %arg5: memref<256x896xbf16, #tpu.memory_space<vmem>>, %arg6: memref<8x896xf32, #tpu.memory_space<vmem>>, %arg7: memref<128x896xf32, #tpu.memory_space<vmem>>) attributes {dimension_semantics = [], scalar_prefetch = 0 : i64, scratch_operands = 0 : i64, tpu.core_type = #tpu.core_type<tc>} {
    %c0 = arith.constant 0 : index
    %c0_0 = arith.constant 0 : index
    %0 = vector.load %arg6[%c0, %c0_0] : memref<8x896xf32, #tpu.memory_space<vmem>>, vector<1x256xf32>
    %c1 = arith.constant 1 : index
    %c0_1 = arith.constant 0 : index
    %1 = vector.load %arg6[%c1, %c0_1] : memref<8x896xf32, #tpu.memory_space<vmem>>, vector<1x256xf32>
    %c2 = arith.constant 2 : index
    %c0_2 = arith.constant 0 : index
    %2 = vector.load %arg6[%c2, %c0_2] : memref<8x896xf32, #tpu.memory_space<vmem>>, vector<1x128xf32>
    %c3 = arith.constant 3 : index
    %c0_3 = arith.constant 0 : index
    %3 = vector.load %arg6[%c3, %c0_3] : memref<8x896xf32, #tpu.memory_space<vmem>>, vector<1x128xf32>
    %c4 = arith.constant 4 : index
    %c0_4 = arith.constant 0 : index
    %4 = vector.load %arg6[%c4, %c0_4] : memref<8x896xf32, #tpu.memory_space<vmem>>, vector<1x256xf32>
    %c5 = arith.constant 5 : index
    %c0_5 = arith.constant 0 : index
    %5 = vector.load %arg6[%c5, %c0_5] : memref<8x896xf32, #tpu.memory_space<vmem>>, vector<1x256xf32>
    %c6 = arith.constant 6 : index
    %c0_6 = arith.constant 0 : index
    %6 = vector.load %arg6[%c6, %c0_6] : memref<8x896xf32, #tpu.memory_space<vmem>>, vector<1x896xf32>
    %c0_7 = arith.constant 0 : index
    %c0_8 = arith.constant 0 : index
    %7 = vector.load %arg0[%c0_7, %c0_8] : memref<128x896xbf16, #tpu.memory_space<vmem>>, vector<128x896xbf16>
    %c0_9 = arith.constant 0 : index
    %c0_10 = arith.constant 0 : index
    %8 = vector.load %arg2[%c0_9, %c0_10] : memref<896x256xbf16, #tpu.memory_space<vmem>>, vector<896x256xbf16>
    %cst = arith.constant dense<0.000000e+00> : vector<128x256xf32>
    %9 = tpu.matmul %7, %8, %cst {dimension_numbers = #tpu.dot_dimension_numbers<[1], [0], [0], [1], [0, 0, 1, 1], [], []>} : vector<128x896xbf16>, vector<896x256xbf16>, vector<128x256xf32> -> vector<128x256xf32>
    %cst_11 = arith.constant dense<0.000000e+00> : vector<256xf32>
    %10 = vector.multi_reduction <add>, %9, %cst_11 [0] : vector<128x256xf32> to vector<256xf32>
    %11 = vector.shape_cast %10 : vector<256xf32> to vector<1x256xf32>
    %12 = arith.mulf %9, %9 : vector<128x256xf32>
    %cst_12 = arith.constant dense<0.000000e+00> : vector<256xf32>
    %13 = vector.multi_reduction <add>, %12, %cst_12 [0] : vector<128x256xf32> to vector<256xf32>
    %14 = vector.shape_cast %13 : vector<256xf32> to vector<1x256xf32>
    %cst_13 = arith.constant 7.812500e-03 : f32
    %15 = vector.broadcast %cst_13 : f32 to vector<1x256xf32>
    %16 = arith.mulf %11, %15 : vector<1x256xf32>
    %cst_14 = arith.constant 7.812500e-03 : f32
    %17 = vector.broadcast %cst_14 : f32 to vector<1x256xf32>
    %18 = arith.mulf %14, %17 : vector<1x256xf32>
    %19 = arith.mulf %16, %16 : vector<1x256xf32>
    %20 = arith.subf %18, %19 : vector<1x256xf32>
    %cst_15 = arith.constant 9.99999974E-6 : f32
    %21 = vector.broadcast %cst_15 : f32 to vector<1x256xf32>
    %22 = arith.addf %20, %21 : vector<1x256xf32>
    %23 = math.rsqrt %22 : vector<1x256xf32>
    %24 = arith.mulf %23, %0 : vector<1x256xf32>
    %25 = arith.mulf %16, %24 : vector<1x256xf32>
    %26 = arith.subf %1, %25 : vector<1x256xf32>
    %27 = vector.broadcast %24 : vector<1x256xf32> to vector<128x256xf32>
    %28 = arith.mulf %9, %27 : vector<128x256xf32>
    %29 = vector.broadcast %26 : vector<1x256xf32> to vector<128x256xf32>
    %30 = arith.addf %28, %29 : vector<128x256xf32>
    %cst_16 = arith.constant 0.000000e+00 : f32
    %31 = vector.broadcast %cst_16 : f32 to vector<128x256xf32>
    %32 = arith.maximumf %30, %31 : vector<128x256xf32>
    %c0_17 = arith.constant 0 : index
    %c0_18 = arith.constant 0 : index
    %33 = vector.load %arg1[%c0_17, %c0_18] : memref<128x256xbf16, #tpu.memory_space<vmem>>, vector<128x256xbf16>
    %34 = arith.extf %33 : vector<128x256xbf16> to vector<128x256xf32>
    %35 = arith.mulf %32, %34 : vector<128x256xf32>
    %36 = arith.truncf %35 : vector<128x256xf32> to vector<128x256xbf16>
    %c0_19 = arith.constant 0 : index
    %c0_20 = arith.constant 0 : index
    %37 = vector.load %arg3[%c0_19, %c0_20] : memref<256x128xbf16, #tpu.memory_space<vmem>>, vector<256x128xbf16>
    %cst_21 = arith.constant dense<0.000000e+00> : vector<128x128xf32>
    %38 = tpu.matmul %36, %37, %cst_21 {dimension_numbers = #tpu.dot_dimension_numbers<[1], [0], [0], [1], [0, 0, 1, 1], [], []>} : vector<128x256xbf16>, vector<256x128xbf16>, vector<128x128xf32> -> vector<128x128xf32>
    %cst_22 = arith.constant dense<0.000000e+00> : vector<128xf32>
    %39 = vector.multi_reduction <add>, %38, %cst_22 [0] : vector<128x128xf32> to vector<128xf32>
    %40 = vector.shape_cast %39 : vector<128xf32> to vector<1x128xf32>
    %41 = arith.mulf %38, %38 : vector<128x128xf32>
    %cst_23 = arith.constant dense<0.000000e+00> : vector<128xf32>
    %42 = vector.multi_reduction <add>, %41, %cst_23 [0] : vector<128x128xf32> to vector<128xf32>
    %43 = vector.shape_cast %42 : vector<128xf32> to vector<1x128xf32>
    %cst_24 = arith.constant 7.812500e-03 : f32
    %44 = vector.broadcast %cst_24 : f32 to vector<1x128xf32>
    %45 = arith.mulf %40, %44 : vector<1x128xf32>
    %cst_25 = arith.constant 7.812500e-03 : f32
    %46 = vector.broadcast %cst_25 : f32 to vector<1x128xf32>
    %47 = arith.mulf %43, %46 : vector<1x128xf32>
    %48 = arith.mulf %45, %45 : vector<1x128xf32>
    %49 = arith.subf %47, %48 : vector<1x128xf32>
    %cst_26 = arith.constant 9.99999974E-6 : f32
    %50 = vector.broadcast %cst_26 : f32 to vector<1x128xf32>
    %51 = arith.addf %49, %50 : vector<1x128xf32>
    %52 = math.rsqrt %51 : vector<1x128xf32>
    %53 = arith.mulf %52, %2 : vector<1x128xf32>
    %54 = arith.mulf %45, %53 : vector<1x128xf32>
    %55 = arith.subf %3, %54 : vector<1x128xf32>
    %56 = vector.broadcast %53 : vector<1x128xf32> to vector<128x128xf32>
    %57 = arith.mulf %38, %56 : vector<128x128xf32>
    %58 = vector.broadcast %55 : vector<1x128xf32> to vector<128x128xf32>
    %59 = arith.addf %57, %58 : vector<128x128xf32>
    %cst_27 = arith.constant 0.000000e+00 : f32
    %60 = vector.broadcast %cst_27 : f32 to vector<128x128xf32>
    %61 = arith.maximumf %59, %60 : vector<128x128xf32>
    %62 = arith.truncf %61 : vector<128x128xf32> to vector<128x128xbf16>
    %c0_28 = arith.constant 0 : index
    %c0_29 = arith.constant 0 : index
    %63 = vector.load %arg4[%c0_28, %c0_29] : memref<128x256xbf16, #tpu.memory_space<vmem>>, vector<128x256xbf16>
    %cst_30 = arith.constant dense<0.000000e+00> : vector<128x256xf32>
    %64 = tpu.matmul %62, %63, %cst_30 {dimension_numbers = #tpu.dot_dimension_numbers<[1], [0], [0], [1], [0, 0, 1, 1], [], []>} : vector<128x128xbf16>, vector<128x256xbf16>, vector<128x256xf32> -> vector<128x256xf32>
    %cst_31 = arith.constant dense<0.000000e+00> : vector<256xf32>
    %65 = vector.multi_reduction <add>, %64, %cst_31 [0] : vector<128x256xf32> to vector<256xf32>
    %66 = vector.shape_cast %65 : vector<256xf32> to vector<1x256xf32>
    %67 = arith.mulf %64, %64 : vector<128x256xf32>
    %cst_32 = arith.constant dense<0.000000e+00> : vector<256xf32>
    %68 = vector.multi_reduction <add>, %67, %cst_32 [0] : vector<128x256xf32> to vector<256xf32>
    %69 = vector.shape_cast %68 : vector<256xf32> to vector<1x256xf32>
    %cst_33 = arith.constant 7.812500e-03 : f32
    %70 = vector.broadcast %cst_33 : f32 to vector<1x256xf32>
    %71 = arith.mulf %66, %70 : vector<1x256xf32>
    %cst_34 = arith.constant 7.812500e-03 : f32
    %72 = vector.broadcast %cst_34 : f32 to vector<1x256xf32>
    %73 = arith.mulf %69, %72 : vector<1x256xf32>
    %74 = arith.mulf %71, %71 : vector<1x256xf32>
    %75 = arith.subf %73, %74 : vector<1x256xf32>
    %cst_35 = arith.constant 9.99999974E-6 : f32
    %76 = vector.broadcast %cst_35 : f32 to vector<1x256xf32>
    %77 = arith.addf %75, %76 : vector<1x256xf32>
    %78 = math.rsqrt %77 : vector<1x256xf32>
    %79 = arith.mulf %78, %4 : vector<1x256xf32>
    %80 = arith.mulf %71, %79 : vector<1x256xf32>
    %81 = arith.subf %5, %80 : vector<1x256xf32>
    %82 = vector.broadcast %79 : vector<1x256xf32> to vector<128x256xf32>
    %83 = arith.mulf %64, %82 : vector<128x256xf32>
    %84 = vector.broadcast %81 : vector<1x256xf32> to vector<128x256xf32>
    %85 = arith.addf %83, %84 : vector<128x256xf32>
    %cst_36 = arith.constant 0.000000e+00 : f32
    %86 = vector.broadcast %cst_36 : f32 to vector<128x256xf32>
    %87 = arith.maximumf %85, %86 : vector<128x256xf32>
    %88 = arith.truncf %87 : vector<128x256xf32> to vector<128x256xbf16>
    %c0_37 = arith.constant 0 : index
    %c0_38 = arith.constant 0 : index
    %89 = vector.load %arg5[%c0_37, %c0_38] : memref<256x896xbf16, #tpu.memory_space<vmem>>, vector<256x896xbf16>
    %cst_39 = arith.constant dense<0.000000e+00> : vector<128x896xf32>
    %90 = tpu.matmul %88, %89, %cst_39 {dimension_numbers = #tpu.dot_dimension_numbers<[1], [0], [0], [1], [0, 0, 1, 1], [], []>} : vector<128x256xbf16>, vector<256x896xbf16>, vector<128x896xf32> -> vector<128x896xf32>
    %91 = vector.broadcast %6 : vector<1x896xf32> to vector<128x896xf32>
    %92 = arith.addf %90, %91 : vector<128x896xf32>
    %93 = arith.negf %92 : vector<128x896xf32>
    %94 = math.exp %93 : vector<128x896xf32>
    %cst_40 = arith.constant 1.000000e+00 : f32
    %95 = vector.broadcast %cst_40 : f32 to vector<128x896xf32>
    %96 = arith.addf %95, %94 : vector<128x896xf32>
    %97 = arith.divf %95, %96 : vector<128x896xf32>
    %c0_41 = arith.constant 0 : index
    %c0_42 = arith.constant 0 : index
    %98 = vector.load %arg7[%c0_41, %c0_42] : memref<128x896xf32, #tpu.memory_space<vmem>>, vector<128x896xf32>
    tpu.vector_store %arg7[%c0_41, %c0_42], %97 {strides = array<i32>} : memref<128x896xf32, #tpu.memory_space<vmem>>, vector<128x896xf32>,
    return
  }
}

</mosaic_0001>

<llo_original>
// kernel: autoencoder_forward.1
$region0: #{autoencoder_forward.1}
  #allocation0 [shape = 'u32[]', space=smem, size = 0x4, offset = 0x4, fixed_abs, tag = 'smem constant byte address 0x4 - core index']
  #allocation1 [shape = 'u32[72,128]{1,0:T(1,128)}', space=vmem, size = 0x9000, scoped, tag = 'internal scratch']
  %s0 = inlined_call_operand.vmem [shape: bf16[128,896], index: 0, kind: input, shape index: {}]
  %s1 = inlined_call_operand.vmem [shape: bf16[128,256], index: 1, kind: input, shape index: {}]
  %s2 = inlined_call_operand.vmem [shape: bf16[896,256], index: 2, kind: input, shape index: {}]
  %s3 = inlined_call_operand.vmem [shape: bf16[256,128], index: 3, kind: input, shape index: {}]
  %s4 = inlined_call_operand.vmem [shape: bf16[128,256], index: 4, kind: input, shape index: {}]
  %s5 = inlined_call_operand.vmem [shape: bf16[256,896], index: 5, kind: input, shape index: {}]
  %s6 = inlined_call_operand.vmem [shape: f32[8,896], index: 6, kind: input, shape index: {}]
  %s7 = inlined_call_operand.hbm [shape: f32[128,896], index: 7, kind: output, shape index: {}]
  %s8 = sld [smem:[#allocation0]]
  $region38: #{autoencoder_forward.1} parent=0
    _
  %s10 = ssub.s32 1, %s8
  %s11 = scalar_select 0, %s10, %s8
  $region1: #{autoencoder_forward.1} parent=0
    #allocation2 [shape = 'u8[458752]{0}', space=vmem, size = 0x70000, scoped, tag = 'output window, operand 0, single buffered']
    #allocation3 [shape = 's32[1]{0}', space=sflag, size = 0x4, scoped, tag = 'scoped memory for autoencoder_forward.1']
    %12 = vsyncpa [#allocation3], 0
    // Predicated region
    $region2: #{autoencoder_forward.1} parent=1 // pred_check
      _
    $region3: #{autoencoder_forward.1} parent=1 // pred_check_branch
      %14 = sbr.rel (0) target = $region5
    $region4: #{autoencoder_forward.1} parent=1 // pred_region
      _
    $region5: #{autoencoder_forward.1} parent=1 // pred_fallthru
      _
    // Predicated region
    $region6: #{autoencoder_forward.1} parent=1 // pred_check
      _
    $region7: #{autoencoder_forward.1} parent=1 // pred_check_branch
      %16 = sbr.rel (0) target = $region9
    $region8: #{autoencoder_forward.1} parent=1 // pred_region
      _
    $region9: #{autoencoder_forward.1} parent=1 // pred_fallthru
      _
    // Predicated region
    $region10: #{autoencoder_forward.1} parent=1 // pred_check
      _
    $region11: #{autoencoder_forward.1} parent=1 // pred_check_branch
      %18 = sbr.rel (0) target = $region13
    $region12: #{autoencoder_forward.1} parent=1 // pred_region
      _
    $region13: #{autoencoder_forward.1} parent=1 // pred_fallthru
      _
    // Predicated region
    $region14: #{autoencoder_forward.1} parent=1 // pred_check
      _
    $region15: #{autoencoder_forward.1} parent=1 // pred_check_branch
      %20 = sbr.rel (0) target = $region17
    $region16: #{autoencoder_forward.1} parent=1 // pred_region
      _
    $region17: #{autoencoder_forward.1} parent=1 // pred_fallthru
      _
    // Predicated region
    $region18: #{autoencoder_forward.1} parent=1 // pred_check
      _
    $region19: #{autoencoder_forward.1} parent=1 // pred_check_branch
      %22 = sbr.rel (0) target = $region21
    $region20: #{autoencoder_forward.1} parent=1 // pred_region
      _
    $region21: #{autoencoder_forward.1} parent=1 // pred_fallthru
      _
    // Predicated region
    $region22: #{autoencoder_forward.1} parent=1 // pred_check
      _
    $region23: #{autoencoder_forward.1} parent=1 // pred_check_branch
      %24 = sbr.rel (0) target = $region25
    $region24: #{autoencoder_forward.1} parent=1 // pred_region
      _
    $region25: #{autoencoder_forward.1} parent=1 // pred_fallthru
      _
    // Predicated region
    $region26: #{autoencoder_forward.1} parent=1 // pred_check
      _
    $region27: #{autoencoder_forward.1} parent=1 // pred_check_branch
      %26 = sbr.rel (0) target = $region29
    $region28: #{autoencoder_forward.1} parent=1 // pred_region
      _
    $region29: #{autoencoder_forward.1} parent=1 // pred_fallthru
      _
    %v27 = vld [vmem:[%s6] ss:$8 sm:$0x3]
    %s28 = scalar_lea.vmem %s6, 1
    %v29 = vld [vmem:[%s28] ss:$8 sm:$0x3]
    %v30 = vld [vmem:[%s6 + $0x2] ss:$0 sm:$0xff]
    %v31 = vld [vmem:[%s6 + $0x3] ss:$0 sm:$0xff]
    %s32 = scalar_lea.vmem %s6, 4
    %v33 = vld [vmem:[%s32] ss:$8 sm:$0x3]
    %s34 = scalar_lea.vmem %s6, 5
    %v35 = vld [vmem:[%s34] ss:$8 sm:$0x3]
    %s36 = scalar_lea.vmem %s6, 6
    %v37 = vld [vmem:[%s36] ss:$8 sm:$0xf]
    %v38 = vld [vmem:[%s36] ss:$8 sm:$0xf0]
    %v39 = vor.u32 %v37, %v38
    %v40 = vld [vmem:[%s0] sm:$0xff]
    %v41 = vld [vmem:[%s0 + $0x8] sm:$0xff]
    %v42 = vld [vmem:[%s0 + $0x10] sm:$0xff]
    %v43 = vld [vmem:[%s0 + $0x18] sm:$0xf]
    %v44 = vld [vmem:[%s0 + $0x1c] sm:$0xff]
    %v45 = vld [vmem:[%s0 + $0x24] sm:$0xff]
    %v46 = vld [vmem:[%s0 + $0x2c] sm:$0xff]
    %v47 = vld [vmem:[%s0 + $0x34] sm:$0xf]
    %v48 = vld [vmem:[%s0 + $0x38] sm:$0xff]
    %v49 = vld [vmem:[%s0 + $0x40] sm:$0xff]
    %v50 = vld [vmem:[%s0 + $0x48] sm:$0xff]
    %v51 = vld [vmem:[%s0 + $0x50] sm:$0xf]
    %v52 = vld [vmem:[%s0 + $0x54] sm:$0xff]
    %v53 = vld [vmem:[%s0 + $0x5c] sm:$0xff]
    %v54 = vld [vmem:[%s0 + $0x64] sm:$0xff]
    %v55 = vld [vmem:[%s0 + $0x6c] sm:$0xf]
    %v56 = vld [vmem:[%s0 + $0x70] sm:$0xff]
    %v57 = vld [vmem:[%s0 + $0x78] sm:$0xff]
    %v58 = vld [vmem:[%s0 + $0x80] sm:$0xff]
    %v59 = vld [vmem:[%s0 + $0x88] sm:$0xf]
    %v60 = vld [vmem:[%s0 + $0x8c] sm:$0xff]
    %v61 = vld [vmem:[%s0 + $0x94] sm:$0xff]
    %v62 = vld [vmem:[%s0 + $0x9c] sm:$0xff]
    %v63 = vld [vmem:[%s0 + $0xa4] sm:$0xf]
    %v64 = vld [vmem:[%s0 + $0xa8] sm:$0xff]
    %v65 = vld [vmem:[%s0 + $0xb0] sm:$0xff]
    %v66 = vld [vmem:[%s0 + $0xb8] sm:$0xff]
    %v67 = vld [vmem:[%s0 + $0xc0] sm:$0xf]
    %v68 = vld [vmem:[%s0 + $0xc4] sm:$0xff]
    %v69 = vld [vmem:[%s0 + $0xcc] sm:$0xff]
    %v70 = vld [vmem:[%s0 + $0xd4] sm:$0xff]
    %v71 = vld [vmem:[%s0 + $0xdc] sm:$0xf]
    %v72 = vld [vmem:[%s0 + $0xe0] sm:$0xff]
    %v73 = vld [vmem:[%s0 + $0xe8] sm:$0xff]
    %v74 = vld [vmem:[%s0 + $0xf0] sm:$0xff]
    %v75 = vld [vmem:[%s0 + $0xf8] sm:$0xf]
    %v76 = vld [vmem:[%s0 + $0xfc] sm:$0xff]
    %v77 = vld [vmem:[%s0 + $0x104] sm:$0xff]
    %v78 = vld [vmem:[%s0 + $0x10c] sm:$0xff]
    %v79 = vld [vmem:[%s0 + $0x114] sm:$0xf]
    %v80 = vld [vmem:[%s0 + $0x118] sm:$0xff]
    %v81 = vld [vmem:[%s0 + $0x120] sm:$0xff]
    %v82 = vld [vmem:[%s0 + $0x128] sm:$0xff]
    %v83 = vld [vmem:[%s0 + $0x130] sm:$0xf]
    %v84 = vld [vmem:[%s0 + $0x134] sm:$0xff]
    %v85 = vld [vmem:[%s0 + $0x13c] sm:$0xff]
    %v86 = vld [vmem:[%s0 + $0x144] sm:$0xff]
    %v87 = vld [vmem:[%s0 + $0x14c] sm:$0xf]
    %v88 = vld [vmem:[%s0 + $0x150] sm:$0xff]
    %v89 = vld [vmem:[%s0 + $0x158] sm:$0xff]
    %v90 = vld [vmem:[%s0 + $0x160] sm:$0xff]
    %v91 = vld [vmem:[%s0 + $0x168] sm:$0xf]
    %v92 = vld [vmem:[%s0 + $0x16c] sm:$0xff]
    %v93 = vld [vmem:[%s0 + $0x174] sm:$0xff]
    %v94 = vld [vmem:[%s0 + $0x17c] sm:$0xff]
    %v95 = vld [vmem:[%s0 + $0x184] sm:$0xf]
    %v96 = vld [vmem:[%s0 + $0x188] sm:$0xff]
    %v97 = vld [vmem:[%s0 + $0x190] sm:$0xff]
    %v98 = vld [vmem:[%s0 + $0x198] sm:$0xff]
    %v99 = vld [vmem:[%s0 + $0x1a0] sm:$0xf]
    %v100 = vld [vmem:[%s0 + $0x1a4] sm:$0xff]
    %v101 = vld [vmem:[%s0 + $0x1ac] sm:$0xff]
    %v102 = vld [vmem:[%s0 + $0x1b4] sm:$0xff]
    %v103 = vld [vmem:[%s0 + $0x1bc] sm:$0xf]
    %v104 = vld [vmem:[%s2] sm:$0xff]
    %v105 = vld [vmem:[%s2 + $0x8] sm:$0xff]
    %v106 = vld [vmem:[%s2 + $0x10] sm:$0xff]
    %v107 = vld [vmem:[%s2 + $0x18] sm:$0xff]
    %v108 = vld [vmem:[%s2 + $0x20] sm:$0xff]
    %v109 = vld [vmem:[%s2 + $0x28] sm:$0xff]
    %v110 = vld [vmem:[%s2 + $0x30] sm:$0xff]
    %v111 = vld [vmem:[%s2 + $0x38] sm:$0xff]
    %v112 = vld [vmem:[%s2 + $0x40] sm:$0xff]
    %v113 = vld [vmem:[%s2 + $0x48] sm:$0xff]
    %v114 = vld [vmem:[%s2 + $0x50] sm:$0xff]
    %v115 = vld [vmem:[%s2 + $0x58] sm:$0xff]
    %v116 = vld [vmem:[%s2 + $0x60] sm:$0xff]
    %v117 = vld [vmem:[%s2 + $0x68] sm:$0xff]
    %v118 = vld [vmem:[%s2 + $0x70] sm:$0xff]
    %v119 = vld [vmem:[%s2 + $0x78] sm:$0xff]
    %v120 = vld [vmem:[%s2 + $0x80] sm:$0xff]
    %v121 = vld [vmem:[%s2 + $0x88] sm:$0xff]
    %v122 = vld [vmem:[%s2 + $0x90] sm:$0xff]
    %v123 = vld [vmem:[%s2 + $0x98] sm:$0xff]
    %v124 = vld [vmem:[%s2 + $0xa0] sm:$0xff]
    %v125 = vld [vmem:[%s2 + $0xa8] sm:$0xff]
    %v126 = vld [vmem:[%s2 + $0xb0] sm:$0xff]
    %v127 = vld [vmem:[%s2 + $0xb8] sm:$0xff]
    %v128 = vld [vmem:[%s2 + $0xc0] sm:$0xff]
    %v129 = vld [vmem:[%s2 + $0xc8] sm:$0xff]
    %v130 = vld [vmem:[%s2 + $0xd0] sm:$0xff]
    %v131 = vld [vmem:[%s2 + $0xd8] sm:$0xff]
    %v132 = vld [vmem:[%s2 + $0xe0] sm:$0xff]
    %v133 = vld [vmem:[%s2 + $0xe8] sm:$0xff]
    %v134 = vld [vmem:[%s2 + $0xf0] sm:$0xff]
    %v135 = vld [vmem:[%s2 + $0xf8] sm:$0xff]
    %v136 = vld [vmem:[%s2 + $0x100] sm:$0xff]
    %v137 = vld [vmem:[%s2 + $0x108] sm:$0xff]
    %v138 = vld [vmem:[%s2 + $0x110] sm:$0xff]
    %v139 = vld [vmem:[%s2 + $0x118] sm:$0xff]
    %v140 = vld [vmem:[%s2 + $0x120] sm:$0xff]
    %v141 = vld [vmem:[%s2 + $0x128] sm:$0xff]
    %v142 = vld [vmem:[%s2 + $0x130] sm:$0xff]
    %v143 = vld [vmem:[%s2 + $0x138] sm:$0xff]
    %v144 = vld [vmem:[%s2 + $0x140] sm:$0xff]
    %v145 = vld [vmem:[%s2 + $0x148] sm:$0xff]
    %v146 = vld [vmem:[%s2 + $0x150] sm:$0xff]
    %v147 = vld [vmem:[%s2 + $0x158] sm:$0xff]
    %v148 = vld [vmem:[%s2 + $0x160] sm:$0xff]
    %v149 = vld [vmem:[%s2 + $0x168] sm:$0xff]
    %v150 = vld [vmem:[%s2 + $0x170] sm:$0xff]
    %v151 = vld [vmem:[%s2 + $0x178] sm:$0xff]
    %v152 = vld [vmem:[%s2 + $0x180] sm:$0xff]
    %v153 = vld [vmem:[%s2 + $0x188] sm:$0xff]
    %v154 = vld [vmem:[%s2 + $0x190] sm:$0xff]
    %v155 = vld [vmem:[%s2 + $0x198] sm:$0xff]
    %v156 = vld [vmem:[%s2 + $0x1a0] sm:$0xff]
    %v157 = vld [vmem:[%s2 + $0x1a8] sm:$0xff]
    %v158 = vld [vmem:[%s2 + $0x1b0] sm:$0xff]
    %v159 = vld [vmem:[%s2 + $0x1b8] sm:$0xff]
    %v160 = vld [vmem:[%s2 + $0x1c0] sm:$0xff]
    %v161 = vld [vmem:[%s2 + $0x1c8] sm:$0xff]
    %v162 = vld [vmem:[%s2 + $0x1d0] sm:$0xff]
    %v163 = vld [vmem:[%s2 + $0x1d8] sm:$0xff]
    %v164 = vld [vmem:[%s2 + $0x1e0] sm:$0xff]
    %v165 = vld [vmem:[%s2 + $0x1e8] sm:$0xff]
    %v166 = vld [vmem:[%s2 + $0x1f0] sm:$0xff]
    %v167 = vld [vmem:[%s2 + $0x1f8] sm:$0xff]
    %v168 = vld [vmem:[%s2 + $0x200] sm:$0xff]
    %v169 = vld [vmem:[%s2 + $0x208] sm:$0xff]
    %v170 = vld [vmem:[%s2 + $0x210] sm:$0xff]
    %v171 = vld [vmem:[%s2 + $0x218] sm:$0xff]
    %v172 = vld [vmem:[%s2 + $0x220] sm:$0xff]
    %v173 = vld [vmem:[%s2 + $0x228] sm:$0xff]
    %v174 = vld [vmem:[%s2 + $0x230] sm:$0xff]
    %v175 = vld [vmem:[%s2 + $0x238] sm:$0xff]
    %v176 = vld [vmem:[%s2 + $0x240] sm:$0xff]
    %v177 = vld [vmem:[%s2 + $0x248] sm:$0xff]
    %v178 = vld [vmem:[%s2 + $0x250] sm:$0xff]
    %v179 = vld [vmem:[%s2 + $0x258] sm:$0xff]
    %v180 = vld [vmem:[%s2 + $0x260] sm:$0xff]
    %v181 = vld [vmem:[%s2 + $0x268] sm:$0xff]
    %v182 = vld [vmem:[%s2 + $0x270] sm:$0xff]
    %v183 = vld [vmem:[%s2 + $0x278] sm:$0xff]
    %v184 = vld [vmem:[%s2 + $0x280] sm:$0xff]
    %v185 = vld [vmem:[%s2 + $0x288] sm:$0xff]
    %v186 = vld [vmem:[%s2 + $0x290] sm:$0xff]
    %v187 = vld [vmem:[%s2 + $0x298] sm:$0xff]
    %v188 = vld [vmem:[%s2 + $0x2a0] sm:$0xff]
    %v189 = vld [vmem:[%s2 + $0x2a8] sm:$0xff]
    %v190 = vld [vmem:[%s2 + $0x2b0] sm:$0xff]
    %v191 = vld [vmem:[%s2 + $0x2b8] sm:$0xff]
    %v192 = vld [vmem:[%s2 + $0x2c0] sm:$0xff]
    %v193 = vld [vmem:[%s2 + $0x2c8] sm:$0xff]
    %v194 = vld [vmem:[%s2 + $0x2d0] sm:$0xff]
    %v195 = vld [vmem:[%s2 + $0x2d8] sm:$0xff]
    %v196 = vld [vmem:[%s2 + $0x2e0] sm:$0xff]
    %v197 = vld [vmem:[%s2 + $0x2e8] sm:$0xff]
    %v198 = vld [vmem:[%s2 + $0x2f0] sm:$0xff]
    %v199 = vld [vmem:[%s2 + $0x2f8] sm:$0xff]
    %v200 = vld [vmem:[%s2 + $0x300] sm:$0xff]
    %v201 = vld [vmem:[%s2 + $0x308] sm:$0xff]
    %v202 = vld [vmem:[%s2 + $0x310] sm:$0xff]
    %v203 = vld [vmem:[%s2 + $0x318] sm:$0xff]
    %v204 = vld [vmem:[%s2 + $0x320] sm:$0xff]
    %v205 = vld [vmem:[%s2 + $0x328] sm:$0xff]
    %v206 = vld [vmem:[%s2 + $0x330] sm:$0xff]
    %v207 = vld [vmem:[%s2 + $0x338] sm:$0xff]
    %v208 = vld [vmem:[%s2 + $0x340] sm:$0xff]
    %v209 = vld [vmem:[%s2 + $0x348] sm:$0xff]
    %v210 = vld [vmem:[%s2 + $0x350] sm:$0xff]
    %v211 = vld [vmem:[%s2 + $0x358] sm:$0xff]
    %v212 = vld [vmem:[%s2 + $0x360] sm:$0xff]
    %v213 = vld [vmem:[%s2 + $0x368] sm:$0xff]
    %v214 = vld [vmem:[%s2 + $0x370] sm:$0xff]
    %v215 = vld [vmem:[%s2 + $0x378] sm:$0xff]
    %v280 = vunpack.c.l.b16 %v40
    %v281 = vunpack.c.h.b16 %v40
    %v282 = vunpack.c.l.b16 %v41
    %v283 = vunpack.c.h.b16 %v41
    %v284 = vunpack.c.l.b16 %v42
    %v285 = vunpack.c.h.b16 %v42
    %v286 = vunpack.c.l.b16 %v43
    %v287 = vunpack.c.l.b16 %v44
    %v288 = vunpack.c.h.b16 %v44
    %v289 = vunpack.c.l.b16 %v45
    %v290 = vunpack.c.h.b16 %v45
    %v291 = vunpack.c.l.b16 %v46
    %v292 = vunpack.c.h.b16 %v46
    %v293 = vunpack.c.l.b16 %v47
    %v294 = vunpack.c.l.b16 %v48
    %v295 = vunpack.c.h.b16 %v48
    %v296 = vunpack.c.l.b16 %v49
    %v297 = vunpack.c.h.b16 %v49
    %v298 = vunpack.c.l.b16 %v50
    %v299 = vunpack.c.h.b16 %v50
    %v300 = vunpack.c.l.b16 %v51
    %v301 = vunpack.c.l.b16 %v52
    %v302 = vunpack.c.h.b16 %v52
    %v303 = vunpack.c.l.b16 %v53
    %v304 = vunpack.c.h.b16 %v53
    %v305 = vunpack.c.l.b16 %v54
    %v306 = vunpack.c.h.b16 %v54
    %v307 = vunpack.c.l.b16 %v55
    %v308 = vunpack.c.l.b16 %v56
    %v309 = vunpack.c.h.b16 %v56
    %v310 = vunpack.c.l.b16 %v57
    %v311 = vunpack.c.h.b16 %v57
    %v312 = vunpack.c.l.b16 %v58
    %v313 = vunpack.c.h.b16 %v58
    %v314 = vunpack.c.l.b16 %v59
    %v315 = vunpack.c.l.b16 %v60
    %v316 = vunpack.c.h.b16 %v60
    %v317 = vunpack.c.l.b16 %v61
    %v318 = vunpack.c.h.b16 %v61
    %v319 = vunpack.c.l.b16 %v62
    %v320 = vunpack.c.h.b16 %v62
    %v321 = vunpack.c.l.b16 %v63
    %v322 = vunpack.c.l.b16 %v64
    %v323 = vunpack.c.h.b16 %v64
    %v324 = vunpack.c.l.b16 %v65
    %v325 = vunpack.c.h.b16 %v65
    %v326 = vunpack.c.l.b16 %v66
    %v327 = vunpack.c.h.b16 %v66
    %v328 = vunpack.c.l.b16 %v67
    %v329 = vunpack.c.l.b16 %v68
    %v330 = vunpack.c.h.b16 %v68
    %v331 = vunpack.c.l.b16 %v69
    %v332 = vunpack.c.h.b16 %v69
    %v333 = vunpack.c.l.b16 %v70
    %v334 = vunpack.c.h.b16 %v70
    %v335 = vunpack.c.l.b16 %v71
    %v336 = vunpack.c.l.b16 %v72
    %v337 = vunpack.c.h.b16 %v72
    %v338 = vunpack.c.l.b16 %v73
    %v339 = vunpack.c.h.b16 %v73
    %v340 = vunpack.c.l.b16 %v74
    %v341 = vunpack.c.h.b16 %v74
    %v342 = vunpack.c.l.b16 %v75
    %v343 = vunpack.c.l.b16 %v76
    %v344 = vunpack.c.h.b16 %v76
    %v345 = vunpack.c.l.b16 %v77
    %v346 = vunpack.c.h.b16 %v77
    %v347 = vunpack.c.l.b16 %v78
    %v348 = vunpack.c.h.b16 %v78
    %v349 = vunpack.c.l.b16 %v79
    %v350 = vunpack.c.l.b16 %v80
    %v351 = vunpack.c.h.b16 %v80
    %v352 = vunpack.c.l.b16 %v81
    %v353 = vunpack.c.h.b16 %v81
    %v354 = vunpack.c.l.b16 %v82
    %v355 = vunpack.c.h.b16 %v82
    %v356 = vunpack.c.l.b16 %v83
    %v357 = vunpack.c.l.b16 %v84
    %v358 = vunpack.c.h.b16 %v84
    %v359 = vunpack.c.l.b16 %v85
    %v360 = vunpack.c.h.b16 %v85
    %v361 = vunpack.c.l.b16 %v86
    %v362 = vunpack.c.h.b16 %v86
    %v363 = vunpack.c.l.b16 %v87
    %v364 = vunpack.c.l.b16 %v88
    %v365 = vunpack.c.h.b16 %v88
    %v366 = vunpack.c.l.b16 %v89
    %v367 = vunpack.c.h.b16 %v89
    %v368 = vunpack.c.l.b16 %v90
    %v369 = vunpack.c.h.b16 %v90
    %v370 = vunpack.c.l.b16 %v91
    %v371 = vunpack.c.l.b16 %v92
    %v372 = vunpack.c.h.b16 %v92
    %v373 = vunpack.c.l.b16 %v93
    %v374 = vunpack.c.h.b16 %v93
    %v375 = vunpack.c.l.b16 %v94
    %v376 = vunpack.c.h.b16 %v94
    %v377 = vunpack.c.l.b16 %v95
    %v378 = vunpack.c.l.b16 %v96
    %v379 = vunpack.c.h.b16 %v96
    %v380 = vunpack.c.l.b16 %v97
    %v381 = vunpack.c.h.b16 %v97
    %v382 = vunpack.c.l.b16 %v98
    %v383 = vunpack.c.h.b16 %v98
    %v384 = vunpack.c.l.b16 %v99
    %v385 = vunpack.c.l.b16 %v100
    %v386 = vunpack.c.h.b16 %v100
    %v387 = vunpack.c.l.b16 %v101
    %v388 = vunpack.c.h.b16 %v101
    %v389 = vunpack.c.l.b16 %v102
    %v390 = vunpack.c.h.b16 %v102
    %v391 = vunpack.c.l.b16 %v103
    %v392 = vpack.c.b16 %v287, %v280
    %v393 = vpack.c.b16 %v288, %v281
    %v394 = vpack.c.b16 %v289, %v282
    %v395 = vpack.c.b16 %v290, %v283
    %v396 = vpack.c.b16 %v291, %v284
    %v397 = vpack.c.b16 %v292, %v285
    %v398 = vpack.c.b16 %v293, %v286
    %v399 = vpack.c.b16 %v301, %v294
    %v400 = vpack.c.b16 %v302, %v295
    %v401 = vpack.c.b16 %v303, %v296
    %v402 = vpack.c.b16 %v304, %v297
    %v403 = vpack.c.b16 %v305, %v298
    %v404 = vpack.c.b16 %v306, %v299
    %v405 = vpack.c.b16 %v307, %v300
    %v406 = vpack.c.b16 %v315, %v308
    %v407 = vpack.c.b16 %v316, %v309
    %v408 = vpack.c.b16 %v317, %v310
    %v409 = vpack.c.b16 %v318, %v311
    %v410 = vpack.c.b16 %v319, %v312
    %v411 = vpack.c.b16 %v320, %v313
    %v412 = vpack.c.b16 %v321, %v314
    %v413 = vpack.c.b16 %v329, %v322
    %v414 = vpack.c.b16 %v330, %v323
    %v415 = vpack.c.b16 %v331, %v324
    %v416 = vpack.c.b16 %v332, %v325
    %v417 = vpack.c.b16 %v333, %v326
    %v418 = vpack.c.b16 %v334, %v327
    %v419 = vpack.c.b16 %v335, %v328
    %v420 = vpack.c.b16 %v343, %v336
    %v421 = vpack.c.b16 %v344, %v337
    %v422 = vpack.c.b16 %v345, %v338
    %v423 = vpack.c.b16 %v346, %v339
    %v424 = vpack.c.b16 %v347, %v340
    %v425 = vpack.c.b16 %v348, %v341
    %v426 = vpack.c.b16 %v349, %v342
    %v427 = vpack.c.b16 %v357, %v350
    %v428 = vpack.c.b16 %v358, %v351
    %v429 = vpack.c.b16 %v359, %v352
    %v430 = vpack.c.b16 %v360, %v353
    %v431 = vpack.c.b16 %v361, %v354
    %v432 = vpack.c.b16 %v362, %v355
    %v433 = vpack.c.b16 %v363, %v356
    %v434 = vpack.c.b16 %v371, %v364
    %v435 = vpack.c.b16 %v372, %v365
    %v436 = vpack.c.b16 %v373, %v366
    %v437 = vpack.c.b16 %v374, %v367
    %v438 = vpack.c.b16 %v375, %v368
    %v439 = vpack.c.b16 %v376, %v369
    %v440 = vpack.c.b16 %v377, %v370
    %v441 = vpack.c.b16 %v385, %v378
    %v442 = vpack.c.b16 %v386, %v379
    %v443 = vpack.c.b16 %v387, %v380
    %v444 = vpack.c.b16 %v388, %v381
    %v445 = vpack.c.b16 %v389, %v382
    %v446 = vpack.c.b16 %v390, %v383
    %v447 = vpack.c.b16 %v391, %v384
    %v616 = vunpack.c.l.b16 %v104
    %v617 = vunpack.c.h.b16 %v104
    %v618 = vunpack.c.l.b16 %v105
    %v619 = vunpack.c.h.b16 %v105
    %v620 = vunpack.c.l.b16 %v106
    %v621 = vunpack.c.h.b16 %v106
    %v622 = vunpack.c.l.b16 %v107
    %v623 = vunpack.c.h.b16 %v107
    %v624 = vunpack.c.l.b16 %v108
    %v625 = vunpack.c.h.b16 %v108
    %v626 = vunpack.c.l.b16 %v109
    %v627 = vunpack.c.h.b16 %v109
    %v628 = vunpack.c.l.b16 %v110
    %v629 = vunpack.c.h.b16 %v110
    %v630 = vunpack.c.l.b16 %v111
    %v631 = vunpack.c.h.b16 %v111
    %v632 = vunpack.c.l.b16 %v112
    %v633 = vunpack.c.h.b16 %v112
    %v634 = vunpack.c.l.b16 %v113
    %v635 = vunpack.c.h.b16 %v113
    %v636 = vunpack.c.l.b16 %v114
    %v637 = vunpack.c.h.b16 %v114
    %v638 = vunpack.c.l.b16 %v115
    %v639 = vunpack.c.h.b16 %v115
    %v640 = vunpack.c.l.b16 %v116
    %v641 = vunpack.c.h.b16 %v116
    %v642 = vunpack.c.l.b16 %v117
    %v643 = vunpack.c.h.b16 %v117
    %v644 = vunpack.c.l.b16 %v118
    %v645 = vunpack.c.h.b16 %v118
    %v646 = vunpack.c.l.b16 %v119
    %v647 = vunpack.c.h.b16 %v119
    %v648 = vunpack.c.l.b16 %v120
    %v649 = vunpack.c.h.b16 %v120
    %v650 = vunpack.c.l.b16 %v121
    %v651 = vunpack.c.h.b16 %v121
    %v652 = vunpack.c.l.b16 %v122
    %v653 = vunpack.c.h.b16 %v122
    %v654 = vunpack.c.l.b16 %v123
    %v655 = vunpack.c.h.b16 %v123
    %v656 = vunpack.c.l.b16 %v124
    %v657 = vunpack.c.h.b16 %v124
    %v658 = vunpack.c.l.b16 %v125
    %v659 = vunpack.c.h.b16 %v125
    %v660 = vunpack.c.l.b16 %v126
    %v661 = vunpack.c.h.b16 %v126
    %v662 = vunpack.c.l.b16 %v127
    %v663 = vunpack.c.h.b16 %v127
    %v664 = vunpack.c.l.b16 %v128
    %v665 = vunpack.c.h.b16 %v128
    %v666 = vunpack.c.l.b16 %v129
    %v667 = vunpack.c.h.b16 %v129
    %v668 = vunpack.c.l.b16 %v130
    %v669 = vunpack.c.h.b16 %v130
    %v670 = vunpack.c.l.b16 %v131
    %v671 = vunpack.c.h.b16 %v131
    %v672 = vunpack.c.l.b16 %v132
    %v673 = vunpack.c.h.b16 %v132
    %v674 = vunpack.c.l.b16 %v133
    %v675 = vunpack.c.h.b16 %v133
    %v676 = vunpack.c.l.b16 %v134
    %v677 = vunpack.c.h.b16 %v134
    %v678 = vunpack.c.l.b16 %v135
    %v679 = vunpack.c.h.b16 %v135
    %v680 = vunpack.c.l.b16 %v136
    %v681 = vunpack.c.h.b16 %v136
    %v682 = vunpack.c.l.b16 %v137
    %v683 = vunpack.c.h.b16 %v137
    %v684 = vunpack.c.l.b16 %v138
    %v685 = vunpack.c.h.b16 %v138
    %v686 = vunpack.c.l.b16 %v139
    %v687 = vunpack.c.h.b16 %v139
    %v688 = vunpack.c.l.b16 %v140
    %v689 = vunpack.c.h.b16 %v140
    %v690 = vunpack.c.l.b16 %v141
    %v691 = vunpack.c.h.b16 %v141
    %v692 = vunpack.c.l.b16 %v142
    %v693 = vunpack.c.h.b16 %v142
    %v694 = vunpack.c.l.b16 %v143
    %v695 = vunpack.c.h.b16 %v143
    %v696 = vunpack.c.l.b16 %v144
    %v697 = vunpack.c.h.b16 %v144
    %v698 = vunpack.c.l.b16 %v145
    %v699 = vunpack.c.h.b16 %v145
    %v700 = vunpack.c.l.b16 %v146
    %v701 = vunpack.c.h.b16 %v146
    %v702 = vunpack.c.l.b16 %v147
    %v703 = vunpack.c.h.b16 %v147
    %v704 = vunpack.c.l.b16 %v148
    %v705 = vunpack.c.h.b16 %v148
    %v706 = vunpack.c.l.b16 %v149
    %v707 = vunpack.c.h.b16 %v149
    %v708 = vunpack.c.l.b16 %v150
    %v709 = vunpack.c.h.b16 %v150
    %v710 = vunpack.c.l.b16 %v151
    %v711 = vunpack.c.h.b16 %v151
    %v712 = vunpack.c.l.b16 %v152
    %v713 = vunpack.c.h.b16 %v152
    %v714 = vunpack.c.l.b16 %v153
    %v715 = vunpack.c.h.b16 %v153
    %v716 = vunpack.c.l.b16 %v154
    %v717 = vunpack.c.h.b16 %v154
    %v718 = vunpack.c.l.b16 %v155
    %v719 = vunpack.c.h.b16 %v155
    %v720 = vunpack.c.l.b16 %v156
    %v721 = vunpack.c.h.b16 %v156
    %v722 = vunpack.c.l.b16 %v157
    %v723 = vunpack.c.h.b16 %v157
    %v724 = vunpack.c.l.b16 %v158
    %v725 = vunpack.c.h.b16 %v158
    %v726 = vunpack.c.l.b16 %v159
    %v727 = vunpack.c.h.b16 %v159
    %v728 = vunpack.c.l.b16 %v160
    %v729 = vunpack.c.h.b16 %v160
    %v730 = vunpack.c.l.b16 %v161
    %v731 = vunpack.c.h.b16 %v161
    %v732 = vunpack.c.l.b16 %v162
    %v733 = vunpack.c.h.b16 %v162
    %v734 = vunpack.c.l.b16 %v163
    %v735 = vunpack.c.h.b16 %v163
    %v736 = vunpack.c.l.b16 %v164
    %v737 = vunpack.c.h.b16 %v164
    %v738 = vunpack.c.l.b16 %v165
    %v739 = vunpack.c.h.b16 %v165
    %v740 = vunpack.c.l.b16 %v166
    %v741 = vunpack.c.h.b16 %v166
    %v742 = vunpack.c.l.b16 %v167
    %v743 = vunpack.c.h.b16 %v167
    %v744 = vunpack.c.l.b16 %v168
    %v745 = vunpack.c.h.b16 %v168
    %v746 = vunpack.c.l.b16 %v169
    %v747 = vunpack.c.h.b16 %v169
    %v748 = vunpack.c.l.b16 %v170
    %v749 = vunpack.c.h.b16 %v170
    %v750 = vunpack.c.l.b16 %v171
    %v751 = vunpack.c.h.b16 %v171
    %v752 = vunpack.c.l.b16 %v172
    %v753 = vunpack.c.h.b16 %v172
    %v754 = vunpack.c.l.b16 %v173
    %v755 = vunpack.c.h.b16 %v173
    %v756 = vunpack.c.l.b16 %v174
    %v757 = vunpack.c.h.b16 %v174
    %v758 = vunpack.c.l.b16 %v175
    %v759 = vunpack.c.h.b16 %v175
    %v760 = vunpack.c.l.b16 %v176
    %v761 = vunpack.c.h.b16 %v176
    %v762 = vunpack.c.l.b16 %v177
    %v763 = vunpack.c.h.b16 %v177
    %v764 = vunpack.c.l.b16 %v178
    %v765 = vunpack.c.h.b16 %v178
    %v766 = vunpack.c.l.b16 %v179
    %v767 = vunpack.c.h.b16 %v179
    %v768 = vunpack.c.l.b16 %v180
    %v769 = vunpack.c.h.b16 %v180
    %v770 = vunpack.c.l.b16 %v181
    %v771 = vunpack.c.h.b16 %v181
    %v772 = vunpack.c.l.b16 %v182
    %v773 = vunpack.c.h.b16 %v182
    %v774 = vunpack.c.l.b16 %v183
    %v775 = vunpack.c.h.b16 %v183
    %v776 = vunpack.c.l.b16 %v184
    %v777 = vunpack.c.h.b16 %v184
    %v778 = vunpack.c.l.b16 %v185
    %v779 = vunpack.c.h.b16 %v185
    %v780 = vunpack.c.l.b16 %v186
    %v781 = vunpack.c.h.b16 %v186
    %v782 = vunpack.c.l.b16 %v187
    %v783 = vunpack.c.h.b16 %v187
    %v784 = vunpack.c.l.b16 %v188
    %v785 = vunpack.c.h.b16 %v188
    %v786 = vunpack.c.l.b16 %v189
    %v787 = vunpack.c.h.b16 %v189
    %v788 = vunpack.c.l.b16 %v190
    %v789 = vunpack.c.h.b16 %v190
    %v790 = vunpack.c.l.b16 %v191
    %v791 = vunpack.c.h.b16 %v191
    %v792 = vunpack.c.l.b16 %v192
    %v793 = vunpack.c.h.b16 %v192
    %v794 = vunpack.c.l.b16 %v193
    %v795 = vunpack.c.h.b16 %v193
    %v796 = vunpack.c.l.b16 %v194
    %v797 = vunpack.c.h.b16 %v194
    %v798 = vunpack.c.l.b16 %v195
    %v799 = vunpack.c.h.b16 %v195
    %v800 = vunpack.c.l.b16 %v196
    %v801 = vunpack.c.h.b16 %v196
    %v802 = vunpack.c.l.b16 %v197
    %v803 = vunpack.c.h.b16 %v197
    %v804 = vunpack.c.l.b16 %v198
    %v805 = vunpack.c.h.b16 %v198
    %v806 = vunpack.c.l.b16 %v199
    %v807 = vunpack.c.h.b16 %v199
    %v808 = vunpack.c.l.b16 %v200
    %v809 = vunpack.c.h.b16 %v200
    %v810 = vunpack.c.l.b16 %v201
    %v811 = vunpack.c.h.b16 %v201
    %v812 = vunpack.c.l.b16 %v202
    %v813 = vunpack.c.h.b16 %v202
    %v814 = vunpack.c.l.b16 %v203
    %v815 = vunpack.c.h.b16 %v203
    %v816 = vunpack.c.l.b16 %v204
    %v817 = vunpack.c.h.b16 %v204
    %v818 = vunpack.c.l.b16 %v205
    %v819 = vunpack.c.h.b16 %v205
    %v820 = vunpack.c.l.b16 %v206
    %v821 = vunpack.c.h.b16 %v206
    %v822 = vunpack.c.l.b16 %v207
    %v823 = vunpack.c.h.b16 %v207
    %v824 = vunpack.c.l.b16 %v208
    %v825 = vunpack.c.h.b16 %v208
    %v826 = vunpack.c.l.b16 %v209
    %v827 = vunpack.c.h.b16 %v209
    %v828 = vunpack.c.l.b16 %v210
    %v829 = vunpack.c.h.b16 %v210
    %v830 = vunpack.c.l.b16 %v211
    %v831 = vunpack.c.h.b16 %v211
    %v832 = vunpack.c.l.b16 %v212
    %v833 = vunpack.c.h.b16 %v212
    %v834 = vunpack.c.l.b16 %v213
    %v835 = vunpack.c.h.b16 %v213
    %v836 = vunpack.c.l.b16 %v214
    %v837 = vunpack.c.h.b16 %v214
    %v838 = vunpack.c.l.b16 %v215
    %v839 = vunpack.c.h.b16 %v215
    %v840 = vpack.c.b16 %v618, %v616
    %v841 = vpack.c.b16 %v619, %v617
    %v842 = vpack.c.b16 %v622, %v620
    %v843 = vpack.c.b16 %v623, %v621
    %v844 = vpack.c.b16 %v626, %v624
    %v845 = vpack.c.b16 %v627, %v625
    %v846 = vpack.c.b16 %v630, %v628
    %v847 = vpack.c.b16 %v631, %v629
    %v848 = vpack.c.b16 %v634, %v632
    %v849 = vpack.c.b16 %v635, %v633
    %v850 = vpack.c.b16 %v638, %v636
    %v851 = vpack.c.b16 %v639, %v637
    %v852 = vpack.c.b16 %v642, %v640
    %v853 = vpack.c.b16 %v643, %v641
    %v854 = vpack.c.b16 %v646, %v644
    %v855 = vpack.c.b16 %v647, %v645
    %v856 = vpack.c.b16 %v650, %v648
    %v857 = vpack.c.b16 %v651, %v649
    %v858 = vpack.c.b16 %v654, %v652
    %v859 = vpack.c.b16 %v655, %v653
    %v860 = vpack.c.b16 %v658, %v656
    %v861 = vpack.c.b16 %v659, %v657
    %v862 = vpack.c.b16 %v662, %v660
    %v863 = vpack.c.b16 %v663, %v661
    %v864 = vpack.c.b16 %v666, %v664
    %v865 = vpack.c.b16 %v667, %v665
    %v866 = vpack.c.b16 %v670, %v668
    %v867 = vpack.c.b16 %v671, %v669
    %v868 = vpack.c.b16 %v674, %v672
    %v869 = vpack.c.b16 %v675, %v673
    %v870 = vpack.c.b16 %v678, %v676
    %v871 = vpack.c.b16 %v679, %v677
    %v872 = vpack.c.b16 %v682, %v680
    %v873 = vpack.c.b16 %v683, %v681
    %v874 = vpack.c.b16 %v686, %v684
    %v875 = vpack.c.b16 %v687, %v685
    %v876 = vpack.c.b16 %v690, %v688
    %v877 = vpack.c.b16 %v691, %v689
    %v878 = vpack.c.b16 %v694, %v692
    %v879 = vpack.c.b16 %v695, %v693
    %v880 = vpack.c.b16 %v698, %v696
    %v881 = vpack.c.b16 %v699, %v697
    %v882 = vpack.c.b16 %v702, %v700
    %v883 = vpack.c.b16 %v703, %v701
    %v884 = vpack.c.b16 %v706, %v704
    %v885 = vpack.c.b16 %v707, %v705
    %v886 = vpack.c.b16 %v710, %v708
    %v887 = vpack.c.b16 %v711, %v709
    %v888 = vpack.c.b16 %v714, %v712
    %v889 = vpack.c.b16 %v715, %v713
    %v890 = vpack.c.b16 %v718, %v716
    %v891 = vpack.c.b16 %v719, %v717
    %v892 = vpack.c.b16 %v722, %v720
    %v893 = vpack.c.b16 %v723, %v721
    %v894 = vpack.c.b16 %v726, %v724
    %v895 = vpack.c.b16 %v727, %v725
    %v896 = vpack.c.b16 %v730, %v728
    %v897 = vpack.c.b16 %v731, %v729
    %v898 = vpack.c.b16 %v734, %v732
    %v899 = vpack.c.b16 %v735, %v733
    %v900 = vpack.c.b16 %v738, %v736
    %v901 = vpack.c.b16 %v739, %v737
    %v902 = vpack.c.b16 %v742, %v740
    %v903 = vpack.c.b16 %v743, %v741
    %v904 = vpack.c.b16 %v746, %v744
    %v905 = vpack.c.b16 %v747, %v745
    %v906 = vpack.c.b16 %v750, %v748
    %v907 = vpack.c.b16 %v751, %v749
    %v908 = vpack.c.b16 %v754, %v752
    %v909 = vpack.c.b16 %v755, %v753
    %v910 = vpack.c.b16 %v758, %v756
    %v911 = vpack.c.b16 %v759, %v757
    %v912 = vpack.c.b16 %v762, %v760
    %v913 = vpack.c.b16 %v763, %v761
    %v914 = vpack.c.b16 %v766, %v764
    %v915 = vpack.c.b16 %v767, %v765
    %v916 = vpack.c.b16 %v770, %v768
    %v917 = vpack.c.b16 %v771, %v769
    %v918 = vpack.c.b16 %v774, %v772
    %v919 = vpack.c.b16 %v775, %v773
    %v920 = vpack.c.b16 %v778, %v776
    %v921 = vpack.c.b16 %v779, %v777
    %v922 = vpack.c.b16 %v782, %v780
    %v923 = vpack.c.b16 %v783, %v781
    %v924 = vpack.c.b16 %v786, %v784
    %v925 = vpack.c.b16 %v787, %v785
    %v926 = vpack.c.b16 %v790, %v788
    %v927 = vpack.c.b16 %v791, %v789
    %v928 = vpack.c.b16 %v794, %v792
    %v929 = vpack.c.b16 %v795, %v793
    %v930 = vpack.c.b16 %v798, %v796
    %v931 = vpack.c.b16 %v799, %v797
    %v932 = vpack.c.b16 %v802, %v800
    %v933 = vpack.c.b16 %v803, %v801
    %v934 = vpack.c.b16 %v806, %v804
    %v935 = vpack.c.b16 %v807, %v805
    %v936 = vpack.c.b16 %v810, %v808
    %v937 = vpack.c.b16 %v811, %v809
    %v938 = vpack.c.b16 %v814, %v812
    %v939 = vpack.c.b16 %v815, %v813
    %v940 = vpack.c.b16 %v818, %v816
    %v941 = vpack.c.b16 %v819, %v817
    %v942 = vpack.c.b16 %v822, %v820
    %v943 = vpack.c.b16 %v823, %v821
    %v944 = vpack.c.b16 %v826, %v824
    %v945 = vpack.c.b16 %v827, %v825
    %v946 = vpack.c.b16 %v830, %v828
    %v947 = vpack.c.b16 %v831, %v829
    %v948 = vpack.c.b16 %v834, %v832
    %v949 = vpack.c.b16 %v835, %v833
    %v950 = vpack.c.b16 %v838, %v836
    %v951 = vpack.c.b16 %v839, %v837
    %1064 = vmatpush.bf16.msra.mxu0 %v854
    %1065 = vmatpush.bf16.msra.mxu0 %v852
    %1066 = vmatpush.bf16.msra.mxu0 %v850
    %1067 = vmatpush.bf16.msra.mxu0 %v848
    %1068 = vmatpush.bf16.msra.mxu0 %v846
    %1069 = vmatpush.bf16.msra.mxu0 %v844
    %1070 = vmatpush.bf16.msra.mxu0 %v842
    %1071 = vmatpush.bf16.msra.mxu0 %v840
    %1072 = vmatmul.bf16.gmra.mxu0 %v392
    %v1073 = vpop.f32.mrf.mxu0
    %v1074 = vadd.f32 0.0, %v1073
    %v1075 = vpop.f32.mrf.mxu0
    %v1076 = vadd.f32 0.0, %v1075
    %1077 = vmatmul.bf16.gmra.mxu0 %v399
    %v1078 = vpop.f32.mrf.mxu0
    %v1079 = vadd.f32 0.0, %v1078
    %v1080 = vpop.f32.mrf.mxu0
    %v1081 = vadd.f32 0.0, %v1080
    %1082 = vmatmul.bf16.gmra.mxu0 %v406
    %v1083 = vpop.f32.mrf.mxu0
    %v1084 = vadd.f32 0.0, %v1083
    %v1085 = vpop.f32.mrf.mxu0
    %v1086 = vadd.f32 0.0, %v1085
    %1087 = vmatmul.bf16.gmra.mxu0 %v413
    %v1088 = vpop.f32.mrf.mxu0
    %v1089 = vadd.f32 0.0, %v1088
    %v1090 = vpop.f32.mrf.mxu0
    %v1091 = vadd.f32 0.0, %v1090
    %1092 = vmatmul.bf16.gmra.mxu0 %v420
    %v1093 = vpop.f32.mrf.mxu0
    %v1094 = vadd.f32 0.0, %v1093
    %v1095 = vpop.f32.mrf.mxu0
    %v1096 = vadd.f32 0.0, %v1095
    %1097 = vmatmul.bf16.gmra.mxu0 %v427
    %v1098 = vpop.f32.mrf.mxu0
    %v1099 = vadd.f32 0.0, %v1098
    %v1100 = vpop.f32.mrf.mxu0
    %v1101 = vadd.f32 0.0, %v1100
    %1102 = vmatmul.bf16.gmra.mxu0 %v434
    %v1103 = vpop.f32.mrf.mxu0
    %v1104 = vadd.f32 0.0, %v1103
    %v1105 = vpop.f32.mrf.mxu0
    %v1106 = vadd.f32 0.0, %v1105
    %1107 = vmatmul.bf16.gmra.mxu0 %v441
    %v1108 = vpop.f32.mrf.mxu0
    %v1109 = vadd.f32 0.0, %v1108
    %v1110 = vpop.f32.mrf.mxu0
    %v1111 = vadd.f32 0.0, %v1110
    %1112 = vdwg.mxu0
    %1113 = vmatpush.bf16.msra.mxu0 %v870
    %1114 = vmatpush.bf16.msra.mxu0 %v868
    %1115 = vmatpush.bf16.msra.mxu0 %v866
    %1116 = vmatpush.bf16.msra.mxu0 %v864
    %1117 = vmatpush.bf16.msra.mxu0 %v862
    %1118 = vmatpush.bf16.msra.mxu0 %v860
    %1119 = vmatpush.bf16.msra.mxu0 %v858
    %1120 = vmatpush.bf16.msra.mxu0 %v856
    %1121 = vmatmul.bf16.gmra.mxu0 %v393
    %v1122 = vpop.f32.mrf.mxu0
    %v1123 = vadd.f32 %v1074, %v1122
    %v1124 = vpop.f32.mrf.mxu0
    %v1125 = vadd.f32 %v1076, %v1124
    %1126 = vmatmul.bf16.gmra.mxu0 %v400
    %v1127 = vpop.f32.mrf.mxu0
    %v1128 = vadd.f32 %v1079, %v1127
    %v1129 = vpop.f32.mrf.mxu0
    %v1130 = vadd.f32 %v1081, %v1129
    %1131 = vmatmul.bf16.gmra.mxu0 %v407
    %v1132 = vpop.f32.mrf.mxu0
    %v1133 = vadd.f32 %v1084, %v1132
    %v1134 = vpop.f32.mrf.mxu0
    %v1135 = vadd.f32 %v1086, %v1134
    %1136 = vmatmul.bf16.gmra.mxu0 %v414
    %v1137 = vpop.f32.mrf.mxu0
    %v1138 = vadd.f32 %v1089, %v1137
    %v1139 = vpop.f32.mrf.mxu0
    %v1140 = vadd.f32 %v1091, %v1139
    %1141 = vmatmul.bf16.gmra.mxu0 %v421
    %v1142 = vpop.f32.mrf.mxu0
    %v1143 = vadd.f32 %v1094, %v1142
    %v1144 = vpop.f32.mrf.mxu0
    %v1145 = vadd.f32 %v1096, %v1144
    %1146 = vmatmul.bf16.gmra.mxu0 %v428
    %v1147 = vpop.f32.mrf.mxu0
    %v1148 = vadd.f32 %v1099, %v1147
    %v1149 = vpop.f32.mrf.mxu0
    %v1150 = vadd.f32 %v1101, %v1149
    %1151 = vmatmul.bf16.gmra.mxu0 %v435
    %v1152 = vpop.f32.mrf.mxu0
    %v1153 = vadd.f32 %v1104, %v1152
    %v1154 = vpop.f32.mrf.mxu0
    %v1155 = vadd.f32 %v1106, %v1154
    %1156 = vmatmul.bf16.gmra.mxu0 %v442
    %v1157 = vpop.f32.mrf.mxu0
    %v1158 = vadd.f32 %v1109, %v1157
    %v1159 = vpop.f32.mrf.mxu0
    %v1160 = vadd.f32 %v1111, %v1159
    %1161 = vdwg.mxu0
    %1162 = vmatpush.bf16.msra.mxu0 %v886
    %1163 = vmatpush.bf16.msra.mxu0 %v884
    %1164 = vmatpush.bf16.msra.mxu0 %v882
    %1165 = vmatpush.bf16.msra.mxu0 %v880
    %1166 = vmatpush.bf16.msra.mxu0 %v878
    %1167 = vmatpush.bf16.msra.mxu0 %v876
    %1168 = vmatpush.bf16.msra.mxu0 %v874
    %1169 = vmatpush.bf16.msra.mxu0 %v872
    %1170 = vmatmul.bf16.gmra.mxu0 %v394
    %v1171 = vpop.f32.mrf.mxu0
    %v1172 = vadd.f32 %v1123, %v1171
    %v1173 = vpop.f32.mrf.mxu0
    %v1174 = vadd.f32 %v1125, %v1173
    %1175 = vmatmul.bf16.gmra.mxu0 %v401
    %v1176 = vpop.f32.mrf.mxu0
    %v1177 = vadd.f32 %v1128, %v1176
    %v1178 = vpop.f32.mrf.mxu0
    %v1179 = vadd.f32 %v1130, %v1178
    %1180 = vmatmul.bf16.gmra.mxu0 %v408
    %v1181 = vpop.f32.mrf.mxu0
    %v1182 = vadd.f32 %v1133, %v1181
    %v1183 = vpop.f32.mrf.mxu0
    %v1184 = vadd.f32 %v1135, %v1183
    %1185 = vmatmul.bf16.gmra.mxu0 %v415
    %v1186 = vpop.f32.mrf.mxu0
    %v1187 = vadd.f32 %v1138, %v1186
    %v1188 = vpop.f32.mrf.mxu0
    %v1189 = vadd.f32 %v1140, %v1188
    %1190 = vmatmul.bf16.gmra.mxu0 %v422
    %v1191 = vpop.f32.mrf.mxu0
    %v1192 = vadd.f32 %v1143, %v1191
    %v1193 = vpop.f32.mrf.mxu0
    %v1194 = vadd.f32 %v1145, %v1193
    %1195 = vmatmul.bf16.gmra.mxu0 %v429
    %v1196 = vpop.f32.mrf.mxu0
    %v1197 = vadd.f32 %v1148, %v1196
    %v1198 = vpop.f32.mrf.mxu0
    %v1199 = vadd.f32 %v1150, %v1198
    %1200 = vmatmul.bf16.gmra.mxu0 %v436
    %v1201 = vpop.f32.mrf.mxu0
    %v1202 = vadd.f32 %v1153, %v1201
    %v1203 = vpop.f32.mrf.mxu0
    %v1204 = vadd.f32 %v1155, %v1203
    %1205 = vmatmul.bf16.gmra.mxu0 %v443
    %v1206 = vpop.f32.mrf.mxu0
    %v1207 = vadd.f32 %v1158, %v1206
    %v1208 = vpop.f32.mrf.mxu0
    %v1209 = vadd.f32 %v1160, %v1208
    %1210 = vdwg.mxu0
    %1211 = vmatpush.bf16.msra.mxu0 %v902
    %1212 = vmatpush.bf16.msra.mxu0 %v900
    %1213 = vmatpush.bf16.msra.mxu0 %v898
    %1214 = vmatpush.bf16.msra.mxu0 %v896
    %1215 = vmatpush.bf16.msra.mxu0 %v894
    %1216 = vmatpush.bf16.msra.mxu0 %v892
    %1217 = vmatpush.bf16.msra.mxu0 %v890
    %1218 = vmatpush.bf16.msra.mxu0 %v888
    %1219 = vmatmul.bf16.gmra.mxu0 %v395
    %v1220 = vpop.f32.mrf.mxu0
    %v1221 = vadd.f32 %v1172, %v1220
    %v1222 = vpop.f32.mrf.mxu0
    %v1223 = vadd.f32 %v1174, %v1222
    %1224 = vmatmul.bf16.gmra.mxu0 %v402
    %v1225 = vpop.f32.mrf.mxu0
    %v1226 = vadd.f32 %v1177, %v1225
    %v1227 = vpop.f32.mrf.mxu0
    %v1228 = vadd.f32 %v1179, %v1227
    %1229 = vmatmul.bf16.gmra.mxu0 %v409
    %v1230 = vpop.f32.mrf.mxu0
    %v1231 = vadd.f32 %v1182, %v1230
    %v1232 = vpop.f32.mrf.mxu0
    %v1233 = vadd.f32 %v1184, %v1232
    %1234 = vmatmul.bf16.gmra.mxu0 %v416
    %v1235 = vpop.f32.mrf.mxu0
    %v1236 = vadd.f32 %v1187, %v1235
    %v1237 = vpop.f32.mrf.mxu0
    %v1238 = vadd.f32 %v1189, %v1237
    %1239 = vmatmul.bf16.gmra.mxu0 %v423
    %v1240 = vpop.f32.mrf.mxu0
    %v1241 = vadd.f32 %v1192, %v1240
    %v1242 = vpop.f32.mrf.mxu0
    %v1243 = vadd.f32 %v1194, %v1242
    %1244 = vmatmul.bf16.gmra.mxu0 %v430
    %v1245 = vpop.f32.mrf.mxu0
    %v1246 = vadd.f32 %v1197, %v1245
    %v1247 = vpop.f32.mrf.mxu0
    %v1248 = vadd.f32 %v1199, %v1247
    %1249 = vmatmul.bf16.gmra.mxu0 %v437
    %v1250 = vpop.f32.mrf.mxu0
    %v1251 = vadd.f32 %v1202, %v1250
    %v1252 = vpop.f32.mrf.mxu0
    %v1253 = vadd.f32 %v1204, %v1252
    %1254 = vmatmul.bf16.gmra.mxu0 %v444
    %v1255 = vpop.f32.mrf.mxu0
    %v1256 = vadd.f32 %v1207, %v1255
    %v1257 = vpop.f32.mrf.mxu0
    %v1258 = vadd.f32 %v1209, %v1257
    %1259 = vdwg.mxu0
    %1260 = vmatpush.bf16.msra.mxu0 %v918
    %1261 = vmatpush.bf16.msra.mxu0 %v916
    %1262 = vmatpush.bf16.msra.mxu0 %v914
    %1263 = vmatpush.bf16.msra.mxu0 %v912
    %1264 = vmatpush.bf16.msra.mxu0 %v910
    %1265 = vmatpush.bf16.msra.mxu0 %v908
    %1266 = vmatpush.bf16.msra.mxu0 %v906
    %1267 = vmatpush.bf16.msra.mxu0 %v904
    %1268 = vmatmul.bf16.gmra.mxu0 %v396
    %v1269 = vpop.f32.mrf.mxu0
    %v1270 = vadd.f32 %v1221, %v1269
    %v1271 = vpop.f32.mrf.mxu0
    %v1272 = vadd.f32 %v1223, %v1271
    %1273 = vmatmul.bf16.gmra.mxu0 %v403
    %v1274 = vpop.f32.mrf.mxu0
    %v1275 = vadd.f32 %v1226, %v1274
    %v1276 = vpop.f32.mrf.mxu0
    %v1277 = vadd.f32 %v1228, %v1276
    %1278 = vmatmul.bf16.gmra.mxu0 %v410
    %v1279 = vpop.f32.mrf.mxu0
    %v1280 = vadd.f32 %v1231, %v1279
    %v1281 = vpop.f32.mrf.mxu0
    %v1282 = vadd.f32 %v1233, %v1281
    %1283 = vmatmul.bf16.gmra.mxu0 %v417
    %v1284 = vpop.f32.mrf.mxu0
    %v1285 = vadd.f32 %v1236, %v1284
    %v1286 = vpop.f32.mrf.mxu0
    %v1287 = vadd.f32 %v1238, %v1286
    %1288 = vmatmul.bf16.gmra.mxu0 %v424
    %v1289 = vpop.f32.mrf.mxu0
    %v1290 = vadd.f32 %v1241, %v1289
    %v1291 = vpop.f32.mrf.mxu0
    %v1292 = vadd.f32 %v1243, %v1291
    %1293 = vmatmul.bf16.gmra.mxu0 %v431
    %v1294 = vpop.f32.mrf.mxu0
    %v1295 = vadd.f32 %v1246, %v1294
    %v1296 = vpop.f32.mrf.mxu0
    %v1297 = vadd.f32 %v1248, %v1296
    %1298 = vmatmul.bf16.gmra.mxu0 %v438
    %v1299 = vpop.f32.mrf.mxu0
    %v1300 = vadd.f32 %v1251, %v1299
    %v1301 = vpop.f32.mrf.mxu0
    %v1302 = vadd.f32 %v1253, %v1301
    %1303 = vmatmul.bf16.gmra.mxu0 %v445
    %v1304 = vpop.f32.mrf.mxu0
    %v1305 = vadd.f32 %v1256, %v1304
    %v1306 = vpop.f32.mrf.mxu0
    %v1307 = vadd.f32 %v1258, %v1306
    %1308 = vdwg.mxu0
    %1309 = vmatpush.bf16.msra.mxu0 %v934
    %1310 = vmatpush.bf16.msra.mxu0 %v932
    %1311 = vmatpush.bf16.msra.mxu0 %v930
    %1312 = vmatpush.bf16.msra.mxu0 %v928
    %1313 = vmatpush.bf16.msra.mxu0 %v926
    %1314 = vmatpush.bf16.msra.mxu0 %v924
    %1315 = vmatpush.bf16.msra.mxu0 %v922
    %1316 = vmatpush.bf16.msra.mxu0 %v920
    %1317 = vmatmul.bf16.gmra.mxu0 %v397
    %v1318 = vpop.f32.mrf.mxu0
    %v1319 = vadd.f32 %v1270, %v1318
    %v1320 = vpop.f32.mrf.mxu0
    %v1321 = vadd.f32 %v1272, %v1320
    %1322 = vmatmul.bf16.gmra.mxu0 %v404
    %v1323 = vpop.f32.mrf.mxu0
    %v1324 = vadd.f32 %v1275, %v1323
    %v1325 = vpop.f32.mrf.mxu0
    %v1326 = vadd.f32 %v1277, %v1325
    %1327 = vmatmul.bf16.gmra.mxu0 %v411
    %v1328 = vpop.f32.mrf.mxu0
    %v1329 = vadd.f32 %v1280, %v1328
    %v1330 = vpop.f32.mrf.mxu0
    %v1331 = vadd.f32 %v1282, %v1330
    %1332 = vmatmul.bf16.gmra.mxu0 %v418
    %v1333 = vpop.f32.mrf.mxu0
    %v1334 = vadd.f32 %v1285, %v1333
    %v1335 = vpop.f32.mrf.mxu0
    %v1336 = vadd.f32 %v1287, %v1335
    %1337 = vmatmul.bf16.gmra.mxu0 %v425
    %v1338 = vpop.f32.mrf.mxu0
    %v1339 = vadd.f32 %v1290, %v1338
    %v1340 = vpop.f32.mrf.mxu0
    %v1341 = vadd.f32 %v1292, %v1340
    %1342 = vmatmul.bf16.gmra.mxu0 %v432
    %v1343 = vpop.f32.mrf.mxu0
    %v1344 = vadd.f32 %v1295, %v1343
    %v1345 = vpop.f32.mrf.mxu0
    %v1346 = vadd.f32 %v1297, %v1345
    %1347 = vmatmul.bf16.gmra.mxu0 %v439
    %v1348 = vpop.f32.mrf.mxu0
    %v1349 = vadd.f32 %v1300, %v1348
    %v1350 = vpop.f32.mrf.mxu0
    %v1351 = vadd.f32 %v1302, %v1350
    %1352 = vmatmul.bf16.gmra.mxu0 %v446
    %v1353 = vpop.f32.mrf.mxu0
    %v1354 = vadd.f32 %v1305, %v1353
    %v1355 = vpop.f32.mrf.mxu0
    %v1356 = vadd.f32 %v1307, %v1355
    %1357 = vdwg.mxu0
    %1358 = vmatpush.bf16.msra.mxu0 %v950
    %1359 = vmatpush.bf16.msra.mxu0 %v948
    %1360 = vmatpush.bf16.msra.mxu0 %v946
    %1361 = vmatpush.bf16.msra.mxu0 %v944
    %1362 = vmatpush.bf16.msra.mxu0 %v942
    %1363 = vmatpush.bf16.msra.mxu0 %v940
    %1364 = vmatpush.bf16.msra.mxu0 %v938
    %1365 = vmatpush.bf16.msra.mxu0 %v936
    %1366 = vmatmul.bf16.gmra.mxu0 %v398
    %v1367 = vpop.f32.mrf.mxu0
    %v1368 = vadd.f32 %v1319, %v1367
    %v1369 = vpop.f32.mrf.mxu0
    %v1370 = vadd.f32 %v1321, %v1369
    %1371 = vmatmul.bf16.gmra.mxu0 %v405
    %v1372 = vpop.f32.mrf.mxu0
    %v1373 = vadd.f32 %v1324, %v1372
    %v1374 = vpop.f32.mrf.mxu0
    %v1375 = vadd.f32 %v1326, %v1374
    %1376 = vmatmul.bf16.gmra.mxu0 %v412
    %v1377 = vpop.f32.mrf.mxu0
    %v1378 = vadd.f32 %v1329, %v1377
    %v1379 = vpop.f32.mrf.mxu0
    %v1380 = vadd.f32 %v1331, %v1379
    %1381 = vmatmul.bf16.gmra.mxu0 %v419
    %v1382 = vpop.f32.mrf.mxu0
    %v1383 = vadd.f32 %v1334, %v1382
    %v1384 = vpop.f32.mrf.mxu0
    %v1385 = vadd.f32 %v1336, %v1384
    %1386 = vmatmul.bf16.gmra.mxu0 %v426
    %v1387 = vpop.f32.mrf.mxu0
    %v1388 = vadd.f32 %v1339, %v1387
    %v1389 = vpop.f32.mrf.mxu0
    %v1390 = vadd.f32 %v1341, %v1389
    %1391 = vmatmul.bf16.gmra.mxu0 %v433
    %v1392 = vpop.f32.mrf.mxu0
    %v1393 = vadd.f32 %v1344, %v1392
    %v1394 = vpop.f32.mrf.mxu0
    %v1395 = vadd.f32 %v1346, %v1394
    %1396 = vmatmul.bf16.gmra.mxu0 %v440
    %v1397 = vpop.f32.mrf.mxu0
    %v1398 = vadd.f32 %v1349, %v1397
    %v1399 = vpop.f32.mrf.mxu0
    %v1400 = vadd.f32 %v1351, %v1399
    %1401 = vmatmul.bf16.gmra.mxu0 %v447
    %v1402 = vpop.f32.mrf.mxu0
    %v1403 = vadd.f32 %v1354, %v1402
    %v1404 = vpop.f32.mrf.mxu0
    %v1405 = vadd.f32 %v1356, %v1404
    %1406 = vdwg.mxu0
    %1407 = vmatpush.bf16.msra.mxu0 %v855
    %1408 = vmatpush.bf16.msra.mxu0 %v853
    %1409 = vmatpush.bf16.msra.mxu0 %v851
    %1410 = vmatpush.bf16.msra.mxu0 %v849
    %1411 = vmatpush.bf16.msra.mxu0 %v847
    %1412 = vmatpush.bf16.msra.mxu0 %v845
    %1413 = vmatpush.bf16.msra.mxu0 %v843
    %1414 = vmatpush.bf16.msra.mxu0 %v841
    %1415 = vmatmul.bf16.gmra.mxu0 %v392
    %v1416 = vpop.f32.mrf.mxu0
    %v1417 = vadd.f32 0.0, %v1416
    %v1418 = vpop.f32.mrf.mxu0
    %v1419 = vadd.f32 0.0, %v1418
    %1420 = vmatmul.bf16.gmra.mxu0 %v399
    %v1421 = vpop.f32.mrf.mxu0
    %v1422 = vadd.f32 0.0, %v1421
    %v1423 = vpop.f32.mrf.mxu0
    %v1424 = vadd.f32 0.0, %v1423
    %1425 = vmatmul.bf16.gmra.mxu0 %v406
    %v1426 = vpop.f32.mrf.mxu0
    %v1427 = vadd.f32 0.0, %v1426
    %v1428 = vpop.f32.mrf.mxu0
    %v1429 = vadd.f32 0.0, %v1428
    %1430 = vmatmul.bf16.gmra.mxu0 %v413
    %v1431 = vpop.f32.mrf.mxu0
    %v1432 = vadd.f32 0.0, %v1431
    %v1433 = vpop.f32.mrf.mxu0
    %v1434 = vadd.f32 0.0, %v1433
    %1435 = vmatmul.bf16.gmra.mxu0 %v420
    %v1436 = vpop.f32.mrf.mxu0
    %v1437 = vadd.f32 0.0, %v1436
    %v1438 = vpop.f32.mrf.mxu0
    %v1439 = vadd.f32 0.0, %v1438
    %1440 = vmatmul.bf16.gmra.mxu0 %v427
    %v1441 = vpop.f32.mrf.mxu0
    %v1442 = vadd.f32 0.0, %v1441
    %v1443 = vpop.f32.mrf.mxu0
    %v1444 = vadd.f32 0.0, %v1443
    %1445 = vmatmul.bf16.gmra.mxu0 %v434
    %v1446 = vpop.f32.mrf.mxu0
    %v1447 = vadd.f32 0.0, %v1446
    %v1448 = vpop.f32.mrf.mxu0
    %v1449 = vadd.f32 0.0, %v1448
    %1450 = vmatmul.bf16.gmra.mxu0 %v441
    %v1451 = vpop.f32.mrf.mxu0
    %v1452 = vadd.f32 0.0, %v1451
    %v1453 = vpop.f32.mrf.mxu0
    %v1454 = vadd.f32 0.0, %v1453
    %1455 = vdwg.mxu0
    %1456 = vmatpush.bf16.msra.mxu0 %v871
    %1457 = vmatpush.bf16.msra.mxu0 %v869
    %1458 = vmatpush.bf16.msra.mxu0 %v867
    %1459 = vmatpush.bf16.msra.mxu0 %v865
    %1460 = vmatpush.bf16.msra.mxu0 %v863
    %1461 = vmatpush.bf16.msra.mxu0 %v861
    %1462 = vmatpush.bf16.msra.mxu0 %v859
    %1463 = vmatpush.bf16.msra.mxu0 %v857
    %1464 = vmatmul.bf16.gmra.mxu0 %v393
    %v1465 = vpop.f32.mrf.mxu0
    %v1466 = vadd.f32 %v1417, %v1465
    %v1467 = vpop.f32.mrf.mxu0
    %v1468 = vadd.f32 %v1419, %v1467
    %1469 = vmatmul.bf16.gmra.mxu0 %v400
    %v1470 = vpop.f32.mrf.mxu0
    %v1471 = vadd.f32 %v1422, %v1470
    %v1472 = vpop.f32.mrf.mxu0
    %v1473 = vadd.f32 %v1424, %v1472
    %1474 = vmatmul.bf16.gmra.mxu0 %v407
    %v1475 = vpop.f32.mrf.mxu0
    %v1476 = vadd.f32 %v1427, %v1475
    %v1477 = vpop.f32.mrf.mxu0
    %v1478 = vadd.f32 %v1429, %v1477
    %1479 = vmatmul.bf16.gmra.mxu0 %v414
    %v1480 = vpop.f32.mrf.mxu0
    %v1481 = vadd.f32 %v1432, %v1480
    %v1482 = vpop.f32.mrf.mxu0
    %v1483 = vadd.f32 %v1434, %v1482
    %1484 = vmatmul.bf16.gmra.mxu0 %v421
    %v1485 = vpop.f32.mrf.mxu0
    %v1486 = vadd.f32 %v1437, %v1485
    %v1487 = vpop.f32.mrf.mxu0
    %v1488 = vadd.f32 %v1439, %v1487
    %1489 = vmatmul.bf16.gmra.mxu0 %v428
    %v1490 = vpop.f32.mrf.mxu0
    %v1491 = vadd.f32 %v1442, %v1490
    %v1492 = vpop.f32.mrf.mxu0
    %v1493 = vadd.f32 %v1444, %v1492
    %1494 = vmatmul.bf16.gmra.mxu0 %v435
    %v1495 = vpop.f32.mrf.mxu0
    %v1496 = vadd.f32 %v1447, %v1495
    %v1497 = vpop.f32.mrf.mxu0
    %v1498 = vadd.f32 %v1449, %v1497
    %1499 = vmatmul.bf16.gmra.mxu0 %v442
    %v1500 = vpop.f32.mrf.mxu0
    %v1501 = vadd.f32 %v1452, %v1500
    %v1502 = vpop.f32.mrf.mxu0
    %v1503 = vadd.f32 %v1454, %v1502
    %1504 = vdwg.mxu0
    %1505 = vmatpush.bf16.msra.mxu0 %v887
    %1506 = vmatpush.bf16.msra.mxu0 %v885
    %1507 = vmatpush.bf16.msra.mxu0 %v883
    %1508 = vmatpush.bf16.msra.mxu0 %v881
    %1509 = vmatpush.bf16.msra.mxu0 %v879
    %1510 = vmatpush.bf16.msra.mxu0 %v877
    %1511 = vmatpush.bf16.msra.mxu0 %v875
    %1512 = vmatpush.bf16.msra.mxu0 %v873
    %1513 = vmatmul.bf16.gmra.mxu0 %v394
    %v1514 = vpop.f32.mrf.mxu0
    %v1515 = vadd.f32 %v1466, %v1514
    %v1516 = vpop.f32.mrf.mxu0
    %v1517 = vadd.f32 %v1468, %v1516
    %1518 = vmatmul.bf16.gmra.mxu0 %v401
    %v1519 = vpop.f32.mrf.mxu0
    %v1520 = vadd.f32 %v1471, %v1519
    %v1521 = vpop.f32.mrf.mxu0
    %v1522 = vadd.f32 %v1473, %v1521
    %1523 = vmatmul.bf16.gmra.mxu0 %v408
    %v1524 = vpop.f32.mrf.mxu0
    %v1525 = vadd.f32 %v1476, %v1524
    %v1526 = vpop.f32.mrf.mxu0
    %v1527 = vadd.f32 %v1478, %v1526
    %1528 = vmatmul.bf16.gmra.mxu0 %v415
    %v1529 = vpop.f32.mrf.mxu0
    %v1530 = vadd.f32 %v1481, %v1529
    %v1531 = vpop.f32.mrf.mxu0
    %v1532 = vadd.f32 %v1483, %v1531
    %1533 = vmatmul.bf16.gmra.mxu0 %v422
    %v1534 = vpop.f32.mrf.mxu0
    %v1535 = vadd.f32 %v1486, %v1534
    %v1536 = vpop.f32.mrf.mxu0
    %v1537 = vadd.f32 %v1488, %v1536
    %1538 = vmatmul.bf16.gmra.mxu0 %v429
    %v1539 = vpop.f32.mrf.mxu0
    %v1540 = vadd.f32 %v1491, %v1539
    %v1541 = vpop.f32.mrf.mxu0
    %v1542 = vadd.f32 %v1493, %v1541
    %1543 = vmatmul.bf16.gmra.mxu0 %v436
    %v1544 = vpop.f32.mrf.mxu0
    %v1545 = vadd.f32 %v1496, %v1544
    %v1546 = vpop.f32.mrf.mxu0
    %v1547 = vadd.f32 %v1498, %v1546
    %1548 = vmatmul.bf16.gmra.mxu0 %v443
    %v1549 = vpop.f32.mrf.mxu0
    %v1550 = vadd.f32 %v1501, %v1549
    %v1551 = vpop.f32.mrf.mxu0
    %v1552 = vadd.f32 %v1503, %v1551
    %1553 = vdwg.mxu0
    %1554 = vmatpush.bf16.msra.mxu0 %v903
    %1555 = vmatpush.bf16.msra.mxu0 %v901
    %1556 = vmatpush.bf16.msra.mxu0 %v899
    %1557 = vmatpush.bf16.msra.mxu0 %v897
    %1558 = vmatpush.bf16.msra.mxu0 %v895
    %1559 = vmatpush.bf16.msra.mxu0 %v893
    %1560 = vmatpush.bf16.msra.mxu0 %v891
    %1561 = vmatpush.bf16.msra.mxu0 %v889
    %1562 = vmatmul.bf16.gmra.mxu0 %v395
    %v1563 = vpop.f32.mrf.mxu0
    %v1564 = vadd.f32 %v1515, %v1563
    %v1565 = vpop.f32.mrf.mxu0
    %v1566 = vadd.f32 %v1517, %v1565
    %1567 = vmatmul.bf16.gmra.mxu0 %v402
    %v1568 = vpop.f32.mrf.mxu0
    %v1569 = vadd.f32 %v1520, %v1568
    %v1570 = vpop.f32.mrf.mxu0
    %v1571 = vadd.f32 %v1522, %v1570
    %1572 = vmatmul.bf16.gmra.mxu0 %v409
    %v1573 = vpop.f32.mrf.mxu0
    %v1574 = vadd.f32 %v1525, %v1573
    %v1575 = vpop.f32.mrf.mxu0
    %v1576 = vadd.f32 %v1527, %v1575
    %1577 = vmatmul.bf16.gmra.mxu0 %v416
    %v1578 = vpop.f32.mrf.mxu0
    %v1579 = vadd.f32 %v1530, %v1578
    %v1580 = vpop.f32.mrf.mxu0
    %v1581 = vadd.f32 %v1532, %v1580
    %1582 = vmatmul.bf16.gmra.mxu0 %v423
    %v1583 = vpop.f32.mrf.mxu0
    %v1584 = vadd.f32 %v1535, %v1583
    %v1585 = vpop.f32.mrf.mxu0
    %v1586 = vadd.f32 %v1537, %v1585
    %1587 = vmatmul.bf16.gmra.mxu0 %v430
    %v1588 = vpop.f32.mrf.mxu0
    %v1589 = vadd.f32 %v1540, %v1588
    %v1590 = vpop.f32.mrf.mxu0
    %v1591 = vadd.f32 %v1542, %v1590
    %1592 = vmatmul.bf16.gmra.mxu0 %v437
    %v1593 = vpop.f32.mrf.mxu0
    %v1594 = vadd.f32 %v1545, %v1593
    %v1595 = vpop.f32.mrf.mxu0
    %v1596 = vadd.f32 %v1547, %v1595
    %1597 = vmatmul.bf16.gmra.mxu0 %v444
    %v1598 = vpop.f32.mrf.mxu0
    %v1599 = vadd.f32 %v1550, %v1598
    %v1600 = vpop.f32.mrf.mxu0
    %v1601 = vadd.f32 %v1552, %v1600
    %1602 = vdwg.mxu0
    %1603 = vmatpush.bf16.msra.mxu0 %v919
    %1604 = vmatpush.bf16.msra.mxu0 %v917
    %1605 = vmatpush.bf16.msra.mxu0 %v915
    %1606 = vmatpush.bf16.msra.mxu0 %v913
    %1607 = vmatpush.bf16.msra.mxu0 %v911
    %1608 = vmatpush.bf16.msra.mxu0 %v909
    %1609 = vmatpush.bf16.msra.mxu0 %v907
    %1610 = vmatpush.bf16.msra.mxu0 %v905
    %1611 = vmatmul.bf16.gmra.mxu0 %v396
    %v1612 = vpop.f32.mrf.mxu0
    %v1613 = vadd.f32 %v1564, %v1612
    %v1614 = vpop.f32.mrf.mxu0
    %v1615 = vadd.f32 %v1566, %v1614
    %1616 = vmatmul.bf16.gmra.mxu0 %v403
    %v1617 = vpop.f32.mrf.mxu0
    %v1618 = vadd.f32 %v1569, %v1617
    %v1619 = vpop.f32.mrf.mxu0
    %v1620 = vadd.f32 %v1571, %v1619
    %1621 = vmatmul.bf16.gmra.mxu0 %v410
    %v1622 = vpop.f32.mrf.mxu0
    %v1623 = vadd.f32 %v1574, %v1622
    %v1624 = vpop.f32.mrf.mxu0
    %v1625 = vadd.f32 %v1576, %v1624
    %1626 = vmatmul.bf16.gmra.mxu0 %v417
    %v1627 = vpop.f32.mrf.mxu0
    %v1628 = vadd.f32 %v1579, %v1627
    %v1629 = vpop.f32.mrf.mxu0
    %v1630 = vadd.f32 %v1581, %v1629
    %1631 = vmatmul.bf16.gmra.mxu0 %v424
    %v1632 = vpop.f32.mrf.mxu0
    %v1633 = vadd.f32 %v1584, %v1632
    %v1634 = vpop.f32.mrf.mxu0
    %v1635 = vadd.f32 %v1586, %v1634
    %1636 = vmatmul.bf16.gmra.mxu0 %v431
    %v1637 = vpop.f32.mrf.mxu0
    %v1638 = vadd.f32 %v1589, %v1637
    %v1639 = vpop.f32.mrf.mxu0
    %v1640 = vadd.f32 %v1591, %v1639
    %1641 = vmatmul.bf16.gmra.mxu0 %v438
    %v1642 = vpop.f32.mrf.mxu0
    %v1643 = vadd.f32 %v1594, %v1642
    %v1644 = vpop.f32.mrf.mxu0
    %v1645 = vadd.f32 %v1596, %v1644
    %1646 = vmatmul.bf16.gmra.mxu0 %v445
    %v1647 = vpop.f32.mrf.mxu0
    %v1648 = vadd.f32 %v1599, %v1647
    %v1649 = vpop.f32.mrf.mxu0
    %v1650 = vadd.f32 %v1601, %v1649
    %1651 = vdwg.mxu0
    %1652 = vmatpush.bf16.msra.mxu0 %v935
    %1653 = vmatpush.bf16.msra.mxu0 %v933
    %1654 = vmatpush.bf16.msra.mxu0 %v931
    %1655 = vmatpush.bf16.msra.mxu0 %v929
    %1656 = vmatpush.bf16.msra.mxu0 %v927
    %1657 = vmatpush.bf16.msra.mxu0 %v925
    %1658 = vmatpush.bf16.msra.mxu0 %v923
    %1659 = vmatpush.bf16.msra.mxu0 %v921
    %1660 = vmatmul.bf16.gmra.mxu0 %v397
    %v1661 = vpop.f32.mrf.mxu0
    %v1662 = vadd.f32 %v1613, %v1661
    %v1663 = vpop.f32.mrf.mxu0
    %v1664 = vadd.f32 %v1615, %v1663
    %1665 = vmatmul.bf16.gmra.mxu0 %v404
    %v1666 = vpop.f32.mrf.mxu0
    %v1667 = vadd.f32 %v1618, %v1666
    %v1668 = vpop.f32.mrf.mxu0
    %v1669 = vadd.f32 %v1620, %v1668
    %1670 = vmatmul.bf16.gmra.mxu0 %v411
    %v1671 = vpop.f32.mrf.mxu0
    %v1672 = vadd.f32 %v1623, %v1671
    %v1673 = vpop.f32.mrf.mxu0
    %v1674 = vadd.f32 %v1625, %v1673
    %1675 = vmatmul.bf16.gmra.mxu0 %v418
    %v1676 = vpop.f32.mrf.mxu0
    %v1677 = vadd.f32 %v1628, %v1676
    %v1678 = vpop.f32.mrf.mxu0
    %v1679 = vadd.f32 %v1630, %v1678
    %1680 = vmatmul.bf16.gmra.mxu0 %v425
    %v1681 = vpop.f32.mrf.mxu0
    %v1682 = vadd.f32 %v1633, %v1681
    %v1683 = vpop.f32.mrf.mxu0
    %v1684 = vadd.f32 %v1635, %v1683
    %1685 = vmatmul.bf16.gmra.mxu0 %v432
    %v1686 = vpop.f32.mrf.mxu0
    %v1687 = vadd.f32 %v1638, %v1686
    %v1688 = vpop.f32.mrf.mxu0
    %v1689 = vadd.f32 %v1640, %v1688
    %1690 = vmatmul.bf16.gmra.mxu0 %v439
    %v1691 = vpop.f32.mrf.mxu0
    %v1692 = vadd.f32 %v1643, %v1691
    %v1693 = vpop.f32.mrf.mxu0
    %v1694 = vadd.f32 %v1645, %v1693
    %1695 = vmatmul.bf16.gmra.mxu0 %v446
    %v1696 = vpop.f32.mrf.mxu0
    %v1697 = vadd.f32 %v1648, %v1696
    %v1698 = vpop.f32.mrf.mxu0
    %v1699 = vadd.f32 %v1650, %v1698
    %1700 = vdwg.mxu0
    %1701 = vmatpush.bf16.msra.mxu0 %v951
    %1702 = vmatpush.bf16.msra.mxu0 %v949
    %1703 = vmatpush.bf16.msra.mxu0 %v947
    %1704 = vmatpush.bf16.msra.mxu0 %v945
    %1705 = vmatpush.bf16.msra.mxu0 %v943
    %1706 = vmatpush.bf16.msra.mxu0 %v941
    %1707 = vmatpush.bf16.msra.mxu0 %v939
    %1708 = vmatpush.bf16.msra.mxu0 %v937
    %1709 = vmatmul.bf16.gmra.mxu0 %v398
    %v1710 = vpop.f32.mrf.mxu0
    %v1711 = vadd.f32 %v1662, %v1710
    %v1712 = vpop.f32.mrf.mxu0
    %v1713 = vadd.f32 %v1664, %v1712
    %1714 = vmatmul.bf16.gmra.mxu0 %v405
    %v1715 = vpop.f32.mrf.mxu0
    %v1716 = vadd.f32 %v1667, %v1715
    %v1717 = vpop.f32.mrf.mxu0
    %v1718 = vadd.f32 %v1669, %v1717
    %1719 = vmatmul.bf16.gmra.mxu0 %v412
    %v1720 = vpop.f32.mrf.mxu0
    %v1721 = vadd.f32 %v1672, %v1720
    %v1722 = vpop.f32.mrf.mxu0
    %v1723 = vadd.f32 %v1674, %v1722
    %1724 = vmatmul.bf16.gmra.mxu0 %v419
    %v1725 = vpop.f32.mrf.mxu0
    %v1726 = vadd.f32 %v1677, %v1725
    %v1727 = vpop.f32.mrf.mxu0
    %v1728 = vadd.f32 %v1679, %v1727
    %1729 = vmatmul.bf16.gmra.mxu0 %v426
    %v1730 = vpop.f32.mrf.mxu0
    %v1731 = vadd.f32 %v1682, %v1730
    %v1732 = vpop.f32.mrf.mxu0
    %v1733 = vadd.f32 %v1684, %v1732
    %1734 = vmatmul.bf16.gmra.mxu0 %v433
    %v1735 = vpop.f32.mrf.mxu0
    %v1736 = vadd.f32 %v1687, %v1735
    %v1737 = vpop.f32.mrf.mxu0
    %v1738 = vadd.f32 %v1689, %v1737
    %1739 = vmatmul.bf16.gmra.mxu0 %v440
    %v1740 = vpop.f32.mrf.mxu0
    %v1741 = vadd.f32 %v1692, %v1740
    %v1742 = vpop.f32.mrf.mxu0
    %v1743 = vadd.f32 %v1694, %v1742
    %1744 = vmatmul.bf16.gmra.mxu0 %v447
    %v1745 = vpop.f32.mrf.mxu0
    %v1746 = vadd.f32 %v1697, %v1745
    %v1747 = vpop.f32.mrf.mxu0
    %v1748 = vadd.f32 %v1699, %v1747
    %1749 = vdwg.mxu0
    %v1750 = vadd.f32 %v1368, %v1370
    %v1751 = vadd.f32 %v1750, %v1373
    %v1752 = vadd.f32 %v1751, %v1375
    %v1753 = vadd.f32 %v1752, %v1378
    %v1754 = vadd.f32 %v1753, %v1380
    %v1755 = vadd.f32 %v1754, %v1383
    %v1756 = vadd.f32 %v1755, %v1385
    %v1757 = vadd.f32 %v1756, %v1388
    %v1758 = vadd.f32 %v1757, %v1390
    %v1759 = vadd.f32 %v1758, %v1393
    %v1760 = vadd.f32 %v1759, %v1395
    %v1761 = vadd.f32 %v1760, %v1398
    %v1762 = vadd.f32 %v1761, %v1400
    %v1763 = vadd.f32 %v1762, %v1403
    %v1764 = vadd.f32 %v1763, %v1405
    %v1765 = vrot.slane %v1764, 4
    %v1766 = vadd.f32 %v1764, %v1765
    %v1767 = vrot.slane %v1766, 2
    %v1768 = vadd.f32 %v1766, %v1767
    %v1769 = vrot.slane %v1768, 1
    %v1770 = vadd.f32 %v1768, %v1769
    %v1771 = vadd.f32 %v1711, %v1713
    %v1772 = vadd.f32 %v1771, %v1716
    %v1773 = vadd.f32 %v1772, %v1718
    %v1774 = vadd.f32 %v1773, %v1721
    %v1775 = vadd.f32 %v1774, %v1723
    %v1776 = vadd.f32 %v1775, %v1726
    %v1777 = vadd.f32 %v1776, %v1728
    %v1778 = vadd.f32 %v1777, %v1731
    %v1779 = vadd.f32 %v1778, %v1733
    %v1780 = vadd.f32 %v1779, %v1736
    %v1781 = vadd.f32 %v1780, %v1738
    %v1782 = vadd.f32 %v1781, %v1741
    %v1783 = vadd.f32 %v1782, %v1743
    %v1784 = vadd.f32 %v1783, %v1746
    %v1785 = vadd.f32 %v1784, %v1748
    %v1786 = vrot.slane %v1785, 4
    %v1787 = vadd.f32 %v1785, %v1786
    %v1788 = vrot.slane %v1787, 2
    %v1789 = vadd.f32 %v1787, %v1788
    %v1790 = vrot.slane %v1789, 1
    %v1791 = vadd.f32 %v1789, %v1790
    %v1792 = vmul.f32 %v1368, %v1368
    %v1793 = vmul.f32 %v1711, %v1711
    %v1794 = vmul.f32 %v1370, %v1370
    %v1795 = vmul.f32 %v1713, %v1713
    %v1796 = vmul.f32 %v1373, %v1373
    %v1797 = vmul.f32 %v1716, %v1716
    %v1798 = vmul.f32 %v1375, %v1375
    %v1799 = vmul.f32 %v1718, %v1718
    %v1800 = vmul.f32 %v1378, %v1378
    %v1801 = vmul.f32 %v1721, %v1721
    %v1802 = vmul.f32 %v1380, %v1380
    %v1803 = vmul.f32 %v1723, %v1723
    %v1804 = vmul.f32 %v1383, %v1383
    %v1805 = vmul.f32 %v1726, %v1726
    %v1806 = vmul.f32 %v1385, %v1385
    %v1807 = vmul.f32 %v1728, %v1728
    %v1808 = vmul.f32 %v1388, %v1388
    %v1809 = vmul.f32 %v1731, %v1731
    %v1810 = vmul.f32 %v1390, %v1390
    %v1811 = vmul.f32 %v1733, %v1733
    %v1812 = vmul.f32 %v1393, %v1393
    %v1813 = vmul.f32 %v1736, %v1736
    %v1814 = vmul.f32 %v1395, %v1395
    %v1815 = vmul.f32 %v1738, %v1738
    %v1816 = vmul.f32 %v1398, %v1398
    %v1817 = vmul.f32 %v1741, %v1741
    %v1818 = vmul.f32 %v1400, %v1400
    %v1819 = vmul.f32 %v1743, %v1743
    %v1820 = vmul.f32 %v1403, %v1403
    %v1821 = vmul.f32 %v1746, %v1746
    %v1822 = vmul.f32 %v1405, %v1405
    %v1823 = vmul.f32 %v1748, %v1748
    %v1824 = vadd.f32 %v1792, %v1794
    %v1825 = vadd.f32 %v1824, %v1796
    %v1826 = vadd.f32 %v1825, %v1798
    %v1827 = vadd.f32 %v1826, %v1800
    %v1828 = vadd.f32 %v1827, %v1802
    %v1829 = vadd.f32 %v1828, %v1804
    %v1830 = vadd.f32 %v1829, %v1806
    %v1831 = vadd.f32 %v1830, %v1808
    %v1832 = vadd.f32 %v1831, %v1810
    %v1833 = vadd.f32 %v1832, %v1812
    %v1834 = vadd.f32 %v1833, %v1814
    %v1835 = vadd.f32 %v1834, %v1816
    %v1836 = vadd.f32 %v1835, %v1818
    %v1837 = vadd.f32 %v1836, %v1820
    %v1838 = vadd.f32 %v1837, %v1822
    %v1839 = vrot.slane %v1838, 4
    %v1840 = vadd.f32 %v1838, %v1839
    %v1841 = vrot.slane %v1840, 2
    %v1842 = vadd.f32 %v1840, %v1841
    %v1843 = vrot.slane %v1842, 1
    %v1844 = vadd.f32 %v1842, %v1843
    %v1845 = vadd.f32 %v1793, %v1795
    %v1846 = vadd.f32 %v1845, %v1797
    %v1847 = vadd.f32 %v1846, %v1799
    %v1848 = vadd.f32 %v1847, %v1801
    %v1849 = vadd.f32 %v1848, %v1803
    %v1850 = vadd.f32 %v1849, %v1805
    %v1851 = vadd.f32 %v1850, %v1807
    %v1852 = vadd.f32 %v1851, %v1809
    %v1853 = vadd.f32 %v1852, %v1811
    %v1854 = vadd.f32 %v1853, %v1813
    %v1855 = vadd.f32 %v1854, %v1815
    %v1856 = vadd.f32 %v1855, %v1817
    %v1857 = vadd.f32 %v1856, %v1819
    %v1858 = vadd.f32 %v1857, %v1821
    %v1859 = vadd.f32 %v1858, %v1823
    %v1860 = vrot.slane %v1859, 4
    %v1861 = vadd.f32 %v1859, %v1860
    %v1862 = vrot.slane %v1861, 2
    %v1863 = vadd.f32 %v1861, %v1862
    %v1864 = vrot.slane %v1863, 1
    %v1865 = vadd.f32 %v1863, %v1864
    %v1866 = vmul.f32 %v1770, 0.0078125
    %v1867 = vmul.f32 %v1791, 0.0078125
    %v1868 = vmul.f32 %v1844, 0.0078125
    %v1869 = vmul.f32 %v1865, 0.0078125
    %v1870 = vmul.f32 %v1866, %v1866
    %v1871 = vmul.f32 %v1867, %v1867
    %v1872 = vsub.f32 %v1868, %v1870
    %v1873 = vsub.f32 %v1869, %v1871
    %v1874 = vadd.f32 %v1872, 1e-05
    %v1875 = vadd.f32 %v1873, 1e-05
    %v1876 = vrsqrt.pop %v1874
    %v1877 = vmul.f32 %v1876, %v1874
    %v1878 = vmul.f32 %v1877, %v1876
    %v1879 = vmul.f32 0.5, %v1878
    %v1880 = vsub.f32 1.5, %v1879
    %v1881 = vmul.f32 %v1876, %v1880
    %vm1882 = vweird.f32 %v1874
    %vm1883 = vweird.f32 %v1876
    %vm1884 = vmor %vm1882, %vm1883
    %v1885 = vsel %vm1884, %v1876, %v1881
    %v1886 = vrsqrt.pop %v1875
    %v1887 = vmul.f32 %v1886, %v1875
    %v1888 = vmul.f32 %v1887, %v1886
    %v1889 = vmul.f32 0.5, %v1888
    %v1890 = vsub.f32 1.5, %v1889
    %v1891 = vmul.f32 %v1886, %v1890
    %vm1892 = vweird.f32 %v1875
    %vm1893 = vweird.f32 %v1886
    %vm1894 = vmor %vm1892, %vm1893
    %v1895 = vsel %vm1894, %v1886, %v1891
    %v1897 = vperm.slane %v27, 0
    %v1898 = vperm.slane %v27, 1
    %v1901 = vmul.f32 %v1885, %v1897
    %v1902 = vmul.f32 %v1895, %v1898
    %v1903 = vmul.f32 %v1866, %v1901
    %v1904 = vmul.f32 %v1867, %v1902
    %v1907 = vrot.slane %v1904, 7
    %vm1908 = vcmask 1040384
    %v1909 = vsel %vm1908, %v1903, %v1907
    %v1911 = vsub.f32 %v29, %v1909
    %v1912 = vperm.slane %v1901, 0
    %v1913 = vperm.slane %v1902, 0
    %v1914 = vmul.f32 %v1368, %v1912
    %v1915 = vmul.f32 %v1711, %v1913
    %v1916 = vmul.f32 %v1370, %v1912
    %v1917 = vmul.f32 %v1713, %v1913
    %v1918 = vmul.f32 %v1373, %v1912
    %v1919 = vmul.f32 %v1716, %v1913
    %v1920 = vmul.f32 %v1375, %v1912
    %v1921 = vmul.f32 %v1718, %v1913
    %v1922 = vmul.f32 %v1378, %v1912
    %v1923 = vmul.f32 %v1721, %v1913
    %v1924 = vmul.f32 %v1380, %v1912
    %v1925 = vmul.f32 %v1723, %v1913
    %v1926 = vmul.f32 %v1383, %v1912
    %v1927 = vmul.f32 %v1726, %v1913
    %v1928 = vmul.f32 %v1385, %v1912
    %v1929 = vmul.f32 %v1728, %v1913
    %v1930 = vmul.f32 %v1388, %v1912
    %v1931 = vmul.f32 %v1731, %v1913
    %v1932 = vmul.f32 %v1390, %v1912
    %v1933 = vmul.f32 %v1733, %v1913
    %v1934 = vmul.f32 %v1393, %v1912
    %v1935 = vmul.f32 %v1736, %v1913
    %v1936 = vmul.f32 %v1395, %v1912
    %v1937 = vmul.f32 %v1738, %v1913
    %v1938 = vmul.f32 %v1398, %v1912
    %v1939 = vmul.f32 %v1741, %v1913
    %v1940 = vmul.f32 %v1400, %v1912
    %v1941 = vmul.f32 %v1743, %v1913
    %v1942 = vmul.f32 %v1403, %v1912
    %v1943 = vmul.f32 %v1746, %v1913
    %v1944 = vmul.f32 %v1405, %v1912
    %v1945 = vmul.f32 %v1748, %v1913
    %v1947 = vperm.slane %v1911, 0
    %v1948 = vperm.slane %v1911, 1
    %v1951 = vadd.f32 %v1914, %v1947
    %v1952 = vadd.f32 %v1915, %v1948
    %v1953 = vadd.f32 %v1916, %v1947
    %v1954 = vadd.f32 %v1917, %v1948
    %v1955 = vadd.f32 %v1918, %v1947
    %v1956 = vadd.f32 %v1919, %v1948
    %v1957 = vadd.f32 %v1920, %v1947
    %v1958 = vadd.f32 %v1921, %v1948
    %v1959 = vadd.f32 %v1922, %v1947
    %v1960 = vadd.f32 %v1923, %v1948
    %v1961 = vadd.f32 %v1924, %v1947
    %v1962 = vadd.f32 %v1925, %v1948
    %v1963 = vadd.f32 %v1926, %v1947
    %v1964 = vadd.f32 %v1927, %v1948
    %v1965 = vadd.f32 %v1928, %v1947
    %v1966 = vadd.f32 %v1929, %v1948
    %v1967 = vadd.f32 %v1930, %v1947
    %v1968 = vadd.f32 %v1931, %v1948
    %v1969 = vadd.f32 %v1932, %v1947
    %v1970 = vadd.f32 %v1933, %v1948
    %v1971 = vadd.f32 %v1934, %v1947
    %v1972 = vadd.f32 %v1935, %v1948
    %v1973 = vadd.f32 %v1936, %v1947
    %v1974 = vadd.f32 %v1937, %v1948
    %v1975 = vadd.f32 %v1938, %v1947
    %v1976 = vadd.f32 %v1939, %v1948
    %v1977 = vadd.f32 %v1940, %v1947
    %v1978 = vadd.f32 %v1941, %v1948
    %v1979 = vadd.f32 %v1942, %v1947
    %v1980 = vadd.f32 %v1943, %v1948
    %v1981 = vadd.f32 %v1944, %v1947
    %v1982 = vadd.f32 %v1945, %v1948
    %v1983 = vmax.f32 %v1951, 0.0
    %v1984 = vmax.f32 %v1952, 0.0
    %v1985 = vmax.f32 %v1953, 0.0
    %v1986 = vmax.f32 %v1954, 0.0
    %v1987 = vmax.f32 %v1955, 0.0
    %v1988 = vmax.f32 %v1956, 0.0
    %v1989 = vmax.f32 %v1957, 0.0
    %v1990 = vmax.f32 %v1958, 0.0
    %v1991 = vmax.f32 %v1959, 0.0
    %v1992 = vmax.f32 %v1960, 0.0
    %v1993 = vmax.f32 %v1961, 0.0
    %v1994 = vmax.f32 %v1962, 0.0
    %v1995 = vmax.f32 %v1963, 0.0
    %v1996 = vmax.f32 %v1964, 0.0
    %v1997 = vmax.f32 %v1965, 0.0
    %v1998 = vmax.f32 %v1966, 0.0
    %v1999 = vmax.f32 %v1967, 0.0
    %v2000 = vmax.f32 %v1968, 0.0
    %v2001 = vmax.f32 %v1969, 0.0
    %v2002 = vmax.f32 %v1970, 0.0
    %v2003 = vmax.f32 %v1971, 0.0
    %v2004 = vmax.f32 %v1972, 0.0
    %v2005 = vmax.f32 %v1973, 0.0
    %v2006 = vmax.f32 %v1974, 0.0
    %v2007 = vmax.f32 %v1975, 0.0
    %v2008 = vmax.f32 %v1976, 0.0
    %v2009 = vmax.f32 %v1977, 0.0
    %v2010 = vmax.f32 %v1978, 0.0
    %v2011 = vmax.f32 %v1979, 0.0
    %v2012 = vmax.f32 %v1980, 0.0
    %v2013 = vmax.f32 %v1981, 0.0
    %v2014 = vmax.f32 %v1982, 0.0
    %v2015 = vld [vmem:[%s1] sm:$0xff]
    %v2016 = vld [vmem:[%s1 + $0x8] sm:$0xff]
    %v2017 = vld [vmem:[%s1 + $0x10] sm:$0xff]
    %v2018 = vld [vmem:[%s1 + $0x18] sm:$0xff]
    %v2019 = vld [vmem:[%s1 + $0x20] sm:$0xff]
    %v2020 = vld [vmem:[%s1 + $0x28] sm:$0xff]
    %v2021 = vld [vmem:[%s1 + $0x30] sm:$0xff]
    %v2022 = vld [vmem:[%s1 + $0x38] sm:$0xff]
    %v2023 = vld [vmem:[%s1 + $0x40] sm:$0xff]
    %v2024 = vld [vmem:[%s1 + $0x48] sm:$0xff]
    %v2025 = vld [vmem:[%s1 + $0x50] sm:$0xff]
    %v2026 = vld [vmem:[%s1 + $0x58] sm:$0xff]
    %v2027 = vld [vmem:[%s1 + $0x60] sm:$0xff]
    %v2028 = vld [vmem:[%s1 + $0x68] sm:$0xff]
    %v2029 = vld [vmem:[%s1 + $0x70] sm:$0xff]
    %v2030 = vld [vmem:[%s1 + $0x78] sm:$0xff]
    %v2031 = vunpack.c.l.bf16 %v2015
    %v2032 = vunpack.c.h.bf16 %v2015
    %v2033 = vunpack.c.l.bf16 %v2016
    %v2034 = vunpack.c.h.bf16 %v2016
    %v2035 = vunpack.c.l.bf16 %v2017
    %v2036 = vunpack.c.h.bf16 %v2017
    %v2037 = vunpack.c.l.bf16 %v2018
    %v2038 = vunpack.c.h.bf16 %v2018
    %v2039 = vunpack.c.l.bf16 %v2019
    %v2040 = vunpack.c.h.bf16 %v2019
    %v2041 = vunpack.c.l.bf16 %v2020
    %v2042 = vunpack.c.h.bf16 %v2020
    %v2043 = vunpack.c.l.bf16 %v2021
    %v2044 = vunpack.c.h.bf16 %v2021
    %v2045 = vunpack.c.l.bf16 %v2022
    %v2046 = vunpack.c.h.bf16 %v2022
    %v2047 = vunpack.c.l.bf16 %v2023
    %v2048 = vunpack.c.h.bf16 %v2023
    %v2049 = vunpack.c.l.bf16 %v2024
    %v2050 = vunpack.c.h.bf16 %v2024
    %v2051 = vunpack.c.l.bf16 %v2025
    %v2052 = vunpack.c.h.bf16 %v2025
    %v2053 = vunpack.c.l.bf16 %v2026
    %v2054 = vunpack.c.h.bf16 %v2026
    %v2055 = vunpack.c.l.bf16 %v2027
    %v2056 = vunpack.c.h.bf16 %v2027
    %v2057 = vunpack.c.l.bf16 %v2028
    %v2058 = vunpack.c.h.bf16 %v2028
    %v2059 = vunpack.c.l.bf16 %v2029
    %v2060 = vunpack.c.h.bf16 %v2029
    %v2061 = vunpack.c.l.bf16 %v2030
    %v2062 = vunpack.c.h.bf16 %v2030
    %v2063 = vmul.f32 %v1983, %v2031
    %v2064 = vmul.f32 %v1984, %v2032
    %v2065 = vmul.f32 %v1985, %v2033
    %v2066 = vmul.f32 %v1986, %v2034
    %v2067 = vmul.f32 %v1987, %v2035
    %v2068 = vmul.f32 %v1988, %v2036
    %v2069 = vmul.f32 %v1989, %v2037
    %v2070 = vmul.f32 %v1990, %v2038
    %v2071 = vmul.f32 %v1991, %v2039
    %v2072 = vmul.f32 %v1992, %v2040
    %v2073 = vmul.f32 %v1993, %v2041
    %v2074 = vmul.f32 %v1994, %v2042
    %v2075 = vmul.f32 %v1995, %v2043
    %v2076 = vmul.f32 %v1996, %v2044
    %v2077 = vmul.f32 %v1997, %v2045
    %v2078 = vmul.f32 %v1998, %v2046
    %v2079 = vmul.f32 %v1999, %v2047
    %v2080 = vmul.f32 %v2000, %v2048
    %v2081 = vmul.f32 %v2001, %v2049
    %v2082 = vmul.f32 %v2002, %v2050
    %v2083 = vmul.f32 %v2003, %v2051
    %v2084 = vmul.f32 %v2004, %v2052
    %v2085 = vmul.f32 %v2005, %v2053
    %v2086 = vmul.f32 %v2006, %v2054
    %v2087 = vmul.f32 %v2007, %v2055
    %v2088 = vmul.f32 %v2008, %v2056
    %v2089 = vmul.f32 %v2009, %v2057
    %v2090 = vmul.f32 %v2010, %v2058
    %v2091 = vmul.f32 %v2011, %v2059
    %v2092 = vmul.f32 %v2012, %v2060
    %v2093 = vmul.f32 %v2013, %v2061
    %v2094 = vmul.f32 %v2014, %v2062
    %v2095 = vpack.c.bf16 %v2065, %v2063
    %v2096 = vpack.c.bf16 %v2066, %v2064
    %v2097 = vpack.c.bf16 %v2069, %v2067
    %v2098 = vpack.c.bf16 %v2070, %v2068
    %v2099 = vpack.c.bf16 %v2073, %v2071
    %v2100 = vpack.c.bf16 %v2074, %v2072
    %v2101 = vpack.c.bf16 %v2077, %v2075
    %v2102 = vpack.c.bf16 %v2078, %v2076
    %v2103 = vpack.c.bf16 %v2081, %v2079
    %v2104 = vpack.c.bf16 %v2082, %v2080
    %v2105 = vpack.c.bf16 %v2085, %v2083
    %v2106 = vpack.c.bf16 %v2086, %v2084
    %v2107 = vpack.c.bf16 %v2089, %v2087
    %v2108 = vpack.c.bf16 %v2090, %v2088
    %v2109 = vpack.c.bf16 %v2093, %v2091
    %v2110 = vpack.c.bf16 %v2094, %v2092
    %v2111 = vld [vmem:[%s3] sm:$0xf]
    %v2112 = vld [vmem:[%s3 + $0x4] sm:$0xf]
    %v2113 = vld [vmem:[%s3 + $0x8] sm:$0xf]
    %v2114 = vld [vmem:[%s3 + $0xc] sm:$0xf]
    %v2115 = vld [vmem:[%s3 + $0x10] sm:$0xf]
    %v2116 = vld [vmem:[%s3 + $0x14] sm:$0xf]
    %v2117 = vld [vmem:[%s3 + $0x18] sm:$0xf]
    %v2118 = vld [vmem:[%s3 + $0x1c] sm:$0xf]
    %v2119 = vld [vmem:[%s3 + $0x20] sm:$0xf]
    %v2120 = vld [vmem:[%s3 + $0x24] sm:$0xf]
    %v2121 = vld [vmem:[%s3 + $0x28] sm:$0xf]
    %v2122 = vld [vmem:[%s3 + $0x2c] sm:$0xf]
    %v2123 = vld [vmem:[%s3 + $0x30] sm:$0xf]
    %v2124 = vld [vmem:[%s3 + $0x34] sm:$0xf]
    %v2125 = vld [vmem:[%s3 + $0x38] sm:$0xf]
    %v2126 = vld [vmem:[%s3 + $0x3c] sm:$0xf]
    %v2127 = vld [vmem:[%s3 + $0x40] sm:$0xf]
    %v2128 = vld [vmem:[%s3 + $0x44] sm:$0xf]
    %v2129 = vld [vmem:[%s3 + $0x48] sm:$0xf]
    %v2130 = vld [vmem:[%s3 + $0x4c] sm:$0xf]
    %v2131 = vld [vmem:[%s3 + $0x50] sm:$0xf]
    %v2132 = vld [vmem:[%s3 + $0x54] sm:$0xf]
    %v2133 = vld [vmem:[%s3 + $0x58] sm:$0xf]
    %v2134 = vld [vmem:[%s3 + $0x5c] sm:$0xf]
    %v2135 = vld [vmem:[%s3 + $0x60] sm:$0xf]
    %v2136 = vld [vmem:[%s3 + $0x64] sm:$0xf]
    %v2137 = vld [vmem:[%s3 + $0x68] sm:$0xf]
    %v2138 = vld [vmem:[%s3 + $0x6c] sm:$0xf]
    %v2139 = vld [vmem:[%s3 + $0x70] sm:$0xf]
    %v2140 = vld [vmem:[%s3 + $0x74] sm:$0xf]
    %v2141 = vld [vmem:[%s3 + $0x78] sm:$0xf]
    %v2142 = vld [vmem:[%s3 + $0x7c] sm:$0xf]
    %v2175 = vunpack.c.l.b16 %v2111
    %v2176 = vunpack.c.l.b16 %v2112
    %v2177 = vunpack.c.l.b16 %v2113
    %v2178 = vunpack.c.l.b16 %v2114
    %v2179 = vunpack.c.l.b16 %v2115
    %v2180 = vunpack.c.l.b16 %v2116
    %v2181 = vunpack.c.l.b16 %v2117
    %v2182 = vunpack.c.l.b16 %v2118
    %v2183 = vunpack.c.l.b16 %v2119
    %v2184 = vunpack.c.l.b16 %v2120
    %v2185 = vunpack.c.l.b16 %v2121
    %v2186 = vunpack.c.l.b16 %v2122
    %v2187 = vunpack.c.l.b16 %v2123
    %v2188 = vunpack.c.l.b16 %v2124
    %v2189 = vunpack.c.l.b16 %v2125
    %v2190 = vunpack.c.l.b16 %v2126
    %v2191 = vunpack.c.l.b16 %v2127
    %v2192 = vunpack.c.l.b16 %v2128
    %v2193 = vunpack.c.l.b16 %v2129
    %v2194 = vunpack.c.l.b16 %v2130
    %v2195 = vunpack.c.l.b16 %v2131
    %v2196 = vunpack.c.l.b16 %v2132
    %v2197 = vunpack.c.l.b16 %v2133
    %v2198 = vunpack.c.l.b16 %v2134
    %v2199 = vunpack.c.l.b16 %v2135
    %v2200 = vunpack.c.l.b16 %v2136
    %v2201 = vunpack.c.l.b16 %v2137
    %v2202 = vunpack.c.l.b16 %v2138
    %v2203 = vunpack.c.l.b16 %v2139
    %v2204 = vunpack.c.l.b16 %v2140
    %v2205 = vunpack.c.l.b16 %v2141
    %v2206 = vunpack.c.l.b16 %v2142
    %v2207 = vpack.c.b16 %v2176, %v2175
    %v2208 = vpack.c.b16 %v2178, %v2177
    %v2209 = vpack.c.b16 %v2180, %v2179
    %v2210 = vpack.c.b16 %v2182, %v2181
    %v2211 = vpack.c.b16 %v2184, %v2183
    %v2212 = vpack.c.b16 %v2186, %v2185
    %v2213 = vpack.c.b16 %v2188, %v2187
    %v2214 = vpack.c.b16 %v2190, %v2189
    %v2215 = vpack.c.b16 %v2192, %v2191
    %v2216 = vpack.c.b16 %v2194, %v2193
    %v2217 = vpack.c.b16 %v2196, %v2195
    %v2218 = vpack.c.b16 %v2198, %v2197
    %v2219 = vpack.c.b16 %v2200, %v2199
    %v2220 = vpack.c.b16 %v2202, %v2201
    %v2221 = vpack.c.b16 %v2204, %v2203
    %v2222 = vpack.c.b16 %v2206, %v2205
    %2239 = vmatpush.bf16.msra.mxu0 %v2214
    %2240 = vmatpush.bf16.msra.mxu0 %v2213
    %2241 = vmatpush.bf16.msra.mxu0 %v2212
    %2242 = vmatpush.bf16.msra.mxu0 %v2211
    %2243 = vmatpush.bf16.msra.mxu0 %v2210
    %2244 = vmatpush.bf16.msra.mxu0 %v2209
    %2245 = vmatpush.bf16.msra.mxu0 %v2208
    %2246 = vmatpush.bf16.msra.mxu0 %v2207
    %2247 = vmatmul.bf16.gmra.mxu0 %v2095
    %v2248 = vpop.f32.mrf.mxu0
    %v2249 = vadd.f32 0.0, %v2248
    %v2250 = vpop.f32.mrf.mxu0
    %v2251 = vadd.f32 0.0, %v2250
    %2252 = vmatmul.bf16.gmra.mxu0 %v2097
    %v2253 = vpop.f32.mrf.mxu0
    %v2254 = vadd.f32 0.0, %v2253
    %v2255 = vpop.f32.mrf.mxu0
    %v2256 = vadd.f32 0.0, %v2255
    %2257 = vmatmul.bf16.gmra.mxu0 %v2099
    %v2258 = vpop.f32.mrf.mxu0
    %v2259 = vadd.f32 0.0, %v2258
    %v2260 = vpop.f32.mrf.mxu0
    %v2261 = vadd.f32 0.0, %v2260
    %2262 = vmatmul.bf16.gmra.mxu0 %v2101
    %v2263 = vpop.f32.mrf.mxu0
    %v2264 = vadd.f32 0.0, %v2263
    %v2265 = vpop.f32.mrf.mxu0
    %v2266 = vadd.f32 0.0, %v2265
    %2267 = vmatmul.bf16.gmra.mxu0 %v2103
    %v2268 = vpop.f32.mrf.mxu0
    %v2269 = vadd.f32 0.0, %v2268
    %v2270 = vpop.f32.mrf.mxu0
    %v2271 = vadd.f32 0.0, %v2270
    %2272 = vmatmul.bf16.gmra.mxu0 %v2105
    %v2273 = vpop.f32.mrf.mxu0
    %v2274 = vadd.f32 0.0, %v2273
    %v2275 = vpop.f32.mrf.mxu0
    %v2276 = vadd.f32 0.0, %v2275
    %2277 = vmatmul.bf16.gmra.mxu0 %v2107
    %v2278 = vpop.f32.mrf.mxu0
    %v2279 = vadd.f32 0.0, %v2278
    %v2280 = vpop.f32.mrf.mxu0
    %v2281 = vadd.f32 0.0, %v2280
    %2282 = vmatmul.bf16.gmra.mxu0 %v2109
    %v2283 = vpop.f32.mrf.mxu0
    %v2284 = vadd.f32 0.0, %v2283
    %v2285 = vpop.f32.mrf.mxu0
    %v2286 = vadd.f32 0.0, %v2285
    %2287 = vdwg.mxu0
    %2288 = vmatpush.bf16.msra.mxu0 %v2222
    %2289 = vmatpush.bf16.msra.mxu0 %v2221
    %2290 = vmatpush.bf16.msra.mxu0 %v2220
    %2291 = vmatpush.bf16.msra.mxu0 %v2219
    %2292 = vmatpush.bf16.msra.mxu0 %v2218
    %2293 = vmatpush.bf16.msra.mxu0 %v2217
    %2294 = vmatpush.bf16.msra.mxu0 %v2216
    %2295 = vmatpush.bf16.msra.mxu0 %v2215
    %2296 = vmatmul.bf16.gmra.mxu0 %v2096
    %v2297 = vpop.f32.mrf.mxu0
    %v2298 = vadd.f32 %v2249, %v2297
    %v2299 = vpop.f32.mrf.mxu0
    %v2300 = vadd.f32 %v2251, %v2299
    %2301 = vmatmul.bf16.gmra.mxu0 %v2098
    %v2302 = vpop.f32.mrf.mxu0
    %v2303 = vadd.f32 %v2254, %v2302
    %v2304 = vpop.f32.mrf.mxu0
    %v2305 = vadd.f32 %v2256, %v2304
    %2306 = vmatmul.bf16.gmra.mxu0 %v2100
    %v2307 = vpop.f32.mrf.mxu0
    %v2308 = vadd.f32 %v2259, %v2307
    %v2309 = vpop.f32.mrf.mxu0
    %v2310 = vadd.f32 %v2261, %v2309
    %2311 = vmatmul.bf16.gmra.mxu0 %v2102
    %v2312 = vpop.f32.mrf.mxu0
    %v2313 = vadd.f32 %v2264, %v2312
    %v2314 = vpop.f32.mrf.mxu0
    %v2315 = vadd.f32 %v2266, %v2314
    %2316 = vmatmul.bf16.gmra.mxu0 %v2104
    %v2317 = vpop.f32.mrf.mxu0
    %v2318 = vadd.f32 %v2269, %v2317
    %v2319 = vpop.f32.mrf.mxu0
    %v2320 = vadd.f32 %v2271, %v2319
    %2321 = vmatmul.bf16.gmra.mxu0 %v2106
    %v2322 = vpop.f32.mrf.mxu0
    %v2323 = vadd.f32 %v2274, %v2322
    %v2324 = vpop.f32.mrf.mxu0
    %v2325 = vadd.f32 %v2276, %v2324
    %2326 = vmatmul.bf16.gmra.mxu0 %v2108
    %v2327 = vpop.f32.mrf.mxu0
    %v2328 = vadd.f32 %v2279, %v2327
    %v2329 = vpop.f32.mrf.mxu0
    %v2330 = vadd.f32 %v2281, %v2329
    %2331 = vmatmul.bf16.gmra.mxu0 %v2110
    %v2332 = vpop.f32.mrf.mxu0
    %v2333 = vadd.f32 %v2284, %v2332
    %v2334 = vpop.f32.mrf.mxu0
    %v2335 = vadd.f32 %v2286, %v2334
    %2336 = vdwg.mxu0
    %v2337 = vadd.f32 %v2298, %v2300
    %v2338 = vadd.f32 %v2337, %v2303
    %v2339 = vadd.f32 %v2338, %v2305
    %v2340 = vadd.f32 %v2339, %v2308
    %v2341 = vadd.f32 %v2340, %v2310
    %v2342 = vadd.f32 %v2341, %v2313
    %v2343 = vadd.f32 %v2342, %v2315
    %v2344 = vadd.f32 %v2343, %v2318
    %v2345 = vadd.f32 %v2344, %v2320
    %v2346 = vadd.f32 %v2345, %v2323
    %v2347 = vadd.f32 %v2346, %v2325
    %v2348 = vadd.f32 %v2347, %v2328
    %v2349 = vadd.f32 %v2348, %v2330
    %v2350 = vadd.f32 %v2349, %v2333
    %v2351 = vadd.f32 %v2350, %v2335
    %v2352 = vrot.slane %v2351, 4
    %v2353 = vadd.f32 %v2351, %v2352
    %v2354 = vrot.slane %v2353, 2
    %v2355 = vadd.f32 %v2353, %v2354
    %v2356 = vrot.slane %v2355, 1
    %v2357 = vadd.f32 %v2355, %v2356
    %v2358 = vmul.f32 %v2298, %v2298
    %v2359 = vmul.f32 %v2300, %v2300
    %v2360 = vmul.f32 %v2303, %v2303
    %v2361 = vmul.f32 %v2305, %v2305
    %v2362 = vmul.f32 %v2308, %v2308
    %v2363 = vmul.f32 %v2310, %v2310
    %v2364 = vmul.f32 %v2313, %v2313
    %v2365 = vmul.f32 %v2315, %v2315
    %v2366 = vmul.f32 %v2318, %v2318
    %v2367 = vmul.f32 %v2320, %v2320
    %v2368 = vmul.f32 %v2323, %v2323
    %v2369 = vmul.f32 %v2325, %v2325
    %v2370 = vmul.f32 %v2328, %v2328
    %v2371 = vmul.f32 %v2330, %v2330
    %v2372 = vmul.f32 %v2333, %v2333
    %v2373 = vmul.f32 %v2335, %v2335
    %v2374 = vadd.f32 %v2358, %v2359
    %v2375 = vadd.f32 %v2374, %v2360
    %v2376 = vadd.f32 %v2375, %v2361
    %v2377 = vadd.f32 %v2376, %v2362
    %v2378 = vadd.f32 %v2377, %v2363
    %v2379 = vadd.f32 %v2378, %v2364
    %v2380 = vadd.f32 %v2379, %v2365
    %v2381 = vadd.f32 %v2380, %v2366
    %v2382 = vadd.f32 %v2381, %v2367
    %v2383 = vadd.f32 %v2382, %v2368
    %v2384 = vadd.f32 %v2383, %v2369
    %v2385 = vadd.f32 %v2384, %v2370
    %v2386 = vadd.f32 %v2385, %v2371
    %v2387 = vadd.f32 %v2386, %v2372
    %v2388 = vadd.f32 %v2387, %v2373
    %v2389 = vrot.slane %v2388, 4
    %v2390 = vadd.f32 %v2388, %v2389
    %v2391 = vrot.slane %v2390, 2
    %v2392 = vadd.f32 %v2390, %v2391
    %v2393 = vrot.slane %v2392, 1
    %v2394 = vadd.f32 %v2392, %v2393
    %v2395 = vmul.f32 %v2357, 0.0078125
    %v2396 = vmul.f32 %v2394, 0.0078125
    %v2397 = vmul.f32 %v2395, %v2395
    %v2398 = vsub.f32 %v2396, %v2397
    %v2399 = vadd.f32 %v2398, 1e-05
    %v2400 = vrsqrt.pop %v2399
    %v2401 = vmul.f32 %v2400, %v2399
    %v2402 = vmul.f32 %v2401, %v2400
    %v2403 = vmul.f32 0.5, %v2402
    %v2404 = vsub.f32 1.5, %v2403
    %v2405 = vmul.f32 %v2400, %v2404
    %vm2406 = vweird.f32 %v2399
    %vm2407 = vweird.f32 %v2400
    %vm2408 = vmor %vm2406, %vm2407
    %v2409 = vsel %vm2408, %v2400, %v2405
    %v2410 = vmul.f32 %v2409, %v30
    %v2411 = vmul.f32 %v2395, %v2410
    %v2412 = vsub.f32 %v31, %v2411
    %v2413 = vmul.f32 %v2298, %v2410
    %v2414 = vmul.f32 %v2300, %v2410
    %v2415 = vmul.f32 %v2303, %v2410
    %v2416 = vmul.f32 %v2305, %v2410
    %v2417 = vmul.f32 %v2308, %v2410
    %v2418 = vmul.f32 %v2310, %v2410
    %v2419 = vmul.f32 %v2313, %v2410
    %v2420 = vmul.f32 %v2315, %v2410
    %v2421 = vmul.f32 %v2318, %v2410
    %v2422 = vmul.f32 %v2320, %v2410
    %v2423 = vmul.f32 %v2323, %v2410
    %v2424 = vmul.f32 %v2325, %v2410
    %v2425 = vmul.f32 %v2328, %v2410
    %v2426 = vmul.f32 %v2330, %v2410
    %v2427 = vmul.f32 %v2333, %v2410
    %v2428 = vmul.f32 %v2335, %v2410
    %v2429 = vadd.f32 %v2413, %v2412
    %v2430 = vadd.f32 %v2414, %v2412
    %v2431 = vadd.f32 %v2415, %v2412
    %v2432 = vadd.f32 %v2416, %v2412
    %v2433 = vadd.f32 %v2417, %v2412
    %v2434 = vadd.f32 %v2418, %v2412
    %v2435 = vadd.f32 %v2419, %v2412
    %v2436 = vadd.f32 %v2420, %v2412
    %v2437 = vadd.f32 %v2421, %v2412
    %v2438 = vadd.f32 %v2422, %v2412
    %v2439 = vadd.f32 %v2423, %v2412
    %v2440 = vadd.f32 %v2424, %v2412
    %v2441 = vadd.f32 %v2425, %v2412
    %v2442 = vadd.f32 %v2426, %v2412
    %v2443 = vadd.f32 %v2427, %v2412
    %v2444 = vadd.f32 %v2428, %v2412
    %v2445 = vmax.f32 %v2429, 0.0
    %v2446 = vmax.f32 %v2430, 0.0
    %v2447 = vmax.f32 %v2431, 0.0
    %v2448 = vmax.f32 %v2432, 0.0
    %v2449 = vmax.f32 %v2433, 0.0
    %v2450 = vmax.f32 %v2434, 0.0
    %v2451 = vmax.f32 %v2435, 0.0
    %v2452 = vmax.f32 %v2436, 0.0
    %v2453 = vmax.f32 %v2437, 0.0
    %v2454 = vmax.f32 %v2438, 0.0
    %v2455 = vmax.f32 %v2439, 0.0
    %v2456 = vmax.f32 %v2440, 0.0
    %v2457 = vmax.f32 %v2441, 0.0
    %v2458 = vmax.f32 %v2442, 0.0
    %v2459 = vmax.f32 %v2443, 0.0
    %v2460 = vmax.f32 %v2444, 0.0
    %v2461 = vpack.c.bf16 %v2446, %v2445
    %v2462 = vpack.c.bf16 %v2448, %v2447
    %v2463 = vpack.c.bf16 %v2450, %v2449
    %v2464 = vpack.c.bf16 %v2452, %v2451
    %v2465 = vpack.c.bf16 %v2454, %v2453
    %v2466 = vpack.c.bf16 %v2456, %v2455
    %v2467 = vpack.c.bf16 %v2458, %v2457
    %v2468 = vpack.c.bf16 %v2460, %v2459
    %v2469 = vld [vmem:[%s4] sm:$0xff]
    %v2470 = vld [vmem:[%s4 + $0x8] sm:$0xff]
    %v2471 = vld [vmem:[%s4 + $0x10] sm:$0xff]
    %v2472 = vld [vmem:[%s4 + $0x18] sm:$0xff]
    %v2473 = vld [vmem:[%s4 + $0x20] sm:$0xff]
    %v2474 = vld [vmem:[%s4 + $0x28] sm:$0xff]
    %v2475 = vld [vmem:[%s4 + $0x30] sm:$0xff]
    %v2476 = vld [vmem:[%s4 + $0x38] sm:$0xff]
    %v2477 = vld [vmem:[%s4 + $0x40] sm:$0xff]
    %v2478 = vld [vmem:[%s4 + $0x48] sm:$0xff]
    %v2479 = vld [vmem:[%s4 + $0x50] sm:$0xff]
    %v2480 = vld [vmem:[%s4 + $0x58] sm:$0xff]
    %v2481 = vld [vmem:[%s4 + $0x60] sm:$0xff]
    %v2482 = vld [vmem:[%s4 + $0x68] sm:$0xff]
    %v2483 = vld [vmem:[%s4 + $0x70] sm:$0xff]
    %v2484 = vld [vmem:[%s4 + $0x78] sm:$0xff]
    %v2501 = vunpack.c.l.b16 %v2469
    %v2502 = vunpack.c.h.b16 %v2469
    %v2503 = vunpack.c.l.b16 %v2470
    %v2504 = vunpack.c.h.b16 %v2470
    %v2505 = vunpack.c.l.b16 %v2471
    %v2506 = vunpack.c.h.b16 %v2471
    %v2507 = vunpack.c.l.b16 %v2472
    %v2508 = vunpack.c.h.b16 %v2472
    %v2509 = vunpack.c.l.b16 %v2473
    %v2510 = vunpack.c.h.b16 %v2473
    %v2511 = vunpack.c.l.b16 %v2474
    %v2512 = vunpack.c.h.b16 %v2474
    %v2513 = vunpack.c.l.b16 %v2475
    %v2514 = vunpack.c.h.b16 %v2475
    %v2515 = vunpack.c.l.b16 %v2476
    %v2516 = vunpack.c.h.b16 %v2476
    %v2517 = vunpack.c.l.b16 %v2477
    %v2518 = vunpack.c.h.b16 %v2477
    %v2519 = vunpack.c.l.b16 %v2478
    %v2520 = vunpack.c.h.b16 %v2478
    %v2521 = vunpack.c.l.b16 %v2479
    %v2522 = vunpack.c.h.b16 %v2479
    %v2523 = vunpack.c.l.b16 %v2480
    %v2524 = vunpack.c.h.b16 %v2480
    %v2525 = vunpack.c.l.b16 %v2481
    %v2526 = vunpack.c.h.b16 %v2481
    %v2527 = vunpack.c.l.b16 %v2482
    %v2528 = vunpack.c.h.b16 %v2482
    %v2529 = vunpack.c.l.b16 %v2483
    %v2530 = vunpack.c.h.b16 %v2483
    %v2531 = vunpack.c.l.b16 %v2484
    %v2532 = vunpack.c.h.b16 %v2484
    %v2533 = vpack.c.b16 %v2503, %v2501
    %v2534 = vpack.c.b16 %v2504, %v2502
    %v2535 = vpack.c.b16 %v2507, %v2505
    %v2536 = vpack.c.b16 %v2508, %v2506
    %v2537 = vpack.c.b16 %v2511, %v2509
    %v2538 = vpack.c.b16 %v2512, %v2510
    %v2539 = vpack.c.b16 %v2515, %v2513
    %v2540 = vpack.c.b16 %v2516, %v2514
    %v2541 = vpack.c.b16 %v2519, %v2517
    %v2542 = vpack.c.b16 %v2520, %v2518
    %v2543 = vpack.c.b16 %v2523, %v2521
    %v2544 = vpack.c.b16 %v2524, %v2522
    %v2545 = vpack.c.b16 %v2527, %v2525
    %v2546 = vpack.c.b16 %v2528, %v2526
    %v2547 = vpack.c.b16 %v2531, %v2529
    %v2548 = vpack.c.b16 %v2532, %v2530
    %2565 = vmatpush.bf16.msra.mxu0 %v2547
    %2566 = vmatpush.bf16.msra.mxu0 %v2545
    %2567 = vmatpush.bf16.msra.mxu0 %v2543
    %2568 = vmatpush.bf16.msra.mxu0 %v2541
    %2569 = vmatpush.bf16.msra.mxu0 %v2539
    %2570 = vmatpush.bf16.msra.mxu0 %v2537
    %2571 = vmatpush.bf16.msra.mxu0 %v2535
    %2572 = vmatpush.bf16.msra.mxu0 %v2533
    %2573 = vmatmul.bf16.gmra.mxu0 %v2461
    %v2574 = vpop.f32.mrf.mxu0
    %v2575 = vadd.f32 0.0, %v2574
    %v2576 = vpop.f32.mrf.mxu0
    %v2577 = vadd.f32 0.0, %v2576
    %2578 = vmatmul.bf16.gmra.mxu0 %v2462
    %v2579 = vpop.f32.mrf.mxu0
    %v2580 = vadd.f32 0.0, %v2579
    %v2581 = vpop.f32.mrf.mxu0
    %v2582 = vadd.f32 0.0, %v2581
    %2583 = vmatmul.bf16.gmra.mxu0 %v2463
    %v2584 = vpop.f32.mrf.mxu0
    %v2585 = vadd.f32 0.0, %v2584
    %v2586 = vpop.f32.mrf.mxu0
    %v2587 = vadd.f32 0.0, %v2586
    %2588 = vmatmul.bf16.gmra.mxu0 %v2464
    %v2589 = vpop.f32.mrf.mxu0
    %v2590 = vadd.f32 0.0, %v2589
    %v2591 = vpop.f32.mrf.mxu0
    %v2592 = vadd.f32 0.0, %v2591
    %2593 = vmatmul.bf16.gmra.mxu0 %v2465
    %v2594 = vpop.f32.mrf.mxu0
    %v2595 = vadd.f32 0.0, %v2594
    %v2596 = vpop.f32.mrf.mxu0
    %v2597 = vadd.f32 0.0, %v2596
    %2598 = vmatmul.bf16.gmra.mxu0 %v2466
    %v2599 = vpop.f32.mrf.mxu0
    %v2600 = vadd.f32 0.0, %v2599
    %v2601 = vpop.f32.mrf.mxu0
    %v2602 = vadd.f32 0.0, %v2601
    %2603 = vmatmul.bf16.gmra.mxu0 %v2467
    %v2604 = vpop.f32.mrf.mxu0
    %v2605 = vadd.f32 0.0, %v2604
    %v2606 = vpop.f32.mrf.mxu0
    %v2607 = vadd.f32 0.0, %v2606
    %2608 = vmatmul.bf16.gmra.mxu0 %v2468
    %v2609 = vpop.f32.mrf.mxu0
    %v2610 = vadd.f32 0.0, %v2609
    %v2611 = vpop.f32.mrf.mxu0
    %v2612 = vadd.f32 0.0, %v2611
    %2613 = vdwg.mxu0
    %2614 = vmatpush.bf16.msra.mxu0 %v2548
    %2615 = vmatpush.bf16.msra.mxu0 %v2546
    %2616 = vmatpush.bf16.msra.mxu0 %v2544
    %2617 = vmatpush.bf16.msra.mxu0 %v2542
    %2618 = vmatpush.bf16.msra.mxu0 %v2540
    %2619 = vmatpush.bf16.msra.mxu0 %v2538
    %2620 = vmatpush.bf16.msra.mxu0 %v2536
    %2621 = vmatpush.bf16.msra.mxu0 %v2534
    %2622 = vmatmul.bf16.gmra.mxu0 %v2461
    %v2623 = vpop.f32.mrf.mxu0
    %v2624 = vadd.f32 0.0, %v2623
    %v2625 = vpop.f32.mrf.mxu0
    %v2626 = vadd.f32 0.0, %v2625
    %2627 = vmatmul.bf16.gmra.mxu0 %v2462
    %v2628 = vpop.f32.mrf.mxu0
    %v2629 = vadd.f32 0.0, %v2628
    %v2630 = vpop.f32.mrf.mxu0
    %v2631 = vadd.f32 0.0, %v2630
    %2632 = vmatmul.bf16.gmra.mxu0 %v2463
    %v2633 = vpop.f32.mrf.mxu0
    %v2634 = vadd.f32 0.0, %v2633
    %v2635 = vpop.f32.mrf.mxu0
    %v2636 = vadd.f32 0.0, %v2635
    %2637 = vmatmul.bf16.gmra.mxu0 %v2464
    %v2638 = vpop.f32.mrf.mxu0
    %v2639 = vadd.f32 0.0, %v2638
    %v2640 = vpop.f32.mrf.mxu0
    %v2641 = vadd.f32 0.0, %v2640
    %2642 = vmatmul.bf16.gmra.mxu0 %v2465
    %v2643 = vpop.f32.mrf.mxu0
    %v2644 = vadd.f32 0.0, %v2643
    %v2645 = vpop.f32.mrf.mxu0
    %v2646 = vadd.f32 0.0, %v2645
    %2647 = vmatmul.bf16.gmra.mxu0 %v2466
    %v2648 = vpop.f32.mrf.mxu0
    %v2649 = vadd.f32 0.0, %v2648
    %v2650 = vpop.f32.mrf.mxu0
    %v2651 = vadd.f32 0.0, %v2650
    %2652 = vmatmul.bf16.gmra.mxu0 %v2467
    %v2653 = vpop.f32.mrf.mxu0
    %v2654 = vadd.f32 0.0, %v2653
    %v2655 = vpop.f32.mrf.mxu0
    %v2656 = vadd.f32 0.0, %v2655
    %2657 = vmatmul.bf16.gmra.mxu0 %v2468
    %v2658 = vpop.f32.mrf.mxu0
    %v2659 = vadd.f32 0.0, %v2658
    %v2660 = vpop.f32.mrf.mxu0
    %v2661 = vadd.f32 0.0, %v2660
    %2662 = vdwg.mxu0
    %v2663 = vadd.f32 %v2575, %v2577
    %v2664 = vadd.f32 %v2663, %v2580
    %v2665 = vadd.f32 %v2664, %v2582
    %v2666 = vadd.f32 %v2665, %v2585
    %v2667 = vadd.f32 %v2666, %v2587
    %v2668 = vadd.f32 %v2667, %v2590
    %v2669 = vadd.f32 %v2668, %v2592
    %v2670 = vadd.f32 %v2669, %v2595
    %v2671 = vadd.f32 %v2670, %v2597
    %v2672 = vadd.f32 %v2671, %v2600
    %v2673 = vadd.f32 %v2672, %v2602
    %v2674 = vadd.f32 %v2673, %v2605
    %v2675 = vadd.f32 %v2674, %v2607
    %v2676 = vadd.f32 %v2675, %v2610
    %v2677 = vadd.f32 %v2676, %v2612
    %v2678 = vrot.slane %v2677, 4
    %v2679 = vadd.f32 %v2677, %v2678
    %v2680 = vrot.slane %v2679, 2
    %v2681 = vadd.f32 %v2679, %v2680
    %v2682 = vrot.slane %v2681, 1
    %v2683 = vadd.f32 %v2681, %v2682
    %v2684 = vadd.f32 %v2624, %v2626
    %v2685 = vadd.f32 %v2684, %v2629
    %v2686 = vadd.f32 %v2685, %v2631
    %v2687 = vadd.f32 %v2686, %v2634
    %v2688 = vadd.f32 %v2687, %v2636
    %v2689 = vadd.f32 %v2688, %v2639
    %v2690 = vadd.f32 %v2689, %v2641
    %v2691 = vadd.f32 %v2690, %v2644
    %v2692 = vadd.f32 %v2691, %v2646
    %v2693 = vadd.f32 %v2692, %v2649
    %v2694 = vadd.f32 %v2693, %v2651
    %v2695 = vadd.f32 %v2694, %v2654
    %v2696 = vadd.f32 %v2695, %v2656
    %v2697 = vadd.f32 %v2696, %v2659
    %v2698 = vadd.f32 %v2697, %v2661
    %v2699 = vrot.slane %v2698, 4
    %v2700 = vadd.f32 %v2698, %v2699
    %v2701 = vrot.slane %v2700, 2
    %v2702 = vadd.f32 %v2700, %v2701
    %v2703 = vrot.slane %v2702, 1
    %v2704 = vadd.f32 %v2702, %v2703
    %v2705 = vmul.f32 %v2575, %v2575
    %v2706 = vmul.f32 %v2624, %v2624
    %v2707 = vmul.f32 %v2577, %v2577
    %v2708 = vmul.f32 %v2626, %v2626
    %v2709 = vmul.f32 %v2580, %v2580
    %v2710 = vmul.f32 %v2629, %v2629
    %v2711 = vmul.f32 %v2582, %v2582
    %v2712 = vmul.f32 %v2631, %v2631
    %v2713 = vmul.f32 %v2585, %v2585
    %v2714 = vmul.f32 %v2634, %v2634
    %v2715 = vmul.f32 %v2587, %v2587
    %v2716 = vmul.f32 %v2636, %v2636
    %v2717 = vmul.f32 %v2590, %v2590
    %v2718 = vmul.f32 %v2639, %v2639
    %v2719 = vmul.f32 %v2592, %v2592
    %v2720 = vmul.f32 %v2641, %v2641
    %v2721 = vmul.f32 %v2595, %v2595
    %v2722 = vmul.f32 %v2644, %v2644
    %v2723 = vmul.f32 %v2597, %v2597
    %v2724 = vmul.f32 %v2646, %v2646
    %v2725 = vmul.f32 %v2600, %v2600
    %v2726 = vmul.f32 %v2649, %v2649
    %v2727 = vmul.f32 %v2602, %v2602
    %v2728 = vmul.f32 %v2651, %v2651
    %v2729 = vmul.f32 %v2605, %v2605
    %v2730 = vmul.f32 %v2654, %v2654
    %v2731 = vmul.f32 %v2607, %v2607
    %v2732 = vmul.f32 %v2656, %v2656
    %v2733 = vmul.f32 %v2610, %v2610
    %v2734 = vmul.f32 %v2659, %v2659
    %v2735 = vmul.f32 %v2612, %v2612
    %v2736 = vmul.f32 %v2661, %v2661
    %v2737 = vadd.f32 %v2705, %v2707
    %v2738 = vadd.f32 %v2737, %v2709
    %v2739 = vadd.f32 %v2738, %v2711
    %v2740 = vadd.f32 %v2739, %v2713
    %v2741 = vadd.f32 %v2740, %v2715
    %v2742 = vadd.f32 %v2741, %v2717
    %v2743 = vadd.f32 %v2742, %v2719
    %v2744 = vadd.f32 %v2743, %v2721
    %v2745 = vadd.f32 %v2744, %v2723
    %v2746 = vadd.f32 %v2745, %v2725
    %v2747 = vadd.f32 %v2746, %v2727
    %v2748 = vadd.f32 %v2747, %v2729
    %v2749 = vadd.f32 %v2748, %v2731
    %v2750 = vadd.f32 %v2749, %v2733
    %v2751 = vadd.f32 %v2750, %v2735
    %v2752 = vrot.slane %v2751, 4
    %v2753 = vadd.f32 %v2751, %v2752
    %v2754 = vrot.slane %v2753, 2
    %v2755 = vadd.f32 %v2753, %v2754
    %v2756 = vrot.slane %v2755, 1
    %v2757 = vadd.f32 %v2755, %v2756
    %v2758 = vadd.f32 %v2706, %v2708
    %v2759 = vadd.f32 %v2758, %v2710
    %v2760 = vadd.f32 %v2759, %v2712
    %v2761 = vadd.f32 %v2760, %v2714
    %v2762 = vadd.f32 %v2761, %v2716
    %v2763 = vadd.f32 %v2762, %v2718
    %v2764 = vadd.f32 %v2763, %v2720
    %v2765 = vadd.f32 %v2764, %v2722
    %v2766 = vadd.f32 %v2765, %v2724
    %v2767 = vadd.f32 %v2766, %v2726
    %v2768 = vadd.f32 %v2767, %v2728
    %v2769 = vadd.f32 %v2768, %v2730
    %v2770 = vadd.f32 %v2769, %v2732
    %v2771 = vadd.f32 %v2770, %v2734
    %v2772 = vadd.f32 %v2771, %v2736
    %v2773 = vrot.slane %v2772, 4
    %v2774 = vadd.f32 %v2772, %v2773
    %v2775 = vrot.slane %v2774, 2
    %v2776 = vadd.f32 %v2774, %v2775
    %v2777 = vrot.slane %v2776, 1
    %v2778 = vadd.f32 %v2776, %v2777
    %v2779 = vmul.f32 %v2683, 0.0078125
    %v2780 = vmul.f32 %v2704, 0.0078125
    %v2781 = vmul.f32 %v2757, 0.0078125
    %v2782 = vmul.f32 %v2778, 0.0078125
    %v2783 = vmul.f32 %v2779, %v2779
    %v2784 = vmul.f32 %v2780, %v2780
    %v2785 = vsub.f32 %v2781, %v2783
    %v2786 = vsub.f32 %v2782, %v2784
    %v2787 = vadd.f32 %v2785, 1e-05
    %v2788 = vadd.f32 %v2786, 1e-05
    %v2789 = vrsqrt.pop %v2787
    %v2790 = vmul.f32 %v2789, %v2787
    %v2791 = vmul.f32 %v2790, %v2789
    %v2792 = vmul.f32 0.5, %v2791
    %v2793 = vsub.f32 1.5, %v2792
    %v2794 = vmul.f32 %v2789, %v2793
    %vm2795 = vweird.f32 %v2787
    %vm2796 = vweird.f32 %v2789
    %vm2797 = vmor %vm2795, %vm2796
    %v2798 = vsel %vm2797, %v2789, %v2794
    %v2799 = vrsqrt.pop %v2788
    %v2800 = vmul.f32 %v2799, %v2788
    %v2801 = vmul.f32 %v2800, %v2799
    %v2802 = vmul.f32 0.5, %v2801
    %v2803 = vsub.f32 1.5, %v2802
    %v2804 = vmul.f32 %v2799, %v2803
    %vm2805 = vweird.f32 %v2788
    %vm2806 = vweird.f32 %v2799
    %vm2807 = vmor %vm2805, %vm2806
    %v2808 = vsel %vm2807, %v2799, %v2804
    %v2810 = vperm.slane %v33, 0
    %v2811 = vperm.slane %v33, 1
    %v2814 = vmul.f32 %v2798, %v2810
    %v2815 = vmul.f32 %v2808, %v2811
    %v2816 = vmul.f32 %v2779, %v2814
    %v2817 = vmul.f32 %v2780, %v2815
    %v2820 = vrot.slane %v2817, 7
    %v2821 = vsel %vm1908, %v2816, %v2820
    %v2823 = vsub.f32 %v35, %v2821
    %v2824 = vperm.slane %v2814, 0
    %v2825 = vperm.slane %v2815, 0
    %v2826 = vmul.f32 %v2575, %v2824
    %v2827 = vmul.f32 %v2624, %v2825
    %v2828 = vmul.f32 %v2577, %v2824
    %v2829 = vmul.f32 %v2626, %v2825
    %v2830 = vmul.f32 %v2580, %v2824
    %v2831 = vmul.f32 %v2629, %v2825
    %v2832 = vmul.f32 %v2582, %v2824
    %v2833 = vmul.f32 %v2631, %v2825
    %v2834 = vmul.f32 %v2585, %v2824
    %v2835 = vmul.f32 %v2634, %v2825
    %v2836 = vmul.f32 %v2587, %v2824
    %v2837 = vmul.f32 %v2636, %v2825
    %v2838 = vmul.f32 %v2590, %v2824
    %v2839 = vmul.f32 %v2639, %v2825
    %v2840 = vmul.f32 %v2592, %v2824
    %v2841 = vmul.f32 %v2641, %v2825
    %v2842 = vmul.f32 %v2595, %v2824
    %v2843 = vmul.f32 %v2644, %v2825
    %v2844 = vmul.f32 %v2597, %v2824
    %v2845 = vmul.f32 %v2646, %v2825
    %v2846 = vmul.f32 %v2600, %v2824
    %v2847 = vmul.f32 %v2649, %v2825
    %v2848 = vmul.f32 %v2602, %v2824
    %v2849 = vmul.f32 %v2651, %v2825
    %v2850 = vmul.f32 %v2605, %v2824
    %v2851 = vmul.f32 %v2654, %v2825
    %v2852 = vmul.f32 %v2607, %v2824
    %v2853 = vmul.f32 %v2656, %v2825
    %v2854 = vmul.f32 %v2610, %v2824
    %v2855 = vmul.f32 %v2659, %v2825
    %v2856 = vmul.f32 %v2612, %v2824
    %v2857 = vmul.f32 %v2661, %v2825
    %v2859 = vperm.slane %v2823, 0
    %v2860 = vperm.slane %v2823, 1
    %v2863 = vadd.f32 %v2826, %v2859
    %v2864 = vadd.f32 %v2827, %v2860
    %v2865 = vadd.f32 %v2828, %v2859
    %v2866 = vadd.f32 %v2829, %v2860
    %v2867 = vadd.f32 %v2830, %v2859
    %v2868 = vadd.f32 %v2831, %v2860
    %v2869 = vadd.f32 %v2832, %v2859
    %v2870 = vadd.f32 %v2833, %v2860
    %v2871 = vadd.f32 %v2834, %v2859
    %v2872 = vadd.f32 %v2835, %v2860
    %v2873 = vadd.f32 %v2836, %v2859
    %v2874 = vadd.f32 %v2837, %v2860
    %v2875 = vadd.f32 %v2838, %v2859
    %v2876 = vadd.f32 %v2839, %v2860
    %v2877 = vadd.f32 %v2840, %v2859
    %v2878 = vadd.f32 %v2841, %v2860
    %v2879 = vadd.f32 %v2842, %v2859
    %v2880 = vadd.f32 %v2843, %v2860
    %v2881 = vadd.f32 %v2844, %v2859
    %v2882 = vadd.f32 %v2845, %v2860
    %v2883 = vadd.f32 %v2846, %v2859
    %v2884 = vadd.f32 %v2847, %v2860
    %v2885 = vadd.f32 %v2848, %v2859
    %v2886 = vadd.f32 %v2849, %v2860
    %v2887 = vadd.f32 %v2850, %v2859
    %v2888 = vadd.f32 %v2851, %v2860
    %v2889 = vadd.f32 %v2852, %v2859
    %v2890 = vadd.f32 %v2853, %v2860
    %v2891 = vadd.f32 %v2854, %v2859
    %v2892 = vadd.f32 %v2855, %v2860
    %v2893 = vadd.f32 %v2856, %v2859
    %v2894 = vadd.f32 %v2857, %v2860
    %v2895 = vmax.f32 %v2863, 0.0
    %v2896 = vmax.f32 %v2864, 0.0
    %v2897 = vmax.f32 %v2865, 0.0
    %v2898 = vmax.f32 %v2866, 0.0
    %v2899 = vmax.f32 %v2867, 0.0
    %v2900 = vmax.f32 %v2868, 0.0
    %v2901 = vmax.f32 %v2869, 0.0
    %v2902 = vmax.f32 %v2870, 0.0
    %v2903 = vmax.f32 %v2871, 0.0
    %v2904 = vmax.f32 %v2872, 0.0
    %v2905 = vmax.f32 %v2873, 0.0
    %v2906 = vmax.f32 %v2874, 0.0
    %v2907 = vmax.f32 %v2875, 0.0
    %v2908 = vmax.f32 %v2876, 0.0
    %v2909 = vmax.f32 %v2877, 0.0
    %v2910 = vmax.f32 %v2878, 0.0
    %v2911 = vmax.f32 %v2879, 0.0
    %v2912 = vmax.f32 %v2880, 0.0
    %v2913 = vmax.f32 %v2881, 0.0
    %v2914 = vmax.f32 %v2882, 0.0
    %v2915 = vmax.f32 %v2883, 0.0
    %v2916 = vmax.f32 %v2884, 0.0
    %v2917 = vmax.f32 %v2885, 0.0
    %v2918 = vmax.f32 %v2886, 0.0
    %v2919 = vmax.f32 %v2887, 0.0
    %v2920 = vmax.f32 %v2888, 0.0
    %v2921 = vmax.f32 %v2889, 0.0
    %v2922 = vmax.f32 %v2890, 0.0
    %v2923 = vmax.f32 %v2891, 0.0
    %v2924 = vmax.f32 %v2892, 0.0
    %v2925 = vmax.f32 %v2893, 0.0
    %v2926 = vmax.f32 %v2894, 0.0
    %v2927 = vpack.c.bf16 %v2897, %v2895
    %v2928 = vpack.c.bf16 %v2898, %v2896
    %v2929 = vpack.c.bf16 %v2901, %v2899
    %v2930 = vpack.c.bf16 %v2902, %v2900
    %v2931 = vpack.c.bf16 %v2905, %v2903
    %v2932 = vpack.c.bf16 %v2906, %v2904
    %v2933 = vpack.c.bf16 %v2909, %v2907
    %v2934 = vpack.c.bf16 %v2910, %v2908
    %v2935 = vpack.c.bf16 %v2913, %v2911
    %v2936 = vpack.c.bf16 %v2914, %v2912
    %v2937 = vpack.c.bf16 %v2917, %v2915
    %v2938 = vpack.c.bf16 %v2918, %v2916
    %v2939 = vpack.c.bf16 %v2921, %v2919
    %v2940 = vpack.c.bf16 %v2922, %v2920
    %v2941 = vpack.c.bf16 %v2925, %v2923
    %v2942 = vpack.c.bf16 %v2926, %v2924
    %v2943 = vld [vmem:[%s5] sm:$0xff]
    %v2944 = vld [vmem:[%s5 + $0x8] sm:$0xff]
    %v2945 = vld [vmem:[%s5 + $0x10] sm:$0xff]
    %v2946 = vld [vmem:[%s5 + $0x18] sm:$0xf]
    %v2947 = vld [vmem:[%s5 + $0x1c] sm:$0xff]
    %v2948 = vld [vmem:[%s5 + $0x24] sm:$0xff]
    %v2949 = vld [vmem:[%s5 + $0x2c] sm:$0xff]
    %v2950 = vld [vmem:[%s5 + $0x34] sm:$0xf]
    %v2951 = vld [vmem:[%s5 + $0x38] sm:$0xff]
    %v2952 = vld [vmem:[%s5 + $0x40] sm:$0xff]
    %v2953 = vld [vmem:[%s5 + $0x48] sm:$0xff]
    %v2954 = vld [vmem:[%s5 + $0x50] sm:$0xf]
    %v2955 = vld [vmem:[%s5 + $0x54] sm:$0xff]
    %v2956 = vld [vmem:[%s5 + $0x5c] sm:$0xff]
    %v2957 = vld [vmem:[%s5 + $0x64] sm:$0xff]
    %v2958 = vld [vmem:[%s5 + $0x6c] sm:$0xf]
    %v2959 = vld [vmem:[%s5 + $0x70] sm:$0xff]
    %v2960 = vld [vmem:[%s5 + $0x78] sm:$0xff]
    %v2961 = vld [vmem:[%s5 + $0x80] sm:$0xff]
    %v2962 = vld [vmem:[%s5 + $0x88] sm:$0xf]
    %v2963 = vld [vmem:[%s5 + $0x8c] sm:$0xff]
    %v2964 = vld [vmem:[%s5 + $0x94] sm:$0xff]
    %v2965 = vld [vmem:[%s5 + $0x9c] sm:$0xff]
    %v2966 = vld [vmem:[%s5 + $0xa4] sm:$0xf]
    %v2967 = vld [vmem:[%s5 + $0xa8] sm:$0xff]
    %v2968 = vld [vmem:[%s5 + $0xb0] sm:$0xff]
    %v2969 = vld [vmem:[%s5 + $0xb8] sm:$0xff]
    %v2970 = vld [vmem:[%s5 + $0xc0] sm:$0xf]
    %v2971 = vld [vmem:[%s5 + $0xc4] sm:$0xff]
    %v2972 = vld [vmem:[%s5 + $0xcc] sm:$0xff]
    %v2973 = vld [vmem:[%s5 + $0xd4] sm:$0xff]
    %v2974 = vld [vmem:[%s5 + $0xdc] sm:$0xf]
    %v2975 = vld [vmem:[%s5 + $0xe0] sm:$0xff]
    %v2976 = vld [vmem:[%s5 + $0xe8] sm:$0xff]
    %v2977 = vld [vmem:[%s5 + $0xf0] sm:$0xff]
    %v2978 = vld [vmem:[%s5 + $0xf8] sm:$0xf]
    %v2979 = vld [vmem:[%s5 + $0xfc] sm:$0xff]
    %v2980 = vld [vmem:[%s5 + $0x104] sm:$0xff]
    %v2981 = vld [vmem:[%s5 + $0x10c] sm:$0xff]
    %v2982 = vld [vmem:[%s5 + $0x114] sm:$0xf]
    %v2983 = vld [vmem:[%s5 + $0x118] sm:$0xff]
    %v2984 = vld [vmem:[%s5 + $0x120] sm:$0xff]
    %v2985 = vld [vmem:[%s5 + $0x128] sm:$0xff]
    %v2986 = vld [vmem:[%s5 + $0x130] sm:$0xf]
    %v2987 = vld [vmem:[%s5 + $0x134] sm:$0xff]
    %v2988 = vld [vmem:[%s5 + $0x13c] sm:$0xff]
    %v2989 = vld [vmem:[%s5 + $0x144] sm:$0xff]
    %v2990 = vld [vmem:[%s5 + $0x14c] sm:$0xf]
    %v2991 = vld [vmem:[%s5 + $0x150] sm:$0xff]
    %v2992 = vld [vmem:[%s5 + $0x158] sm:$0xff]
    %v2993 = vld [vmem:[%s5 + $0x160] sm:$0xff]
    %v2994 = vld [vmem:[%s5 + $0x168] sm:$0xf]
    %v2995 = vld [vmem:[%s5 + $0x16c] sm:$0xff]
    %v2996 = vld [vmem:[%s5 + $0x174] sm:$0xff]
    %v2997 = vld [vmem:[%s5 + $0x17c] sm:$0xff]
    %v2998 = vld [vmem:[%s5 + $0x184] sm:$0xf]
    %v2999 = vld [vmem:[%s5 + $0x188] sm:$0xff]
    %v3000 = vld [vmem:[%s5 + $0x190] sm:$0xff]
    %v3001 = vld [vmem:[%s5 + $0x198] sm:$0xff]
    %v3002 = vld [vmem:[%s5 + $0x1a0] sm:$0xf]
    %v3003 = vld [vmem:[%s5 + $0x1a4] sm:$0xff]
    %v3004 = vld [vmem:[%s5 + $0x1ac] sm:$0xff]
    %v3005 = vld [vmem:[%s5 + $0x1b4] sm:$0xff]
    %v3006 = vld [vmem:[%s5 + $0x1bc] sm:$0xf]
    %v3007 = vld [vmem:[%s5 + $0x1c0] sm:$0xff]
    %v3008 = vld [vmem:[%s5 + $0x1c8] sm:$0xff]
    %v3009 = vld [vmem:[%s5 + $0x1d0] sm:$0xff]
    %v3010 = vld [vmem:[%s5 + $0x1d8] sm:$0xf]
    %v3011 = vld [vmem:[%s5 + $0x1dc] sm:$0xff]
    %v3012 = vld [vmem:[%s5 + $0x1e4] sm:$0xff]
    %v3013 = vld [vmem:[%s5 + $0x1ec] sm:$0xff]
    %v3014 = vld [vmem:[%s5 + $0x1f4] sm:$0xf]
    %v3015 = vld [vmem:[%s5 + $0x1f8] sm:$0xff]
    %v3016 = vld [vmem:[%s5 + $0x200] sm:$0xff]
    %v3017 = vld [vmem:[%s5 + $0x208] sm:$0xff]
    %v3018 = vld [vmem:[%s5 + $0x210] sm:$0xf]
    %v3019 = vld [vmem:[%s5 + $0x214] sm:$0xff]
    %v3020 = vld [vmem:[%s5 + $0x21c] sm:$0xff]
    %v3021 = vld [vmem:[%s5 + $0x224] sm:$0xff]
    %v3022 = vld [vmem:[%s5 + $0x22c] sm:$0xf]
    %v3023 = vld [vmem:[%s5 + $0x230] sm:$0xff]
    %v3024 = vld [vmem:[%s5 + $0x238] sm:$0xff]
    %v3025 = vld [vmem:[%s5 + $0x240] sm:$0xff]
    %v3026 = vld [vmem:[%s5 + $0x248] sm:$0xf]
    %v3027 = vld [vmem:[%s5 + $0x24c] sm:$0xff]
    %v3028 = vld [vmem:[%s5 + $0x254] sm:$0xff]
    %v3029 = vld [vmem:[%s5 + $0x25c] sm:$0xff]
    %v3030 = vld [vmem:[%s5 + $0x264] sm:$0xf]
    %v3031 = vld [vmem:[%s5 + $0x268] sm:$0xff]
    %v3032 = vld [vmem:[%s5 + $0x270] sm:$0xff]
    %v3033 = vld [vmem:[%s5 + $0x278] sm:$0xff]
    %v3034 = vld [vmem:[%s5 + $0x280] sm:$0xf]
    %v3035 = vld [vmem:[%s5 + $0x284] sm:$0xff]
    %v3036 = vld [vmem:[%s5 + $0x28c] sm:$0xff]
    %v3037 = vld [vmem:[%s5 + $0x294] sm:$0xff]
    %v3038 = vld [vmem:[%s5 + $0x29c] sm:$0xf]
    %v3039 = vld [vmem:[%s5 + $0x2a0] sm:$0xff]
    %v3040 = vld [vmem:[%s5 + $0x2a8] sm:$0xff]
    %v3041 = vld [vmem:[%s5 + $0x2b0] sm:$0xff]
    %v3042 = vld [vmem:[%s5 + $0x2b8] sm:$0xf]
    %v3043 = vld [vmem:[%s5 + $0x2bc] sm:$0xff]
    %v3044 = vld [vmem:[%s5 + $0x2c4] sm:$0xff]
    %v3045 = vld [vmem:[%s5 + $0x2cc] sm:$0xff]
    %v3046 = vld [vmem:[%s5 + $0x2d4] sm:$0xf]
    %v3047 = vld [vmem:[%s5 + $0x2d8] sm:$0xff]
    %v3048 = vld [vmem:[%s5 + $0x2e0] sm:$0xff]
    %v3049 = vld [vmem:[%s5 + $0x2e8] sm:$0xff]
    %v3050 = vld [vmem:[%s5 + $0x2f0] sm:$0xf]
    %v3051 = vld [vmem:[%s5 + $0x2f4] sm:$0xff]
    %v3052 = vld [vmem:[%s5 + $0x2fc] sm:$0xff]
    %v3053 = vld [vmem:[%s5 + $0x304] sm:$0xff]
    %v3054 = vld [vmem:[%s5 + $0x30c] sm:$0xf]
    %v3055 = vld [vmem:[%s5 + $0x310] sm:$0xff]
    %v3056 = vld [vmem:[%s5 + $0x318] sm:$0xff]
    %v3057 = vld [vmem:[%s5 + $0x320] sm:$0xff]
    %v3058 = vld [vmem:[%s5 + $0x328] sm:$0xf]
    %v3059 = vld [vmem:[%s5 + $0x32c] sm:$0xff]
    %v3060 = vld [vmem:[%s5 + $0x334] sm:$0xff]
    %v3061 = vld [vmem:[%s5 + $0x33c] sm:$0xff]
    %v3062 = vld [vmem:[%s5 + $0x344] sm:$0xf]
    %v3063 = vld [vmem:[%s5 + $0x348] sm:$0xff]
    %v3064 = vld [vmem:[%s5 + $0x350] sm:$0xff]
    %v3065 = vld [vmem:[%s5 + $0x358] sm:$0xff]
    %v3066 = vld [vmem:[%s5 + $0x360] sm:$0xf]
    %v3067 = vld [vmem:[%s5 + $0x364] sm:$0xff]
    %v3068 = vld [vmem:[%s5 + $0x36c] sm:$0xff]
    %v3069 = vld [vmem:[%s5 + $0x374] sm:$0xff]
    %v3070 = vld [vmem:[%s5 + $0x37c] sm:$0xf]
    %v3072 = vperm.slane %v39, 0
    %v3073 = vperm.slane %v39, 1
    %v3074 = vperm.slane %v39, 2
    %v3075 = vperm.slane %v39, 3
    %v3076 = vperm.slane %v39, 4
    %v3077 = vperm.slane %v39, 5
    %v3078 = vperm.slane %v39, 6
    %v3214 = vunpack.c.l.b16 %v2943
    %v3215 = vunpack.c.h.b16 %v2943
    %v3216 = vunpack.c.l.b16 %v2944
    %v3217 = vunpack.c.h.b16 %v2944
    %v3218 = vunpack.c.l.b16 %v2945
    %v3219 = vunpack.c.h.b16 %v2945
    %v3220 = vunpack.c.l.b16 %v2946
    %v3221 = vunpack.c.l.b16 %v2947
    %v3222 = vunpack.c.h.b16 %v2947
    %v3223 = vunpack.c.l.b16 %v2948
    %v3224 = vunpack.c.h.b16 %v2948
    %v3225 = vunpack.c.l.b16 %v2949
    %v3226 = vunpack.c.h.b16 %v2949
    %v3227 = vunpack.c.l.b16 %v2950
    %v3228 = vunpack.c.l.b16 %v2951
    %v3229 = vunpack.c.h.b16 %v2951
    %v3230 = vunpack.c.l.b16 %v2952
    %v3231 = vunpack.c.h.b16 %v2952
    %v3232 = vunpack.c.l.b16 %v2953
    %v3233 = vunpack.c.h.b16 %v2953
    %v3234 = vunpack.c.l.b16 %v2954
    %v3235 = vunpack.c.l.b16 %v2955
    %v3236 = vunpack.c.h.b16 %v2955
    %v3237 = vunpack.c.l.b16 %v2956
    %v3238 = vunpack.c.h.b16 %v2956
    %v3239 = vunpack.c.l.b16 %v2957
    %v3240 = vunpack.c.h.b16 %v2957
    %v3241 = vunpack.c.l.b16 %v2958
    %v3242 = vunpack.c.l.b16 %v2959
    %v3243 = vunpack.c.h.b16 %v2959
    %v3244 = vunpack.c.l.b16 %v2960
    %v3245 = vunpack.c.h.b16 %v2960
    %v3246 = vunpack.c.l.b16 %v2961
    %v3247 = vunpack.c.h.b16 %v2961
    %v3248 = vunpack.c.l.b16 %v2962
    %v3249 = vunpack.c.l.b16 %v2963
    %v3250 = vunpack.c.h.b16 %v2963
    %v3251 = vunpack.c.l.b16 %v2964
    %v3252 = vunpack.c.h.b16 %v2964
    %v3253 = vunpack.c.l.b16 %v2965
    %v3254 = vunpack.c.h.b16 %v2965
    %v3255 = vunpack.c.l.b16 %v2966
    %v3256 = vunpack.c.l.b16 %v2967
    %v3257 = vunpack.c.h.b16 %v2967
    %v3258 = vunpack.c.l.b16 %v2968
    %v3259 = vunpack.c.h.b16 %v2968
    %v3260 = vunpack.c.l.b16 %v2969
    %v3261 = vunpack.c.h.b16 %v2969
    %v3262 = vunpack.c.l.b16 %v2970
    %v3263 = vunpack.c.l.b16 %v2971
    %v3264 = vunpack.c.h.b16 %v2971
    %v3265 = vunpack.c.l.b16 %v2972
    %v3266 = vunpack.c.h.b16 %v2972
    %v3267 = vunpack.c.l.b16 %v2973
    %v3268 = vunpack.c.h.b16 %v2973
    %v3269 = vunpack.c.l.b16 %v2974
    %v3270 = vunpack.c.l.b16 %v2975
    %v3271 = vunpack.c.h.b16 %v2975
    %v3272 = vunpack.c.l.b16 %v2976
    %v3273 = vunpack.c.h.b16 %v2976
    %v3274 = vunpack.c.l.b16 %v2977
    %v3275 = vunpack.c.h.b16 %v2977
    %v3276 = vunpack.c.l.b16 %v2978
    %v3277 = vunpack.c.l.b16 %v2979
    %v3278 = vunpack.c.h.b16 %v2979
    %v3279 = vunpack.c.l.b16 %v2980
    %v3280 = vunpack.c.h.b16 %v2980
    %v3281 = vunpack.c.l.b16 %v2981
    %v3282 = vunpack.c.h.b16 %v2981
    %v3283 = vunpack.c.l.b16 %v2982
    %v3284 = vunpack.c.l.b16 %v2983
    %v3285 = vunpack.c.h.b16 %v2983
    %v3286 = vunpack.c.l.b16 %v2984
    %v3287 = vunpack.c.h.b16 %v2984
    %v3288 = vunpack.c.l.b16 %v2985
    %v3289 = vunpack.c.h.b16 %v2985
    %v3290 = vunpack.c.l.b16 %v2986
    %v3291 = vunpack.c.l.b16 %v2987
    %v3292 = vunpack.c.h.b16 %v2987
    %v3293 = vunpack.c.l.b16 %v2988
    %v3294 = vunpack.c.h.b16 %v2988
    %v3295 = vunpack.c.l.b16 %v2989
    %v3296 = vunpack.c.h.b16 %v2989
    %v3297 = vunpack.c.l.b16 %v2990
    %v3298 = vunpack.c.l.b16 %v2991
    %v3299 = vunpack.c.h.b16 %v2991
    %v3300 = vunpack.c.l.b16 %v2992
    %v3301 = vunpack.c.h.b16 %v2992
    %v3302 = vunpack.c.l.b16 %v2993
    %v3303 = vunpack.c.h.b16 %v2993
    %v3304 = vunpack.c.l.b16 %v2994
    %v3305 = vunpack.c.l.b16 %v2995
    %v3306 = vunpack.c.h.b16 %v2995
    %v3307 = vunpack.c.l.b16 %v2996
    %v3308 = vunpack.c.h.b16 %v2996
    %v3309 = vunpack.c.l.b16 %v2997
    %v3310 = vunpack.c.h.b16 %v2997
    %v3311 = vunpack.c.l.b16 %v2998
    %v3312 = vunpack.c.l.b16 %v2999
    %v3313 = vunpack.c.h.b16 %v2999
    %v3314 = vunpack.c.l.b16 %v3000
    %v3315 = vunpack.c.h.b16 %v3000
    %v3316 = vunpack.c.l.b16 %v3001
    %v3317 = vunpack.c.h.b16 %v3001
    %v3318 = vunpack.c.l.b16 %v3002
    %v3319 = vunpack.c.l.b16 %v3003
    %v3320 = vunpack.c.h.b16 %v3003
    %v3321 = vunpack.c.l.b16 %v3004
    %v3322 = vunpack.c.h.b16 %v3004
    %v3323 = vunpack.c.l.b16 %v3005
    %v3324 = vunpack.c.h.b16 %v3005
    %v3325 = vunpack.c.l.b16 %v3006
    %v3326 = vunpack.c.l.b16 %v3007
    %v3327 = vunpack.c.h.b16 %v3007
    %v3328 = vunpack.c.l.b16 %v3008
    %v3329 = vunpack.c.h.b16 %v3008
    %v3330 = vunpack.c.l.b16 %v3009
    %v3331 = vunpack.c.h.b16 %v3009
    %v3332 = vunpack.c.l.b16 %v3010
    %v3333 = vunpack.c.l.b16 %v3011
    %v3334 = vunpack.c.h.b16 %v3011
    %v3335 = vunpack.c.l.b16 %v3012
    %v3336 = vunpack.c.h.b16 %v3012
    %v3337 = vunpack.c.l.b16 %v3013
    %v3338 = vunpack.c.h.b16 %v3013
    %v3339 = vunpack.c.l.b16 %v3014
    %v3340 = vunpack.c.l.b16 %v3015
    %v3341 = vunpack.c.h.b16 %v3015
    %v3342 = vunpack.c.l.b16 %v3016
    %v3343 = vunpack.c.h.b16 %v3016
    %v3344 = vunpack.c.l.b16 %v3017
    %v3345 = vunpack.c.h.b16 %v3017
    %v3346 = vunpack.c.l.b16 %v3018
    %v3347 = vunpack.c.l.b16 %v3019
    %v3348 = vunpack.c.h.b16 %v3019
    %v3349 = vunpack.c.l.b16 %v3020
    %v3350 = vunpack.c.h.b16 %v3020
    %v3351 = vunpack.c.l.b16 %v3021
    %v3352 = vunpack.c.h.b16 %v3021
    %v3353 = vunpack.c.l.b16 %v3022
    %v3354 = vunpack.c.l.b16 %v3023
    %v3355 = vunpack.c.h.b16 %v3023
    %v3356 = vunpack.c.l.b16 %v3024
    %v3357 = vunpack.c.h.b16 %v3024
    %v3358 = vunpack.c.l.b16 %v3025
    %v3359 = vunpack.c.h.b16 %v3025
    %v3360 = vunpack.c.l.b16 %v3026
    %v3361 = vunpack.c.l.b16 %v3027
    %v3362 = vunpack.c.h.b16 %v3027
    %v3363 = vunpack.c.l.b16 %v3028
    %v3364 = vunpack.c.h.b16 %v3028
    %v3365 = vunpack.c.l.b16 %v3029
    %v3366 = vunpack.c.h.b16 %v3029
    %v3367 = vunpack.c.l.b16 %v3030
    %v3368 = vunpack.c.l.b16 %v3031
    %v3369 = vunpack.c.h.b16 %v3031
    %v3370 = vunpack.c.l.b16 %v3032
    %v3371 = vunpack.c.h.b16 %v3032
    %v3372 = vunpack.c.l.b16 %v3033
    %v3373 = vunpack.c.h.b16 %v3033
    %v3374 = vunpack.c.l.b16 %v3034
    %v3375 = vunpack.c.l.b16 %v3035
    %v3376 = vunpack.c.h.b16 %v3035
    %v3377 = vunpack.c.l.b16 %v3036
    %v3378 = vunpack.c.h.b16 %v3036
    %v3379 = vunpack.c.l.b16 %v3037
    %v3380 = vunpack.c.h.b16 %v3037
    %v3381 = vunpack.c.l.b16 %v3038
    %v3382 = vunpack.c.l.b16 %v3039
    %v3383 = vunpack.c.h.b16 %v3039
    %v3384 = vunpack.c.l.b16 %v3040
    %v3385 = vunpack.c.h.b16 %v3040
    %v3386 = vunpack.c.l.b16 %v3041
    %v3387 = vunpack.c.h.b16 %v3041
    %v3388 = vunpack.c.l.b16 %v3042
    %v3389 = vunpack.c.l.b16 %v3043
    %v3390 = vunpack.c.h.b16 %v3043
    %v3391 = vunpack.c.l.b16 %v3044
    %v3392 = vunpack.c.h.b16 %v3044
    %v3393 = vunpack.c.l.b16 %v3045
    %v3394 = vunpack.c.h.b16 %v3045
    %v3395 = vunpack.c.l.b16 %v3046
    %v3396 = vunpack.c.l.b16 %v3047
    %v3397 = vunpack.c.h.b16 %v3047
    %v3398 = vunpack.c.l.b16 %v3048
    %v3399 = vunpack.c.h.b16 %v3048
    %v3400 = vunpack.c.l.b16 %v3049
    %v3401 = vunpack.c.h.b16 %v3049
    %v3402 = vunpack.c.l.b16 %v3050
    %v3403 = vunpack.c.l.b16 %v3051
    %v3404 = vunpack.c.h.b16 %v3051
    %v3405 = vunpack.c.l.b16 %v3052
    %v3406 = vunpack.c.h.b16 %v3052
    %v3407 = vunpack.c.l.b16 %v3053
    %v3408 = vunpack.c.h.b16 %v3053
    %v3409 = vunpack.c.l.b16 %v3054
    %v3410 = vunpack.c.l.b16 %v3055
    %v3411 = vunpack.c.h.b16 %v3055
    %v3412 = vunpack.c.l.b16 %v3056
    %v3413 = vunpack.c.h.b16 %v3056
    %v3414 = vunpack.c.l.b16 %v3057
    %v3415 = vunpack.c.h.b16 %v3057
    %v3416 = vunpack.c.l.b16 %v3058
    %v3417 = vunpack.c.l.b16 %v3059
    %v3418 = vunpack.c.h.b16 %v3059
    %v3419 = vunpack.c.l.b16 %v3060
    %v3420 = vunpack.c.h.b16 %v3060
    %v3421 = vunpack.c.l.b16 %v3061
    %v3422 = vunpack.c.h.b16 %v3061
    %v3423 = vunpack.c.l.b16 %v3062
    %v3424 = vunpack.c.l.b16 %v3063
    %v3425 = vunpack.c.h.b16 %v3063
    %v3426 = vunpack.c.l.b16 %v3064
    %v3427 = vunpack.c.h.b16 %v3064
    %v3428 = vunpack.c.l.b16 %v3065
    %v3429 = vunpack.c.h.b16 %v3065
    %v3430 = vunpack.c.l.b16 %v3066
    %v3431 = vunpack.c.l.b16 %v3067
    %v3432 = vunpack.c.h.b16 %v3067
    %v3433 = vunpack.c.l.b16 %v3068
    %v3434 = vunpack.c.h.b16 %v3068
    %v3435 = vunpack.c.l.b16 %v3069
    %v3436 = vunpack.c.h.b16 %v3069
    %v3437 = vunpack.c.l.b16 %v3070
    %v3438 = vpack.c.b16 %v3221, %v3214
    %v3439 = vpack.c.b16 %v3222, %v3215
    %v3440 = vpack.c.b16 %v3223, %v3216
    %v3441 = vpack.c.b16 %v3224, %v3217
    %v3442 = vpack.c.b16 %v3225, %v3218
    %v3443 = vpack.c.b16 %v3226, %v3219
    %v3444 = vpack.c.b16 %v3227, %v3220
    %v3445 = vpack.c.b16 %v3235, %v3228
    %v3446 = vpack.c.b16 %v3236, %v3229
    %v3447 = vpack.c.b16 %v3237, %v3230
    %v3448 = vpack.c.b16 %v3238, %v3231
    %v3449 = vpack.c.b16 %v3239, %v3232
    %v3450 = vpack.c.b16 %v3240, %v3233
    %v3451 = vpack.c.b16 %v3241, %v3234
    %v3452 = vpack.c.b16 %v3249, %v3242
    %v3453 = vpack.c.b16 %v3250, %v3243
    %v3454 = vpack.c.b16 %v3251, %v3244
    %v3455 = vpack.c.b16 %v3252, %v3245
    %v3456 = vpack.c.b16 %v3253, %v3246
    %v3457 = vpack.c.b16 %v3254, %v3247
    %v3458 = vpack.c.b16 %v3255, %v3248
    %v3459 = vpack.c.b16 %v3263, %v3256
    %v3460 = vpack.c.b16 %v3264, %v3257
    %v3461 = vpack.c.b16 %v3265, %v3258
    %v3462 = vpack.c.b16 %v3266, %v3259
    %v3463 = vpack.c.b16 %v3267, %v3260
    %v3464 = vpack.c.b16 %v3268, %v3261
    %v3465 = vpack.c.b16 %v3269, %v3262
    %v3466 = vpack.c.b16 %v3277, %v3270
    %v3467 = vpack.c.b16 %v3278, %v3271
    %v3468 = vpack.c.b16 %v3279, %v3272
    %v3469 = vpack.c.b16 %v3280, %v3273
    %v3470 = vpack.c.b16 %v3281, %v3274
    %v3471 = vpack.c.b16 %v3282, %v3275
    %v3472 = vpack.c.b16 %v3283, %v3276
    %v3473 = vpack.c.b16 %v3291, %v3284
    %v3474 = vpack.c.b16 %v3292, %v3285
    %v3475 = vpack.c.b16 %v3293, %v3286
    %v3476 = vpack.c.b16 %v3294, %v3287
    %v3477 = vpack.c.b16 %v3295, %v3288
    %v3478 = vpack.c.b16 %v3296, %v3289
    %v3479 = vpack.c.b16 %v3297, %v3290
    %v3480 = vpack.c.b16 %v3305, %v3298
    %v3481 = vpack.c.b16 %v3306, %v3299
    %v3482 = vpack.c.b16 %v3307, %v3300
    %v3483 = vpack.c.b16 %v3308, %v3301
    %v3484 = vpack.c.b16 %v3309, %v3302
    %v3485 = vpack.c.b16 %v3310, %v3303
    %v3486 = vpack.c.b16 %v3311, %v3304
    %v3487 = vpack.c.b16 %v3319, %v3312
    %v3488 = vpack.c.b16 %v3320, %v3313
    %v3489 = vpack.c.b16 %v3321, %v3314
    %v3490 = vpack.c.b16 %v3322, %v3315
    %v3491 = vpack.c.b16 %v3323, %v3316
    %v3492 = vpack.c.b16 %v3324, %v3317
    %v3493 = vpack.c.b16 %v3325, %v3318
    %v3494 = vpack.c.b16 %v3333, %v3326
    %v3495 = vpack.c.b16 %v3334, %v3327
    %v3496 = vpack.c.b16 %v3335, %v3328
    %v3497 = vpack.c.b16 %v3336, %v3329
    %v3498 = vpack.c.b16 %v3337, %v3330
    %v3499 = vpack.c.b16 %v3338, %v3331
    %v3500 = vpack.c.b16 %v3339, %v3332
    %v3501 = vpack.c.b16 %v3347, %v3340
    %v3502 = vpack.c.b16 %v3348, %v3341
    %v3503 = vpack.c.b16 %v3349, %v3342
    %v3504 = vpack.c.b16 %v3350, %v3343
    %v3505 = vpack.c.b16 %v3351, %v3344
    %v3506 = vpack.c.b16 %v3352, %v3345
    %v3507 = vpack.c.b16 %v3353, %v3346
    %v3508 = vpack.c.b16 %v3361, %v3354
    %v3509 = vpack.c.b16 %v3362, %v3355
    %v3510 = vpack.c.b16 %v3363, %v3356
    %v3511 = vpack.c.b16 %v3364, %v3357
    %v3512 = vpack.c.b16 %v3365, %v3358
    %v3513 = vpack.c.b16 %v3366, %v3359
    %v3514 = vpack.c.b16 %v3367, %v3360
    %v3515 = vpack.c.b16 %v3375, %v3368
    %v3516 = vpack.c.b16 %v3376, %v3369
    %v3517 = vpack.c.b16 %v3377, %v3370
    %v3518 = vpack.c.b16 %v3378, %v3371
    %v3519 = vpack.c.b16 %v3379, %v3372
    %v3520 = vpack.c.b16 %v3380, %v3373
    %v3521 = vpack.c.b16 %v3381, %v3374
    %v3522 = vpack.c.b16 %v3389, %v3382
    %v3523 = vpack.c.b16 %v3390, %v3383
    %v3524 = vpack.c.b16 %v3391, %v3384
    %v3525 = vpack.c.b16 %v3392, %v3385
    %v3526 = vpack.c.b16 %v3393, %v3386
    %v3527 = vpack.c.b16 %v3394, %v3387
    %v3528 = vpack.c.b16 %v3395, %v3388
    %v3529 = vpack.c.b16 %v3403, %v3396
    %v3530 = vpack.c.b16 %v3404, %v3397
    %v3531 = vpack.c.b16 %v3405, %v3398
    %v3532 = vpack.c.b16 %v3406, %v3399
    %v3533 = vpack.c.b16 %v3407, %v3400
    %v3534 = vpack.c.b16 %v3408, %v3401
    %v3535 = vpack.c.b16 %v3409, %v3402
    %v3536 = vpack.c.b16 %v3417, %v3410
    %v3537 = vpack.c.b16 %v3418, %v3411
    %v3538 = vpack.c.b16 %v3419, %v3412
    %v3539 = vpack.c.b16 %v3420, %v3413
    %v3540 = vpack.c.b16 %v3421, %v3414
    %v3541 = vpack.c.b16 %v3422, %v3415
    %v3542 = vpack.c.b16 %v3423, %v3416
    %v3543 = vpack.c.b16 %v3431, %v3424
    %v3544 = vpack.c.b16 %v3432, %v3425
    %v3545 = vpack.c.b16 %v3433, %v3426
    %v3546 = vpack.c.b16 %v3434, %v3427
    %v3547 = vpack.c.b16 %v3435, %v3428
    %v3548 = vpack.c.b16 %v3436, %v3429
    %v3549 = vpack.c.b16 %v3437, %v3430
    %3662 = vmatpush.bf16.msra.mxu0 %v3487
    %3663 = vmatpush.bf16.msra.mxu0 %v3480
    %3664 = vmatpush.bf16.msra.mxu0 %v3473
    %3665 = vmatpush.bf16.msra.mxu0 %v3466
    %3666 = vmatpush.bf16.msra.mxu0 %v3459
    %3667 = vmatpush.bf16.msra.mxu0 %v3452
    %3668 = vmatpush.bf16.msra.mxu0 %v3445
    %3669 = vmatpush.bf16.msra.mxu0 %v3438
    %3670 = vmatmul.bf16.gmra.mxu0 %v2927
    %v3671 = vpop.f32.mrf.mxu0
    %v3672 = vadd.f32 %v3072, %v3671
    %v3673 = vpop.f32.mrf.mxu0
    %v3674 = vadd.f32 %v3072, %v3673
    %3675 = vmatmul.bf16.gmra.mxu0 %v2929
    %v3676 = vpop.f32.mrf.mxu0
    %v3677 = vadd.f32 %v3072, %v3676
    %v3678 = vpop.f32.mrf.mxu0
    %v3679 = vadd.f32 %v3072, %v3678
    %3680 = vmatmul.bf16.gmra.mxu0 %v2931
    %v3681 = vpop.f32.mrf.mxu0
    %v3682 = vadd.f32 %v3072, %v3681
    %v3683 = vpop.f32.mrf.mxu0
    %v3684 = vadd.f32 %v3072, %v3683
    %3685 = vmatmul.bf16.gmra.mxu0 %v2933
    %v3686 = vpop.f32.mrf.mxu0
    %v3687 = vadd.f32 %v3072, %v3686
    %v3688 = vpop.f32.mrf.mxu0
    %v3689 = vadd.f32 %v3072, %v3688
    %3690 = vmatmul.bf16.gmra.mxu0 %v2935
    %v3691 = vpop.f32.mrf.mxu0
    %v3692 = vadd.f32 %v3072, %v3691
    %v3693 = vpop.f32.mrf.mxu0
    %v3694 = vadd.f32 %v3072, %v3693
    %3695 = vmatmul.bf16.gmra.mxu0 %v2937
    %v3696 = vpop.f32.mrf.mxu0
    %v3697 = vadd.f32 %v3072, %v3696
    %v3698 = vpop.f32.mrf.mxu0
    %v3699 = vadd.f32 %v3072, %v3698
    %3700 = vmatmul.bf16.gmra.mxu0 %v2939
    %v3701 = vpop.f32.mrf.mxu0
    %v3702 = vadd.f32 %v3072, %v3701
    %v3703 = vpop.f32.mrf.mxu0
    %v3704 = vadd.f32 %v3072, %v3703
    %3705 = vmatmul.bf16.gmra.mxu0 %v2941
    %v3706 = vpop.f32.mrf.mxu0
    %v3707 = vadd.f32 %v3072, %v3706
    %v3708 = vpop.f32.mrf.mxu0
    %v3709 = vadd.f32 %v3072, %v3708
    %3710 = vdwg.mxu0
    %3711 = vmatpush.bf16.msra.mxu0 %v3543
    %3712 = vmatpush.bf16.msra.mxu0 %v3536
    %3713 = vmatpush.bf16.msra.mxu0 %v3529
    %3714 = vmatpush.bf16.msra.mxu0 %v3522
    %3715 = vmatpush.bf16.msra.mxu0 %v3515
    %3716 = vmatpush.bf16.msra.mxu0 %v3508
    %3717 = vmatpush.bf16.msra.mxu0 %v3501
    %3718 = vmatpush.bf16.msra.mxu0 %v3494
    %3719 = vmatmul.bf16.gmra.mxu0 %v2928
    %v3720 = vpop.f32.mrf.mxu0
    %v3721 = vadd.f32 %v3672, %v3720
    %v3722 = vpop.f32.mrf.mxu0
    %v3723 = vadd.f32 %v3674, %v3722
    %3724 = vmatmul.bf16.gmra.mxu0 %v2930
    %v3725 = vpop.f32.mrf.mxu0
    %v3726 = vadd.f32 %v3677, %v3725
    %v3727 = vpop.f32.mrf.mxu0
    %v3728 = vadd.f32 %v3679, %v3727
    %3729 = vmatmul.bf16.gmra.mxu0 %v2932
    %v3730 = vpop.f32.mrf.mxu0
    %v3731 = vadd.f32 %v3682, %v3730
    %v3732 = vpop.f32.mrf.mxu0
    %v3733 = vadd.f32 %v3684, %v3732
    %3734 = vmatmul.bf16.gmra.mxu0 %v2934
    %v3735 = vpop.f32.mrf.mxu0
    %v3736 = vadd.f32 %v3687, %v3735
    %v3737 = vpop.f32.mrf.mxu0
    %v3738 = vadd.f32 %v3689, %v3737
    %3739 = vmatmul.bf16.gmra.mxu0 %v2936
    %v3740 = vpop.f32.mrf.mxu0
    %v3741 = vadd.f32 %v3692, %v3740
    %v3742 = vpop.f32.mrf.mxu0
    %v3743 = vadd.f32 %v3694, %v3742
    %3744 = vmatmul.bf16.gmra.mxu0 %v2938
    %v3745 = vpop.f32.mrf.mxu0
    %v3746 = vadd.f32 %v3697, %v3745
    %v3747 = vpop.f32.mrf.mxu0
    %v3748 = vadd.f32 %v3699, %v3747
    %3749 = vmatmul.bf16.gmra.mxu0 %v2940
    %v3750 = vpop.f32.mrf.mxu0
    %v3751 = vadd.f32 %v3702, %v3750
    %v3752 = vpop.f32.mrf.mxu0
    %v3753 = vadd.f32 %v3704, %v3752
    %3754 = vmatmul.bf16.gmra.mxu0 %v2942
    %v3755 = vpop.f32.mrf.mxu0
    %v3756 = vadd.f32 %v3707, %v3755
    %v3757 = vpop.f32.mrf.mxu0
    %v3758 = vadd.f32 %v3709, %v3757
    %3759 = vdwg.mxu0
    %3760 = vmatpush.bf16.msra.mxu0 %v3488
    %3761 = vmatpush.bf16.msra.mxu0 %v3481
    %3762 = vmatpush.bf16.msra.mxu0 %v3474
    %3763 = vmatpush.bf16.msra.mxu0 %v3467
    %3764 = vmatpush.bf16.msra.mxu0 %v3460
    %3765 = vmatpush.bf16.msra.mxu0 %v3453
    %3766 = vmatpush.bf16.msra.mxu0 %v3446
    %3767 = vmatpush.bf16.msra.mxu0 %v3439
    %3768 = vmatmul.bf16.gmra.mxu0 %v2927
    %v3769 = vpop.f32.mrf.mxu0
    %v3770 = vadd.f32 %v3073, %v3769
    %v3771 = vpop.f32.mrf.mxu0
    %v3772 = vadd.f32 %v3073, %v3771
    %3773 = vmatmul.bf16.gmra.mxu0 %v2929
    %v3774 = vpop.f32.mrf.mxu0
    %v3775 = vadd.f32 %v3073, %v3774
    %v3776 = vpop.f32.mrf.mxu0
    %v3777 = vadd.f32 %v3073, %v3776
    %3778 = vmatmul.bf16.gmra.mxu0 %v2931
    %v3779 = vpop.f32.mrf.mxu0
    %v3780 = vadd.f32 %v3073, %v3779
    %v3781 = vpop.f32.mrf.mxu0
    %v3782 = vadd.f32 %v3073, %v3781
    %3783 = vmatmul.bf16.gmra.mxu0 %v2933
    %v3784 = vpop.f32.mrf.mxu0
    %v3785 = vadd.f32 %v3073, %v3784
    %v3786 = vpop.f32.mrf.mxu0
    %v3787 = vadd.f32 %v3073, %v3786
    %3788 = vmatmul.bf16.gmra.mxu0 %v2935
    %v3789 = vpop.f32.mrf.mxu0
    %v3790 = vadd.f32 %v3073, %v3789
    %v3791 = vpop.f32.mrf.mxu0
    %v3792 = vadd.f32 %v3073, %v3791
    %3793 = vmatmul.bf16.gmra.mxu0 %v2937
    %v3794 = vpop.f32.mrf.mxu0
    %v3795 = vadd.f32 %v3073, %v3794
    %v3796 = vpop.f32.mrf.mxu0
    %v3797 = vadd.f32 %v3073, %v3796
    %3798 = vmatmul.bf16.gmra.mxu0 %v2939
    %v3799 = vpop.f32.mrf.mxu0
    %v3800 = vadd.f32 %v3073, %v3799
    %v3801 = vpop.f32.mrf.mxu0
    %v3802 = vadd.f32 %v3073, %v3801
    %3803 = vmatmul.bf16.gmra.mxu0 %v2941
    %v3804 = vpop.f32.mrf.mxu0
    %v3805 = vadd.f32 %v3073, %v3804
    %v3806 = vpop.f32.mrf.mxu0
    %v3807 = vadd.f32 %v3073, %v3806
    %3808 = vdwg.mxu0
    %3809 = vmatpush.bf16.msra.mxu0 %v3544
    %3810 = vmatpush.bf16.msra.mxu0 %v3537
    %3811 = vmatpush.bf16.msra.mxu0 %v3530
    %3812 = vmatpush.bf16.msra.mxu0 %v3523
    %3813 = vmatpush.bf16.msra.mxu0 %v3516
    %3814 = vmatpush.bf16.msra.mxu0 %v3509
    %3815 = vmatpush.bf16.msra.mxu0 %v3502
    %3816 = vmatpush.bf16.msra.mxu0 %v3495
    %3817 = vmatmul.bf16.gmra.mxu0 %v2928
    %v3818 = vpop.f32.mrf.mxu0
    %v3819 = vadd.f32 %v3770, %v3818
    %v3820 = vpop.f32.mrf.mxu0
    %v3821 = vadd.f32 %v3772, %v3820
    %3822 = vmatmul.bf16.gmra.mxu0 %v2930
    %v3823 = vpop.f32.mrf.mxu0
    %v3824 = vadd.f32 %v3775, %v3823
    %v3825 = vpop.f32.mrf.mxu0
    %v3826 = vadd.f32 %v3777, %v3825
    %3827 = vmatmul.bf16.gmra.mxu0 %v2932
    %v3828 = vpop.f32.mrf.mxu0
    %v3829 = vadd.f32 %v3780, %v3828
    %v3830 = vpop.f32.mrf.mxu0
    %v3831 = vadd.f32 %v3782, %v3830
    %3832 = vmatmul.bf16.gmra.mxu0 %v2934
    %v3833 = vpop.f32.mrf.mxu0
    %v3834 = vadd.f32 %v3785, %v3833
    %v3835 = vpop.f32.mrf.mxu0
    %v3836 = vadd.f32 %v3787, %v3835
    %3837 = vmatmul.bf16.gmra.mxu0 %v2936
    %v3838 = vpop.f32.mrf.mxu0
    %v3839 = vadd.f32 %v3790, %v3838
    %v3840 = vpop.f32.mrf.mxu0
    %v3841 = vadd.f32 %v3792, %v3840
    %3842 = vmatmul.bf16.gmra.mxu0 %v2938
    %v3843 = vpop.f32.mrf.mxu0
    %v3844 = vadd.f32 %v3795, %v3843
    %v3845 = vpop.f32.mrf.mxu0
    %v3846 = vadd.f32 %v3797, %v3845
    %3847 = vmatmul.bf16.gmra.mxu0 %v2940
    %v3848 = vpop.f32.mrf.mxu0
    %v3849 = vadd.f32 %v3800, %v3848
    %v3850 = vpop.f32.mrf.mxu0
    %v3851 = vadd.f32 %v3802, %v3850
    %3852 = vmatmul.bf16.gmra.mxu0 %v2942
    %v3853 = vpop.f32.mrf.mxu0
    %v3854 = vadd.f32 %v3805, %v3853
    %v3855 = vpop.f32.mrf.mxu0
    %v3856 = vadd.f32 %v3807, %v3855
    %3857 = vdwg.mxu0
    %3858 = vmatpush.bf16.msra.mxu0 %v3489
    %3859 = vmatpush.bf16.msra.mxu0 %v3482
    %3860 = vmatpush.bf16.msra.mxu0 %v3475
    %3861 = vmatpush.bf16.msra.mxu0 %v3468
    %3862 = vmatpush.bf16.msra.mxu0 %v3461
    %3863 = vmatpush.bf16.msra.mxu0 %v3454
    %3864 = vmatpush.bf16.msra.mxu0 %v3447
    %3865 = vmatpush.bf16.msra.mxu0 %v3440
    %3866 = vmatmul.bf16.gmra.mxu0 %v2927
    %v3867 = vpop.f32.mrf.mxu0
    %v3868 = vadd.f32 %v3074, %v3867
    %v3869 = vpop.f32.mrf.mxu0
    %v3870 = vadd.f32 %v3074, %v3869
    %3871 = vmatmul.bf16.gmra.mxu0 %v2929
    %v3872 = vpop.f32.mrf.mxu0
    %v3873 = vadd.f32 %v3074, %v3872
    %v3874 = vpop.f32.mrf.mxu0
    %v3875 = vadd.f32 %v3074, %v3874
    %3876 = vmatmul.bf16.gmra.mxu0 %v2931
    %v3877 = vpop.f32.mrf.mxu0
    %v3878 = vadd.f32 %v3074, %v3877
    %v3879 = vpop.f32.mrf.mxu0
    %v3880 = vadd.f32 %v3074, %v3879
    %3881 = vmatmul.bf16.gmra.mxu0 %v2933
    %v3882 = vpop.f32.mrf.mxu0
    %v3883 = vadd.f32 %v3074, %v3882
    %v3884 = vpop.f32.mrf.mxu0
    %v3885 = vadd.f32 %v3074, %v3884
    %3886 = vmatmul.bf16.gmra.mxu0 %v2935
    %v3887 = vpop.f32.mrf.mxu0
    %v3888 = vadd.f32 %v3074, %v3887
    %v3889 = vpop.f32.mrf.mxu0
    %v3890 = vadd.f32 %v3074, %v3889
    %3891 = vmatmul.bf16.gmra.mxu0 %v2937
    %v3892 = vpop.f32.mrf.mxu0
    %v3893 = vadd.f32 %v3074, %v3892
    %v3894 = vpop.f32.mrf.mxu0
    %v3895 = vadd.f32 %v3074, %v3894
    %3896 = vmatmul.bf16.gmra.mxu0 %v2939
    %v3897 = vpop.f32.mrf.mxu0
    %v3898 = vadd.f32 %v3074, %v3897
    %v3899 = vpop.f32.mrf.mxu0
    %v3900 = vadd.f32 %v3074, %v3899
    %3901 = vmatmul.bf16.gmra.mxu0 %v2941
    %v3902 = vpop.f32.mrf.mxu0
    %v3903 = vadd.f32 %v3074, %v3902
    %v3904 = vpop.f32.mrf.mxu0
    %v3905 = vadd.f32 %v3074, %v3904
    %3906 = vdwg.mxu0
    %3907 = vmatpush.bf16.msra.mxu0 %v3545
    %3908 = vmatpush.bf16.msra.mxu0 %v3538
    %3909 = vmatpush.bf16.msra.mxu0 %v3531
    %3910 = vmatpush.bf16.msra.mxu0 %v3524
    %3911 = vmatpush.bf16.msra.mxu0 %v3517
    %3912 = vmatpush.bf16.msra.mxu0 %v3510
    %3913 = vmatpush.bf16.msra.mxu0 %v3503
    %3914 = vmatpush.bf16.msra.mxu0 %v3496
    %3915 = vmatmul.bf16.gmra.mxu0 %v2928
    %v3916 = vpop.f32.mrf.mxu0
    %v3917 = vadd.f32 %v3868, %v3916
    %v3918 = vpop.f32.mrf.mxu0
    %v3919 = vadd.f32 %v3870, %v3918
    %3920 = vmatmul.bf16.gmra.mxu0 %v2930
    %v3921 = vpop.f32.mrf.mxu0
    %v3922 = vadd.f32 %v3873, %v3921
    %v3923 = vpop.f32.mrf.mxu0
    %v3924 = vadd.f32 %v3875, %v3923
    %3925 = vmatmul.bf16.gmra.mxu0 %v2932
    %v3926 = vpop.f32.mrf.mxu0
    %v3927 = vadd.f32 %v3878, %v3926
    %v3928 = vpop.f32.mrf.mxu0
    %v3929 = vadd.f32 %v3880, %v3928
    %3930 = vmatmul.bf16.gmra.mxu0 %v2934
    %v3931 = vpop.f32.mrf.mxu0
    %v3932 = vadd.f32 %v3883, %v3931
    %v3933 = vpop.f32.mrf.mxu0
    %v3934 = vadd.f32 %v3885, %v3933
    %3935 = vmatmul.bf16.gmra.mxu0 %v2936
    %v3936 = vpop.f32.mrf.mxu0
    %v3937 = vadd.f32 %v3888, %v3936
    %v3938 = vpop.f32.mrf.mxu0
    %v3939 = vadd.f32 %v3890, %v3938
    %3940 = vmatmul.bf16.gmra.mxu0 %v2938
    %v3941 = vpop.f32.mrf.mxu0
    %v3942 = vadd.f32 %v3893, %v3941
    %v3943 = vpop.f32.mrf.mxu0
    %v3944 = vadd.f32 %v3895, %v3943
    %3945 = vmatmul.bf16.gmra.mxu0 %v2940
    %v3946 = vpop.f32.mrf.mxu0
    %v3947 = vadd.f32 %v3898, %v3946
    %v3948 = vpop.f32.mrf.mxu0
    %v3949 = vadd.f32 %v3900, %v3948
    %3950 = vmatmul.bf16.gmra.mxu0 %v2942
    %v3951 = vpop.f32.mrf.mxu0
    %v3952 = vadd.f32 %v3903, %v3951
    %v3953 = vpop.f32.mrf.mxu0
    %v3954 = vadd.f32 %v3905, %v3953
    %3955 = vdwg.mxu0
    %3956 = vmatpush.bf16.msra.mxu0 %v3490
    %3957 = vmatpush.bf16.msra.mxu0 %v3483
    %3958 = vmatpush.bf16.msra.mxu0 %v3476
    %3959 = vmatpush.bf16.msra.mxu0 %v3469
    %3960 = vmatpush.bf16.msra.mxu0 %v3462
    %3961 = vmatpush.bf16.msra.mxu0 %v3455
    %3962 = vmatpush.bf16.msra.mxu0 %v3448
    %3963 = vmatpush.bf16.msra.mxu0 %v3441
    %3964 = vmatmul.bf16.gmra.mxu0 %v2927
    %v3965 = vpop.f32.mrf.mxu0
    %v3966 = vadd.f32 %v3075, %v3965
    %v3967 = vpop.f32.mrf.mxu0
    %v3968 = vadd.f32 %v3075, %v3967
    %3969 = vmatmul.bf16.gmra.mxu0 %v2929
    %v3970 = vpop.f32.mrf.mxu0
    %v3971 = vadd.f32 %v3075, %v3970
    %v3972 = vpop.f32.mrf.mxu0
    %v3973 = vadd.f32 %v3075, %v3972
    %3974 = vmatmul.bf16.gmra.mxu0 %v2931
    %v3975 = vpop.f32.mrf.mxu0
    %v3976 = vadd.f32 %v3075, %v3975
    %v3977 = vpop.f32.mrf.mxu0
    %v3978 = vadd.f32 %v3075, %v3977
    %3979 = vmatmul.bf16.gmra.mxu0 %v2933
    %v3980 = vpop.f32.mrf.mxu0
    %v3981 = vadd.f32 %v3075, %v3980
    %v3982 = vpop.f32.mrf.mxu0
    %v3983 = vadd.f32 %v3075, %v3982
    %3984 = vmatmul.bf16.gmra.mxu0 %v2935
    %v3985 = vpop.f32.mrf.mxu0
    %v3986 = vadd.f32 %v3075, %v3985
    %v3987 = vpop.f32.mrf.mxu0
    %v3988 = vadd.f32 %v3075, %v3987
    %3989 = vmatmul.bf16.gmra.mxu0 %v2937
    %v3990 = vpop.f32.mrf.mxu0
    %v3991 = vadd.f32 %v3075, %v3990
    %v3992 = vpop.f32.mrf.mxu0
    %v3993 = vadd.f32 %v3075, %v3992
    %3994 = vmatmul.bf16.gmra.mxu0 %v2939
    %v3995 = vpop.f32.mrf.mxu0
    %v3996 = vadd.f32 %v3075, %v3995
    %v3997 = vpop.f32.mrf.mxu0
    %v3998 = vadd.f32 %v3075, %v3997
    %3999 = vmatmul.bf16.gmra.mxu0 %v2941
    %v4000 = vpop.f32.mrf.mxu0
    %v4001 = vadd.f32 %v3075, %v4000
    %v4002 = vpop.f32.mrf.mxu0
    %v4003 = vadd.f32 %v3075, %v4002
    %4004 = vdwg.mxu0
    %4005 = vmatpush.bf16.msra.mxu0 %v3546
    %4006 = vmatpush.bf16.msra.mxu0 %v3539
    %4007 = vmatpush.bf16.msra.mxu0 %v3532
    %4008 = vmatpush.bf16.msra.mxu0 %v3525
    %4009 = vmatpush.bf16.msra.mxu0 %v3518
    %4010 = vmatpush.bf16.msra.mxu0 %v3511
    %4011 = vmatpush.bf16.msra.mxu0 %v3504
    %4012 = vmatpush.bf16.msra.mxu0 %v3497
    %4013 = vmatmul.bf16.gmra.mxu0 %v2928
    %v4014 = vpop.f32.mrf.mxu0
    %v4015 = vadd.f32 %v3966, %v4014
    %v4016 = vpop.f32.mrf.mxu0
    %v4017 = vadd.f32 %v3968, %v4016
    %4018 = vmatmul.bf16.gmra.mxu0 %v2930
    %v4019 = vpop.f32.mrf.mxu0
    %v4020 = vadd.f32 %v3971, %v4019
    %v4021 = vpop.f32.mrf.mxu0
    %v4022 = vadd.f32 %v3973, %v4021
    %4023 = vmatmul.bf16.gmra.mxu0 %v2932
    %v4024 = vpop.f32.mrf.mxu0
    %v4025 = vadd.f32 %v3976, %v4024
    %v4026 = vpop.f32.mrf.mxu0
    %v4027 = vadd.f32 %v3978, %v4026
    %4028 = vmatmul.bf16.gmra.mxu0 %v2934
    %v4029 = vpop.f32.mrf.mxu0
    %v4030 = vadd.f32 %v3981, %v4029
    %v4031 = vpop.f32.mrf.mxu0
    %v4032 = vadd.f32 %v3983, %v4031
    %4033 = vmatmul.bf16.gmra.mxu0 %v2936
    %v4034 = vpop.f32.mrf.mxu0
    %v4035 = vadd.f32 %v3986, %v4034
    %v4036 = vpop.f32.mrf.mxu0
    %v4037 = vadd.f32 %v3988, %v4036
    %4038 = vmatmul.bf16.gmra.mxu0 %v2938
    %v4039 = vpop.f32.mrf.mxu0
    %v4040 = vadd.f32 %v3991, %v4039
    %v4041 = vpop.f32.mrf.mxu0
    %v4042 = vadd.f32 %v3993, %v4041
    %4043 = vmatmul.bf16.gmra.mxu0 %v2940
    %v4044 = vpop.f32.mrf.mxu0
    %v4045 = vadd.f32 %v3996, %v4044
    %v4046 = vpop.f32.mrf.mxu0
    %v4047 = vadd.f32 %v3998, %v4046
    %4048 = vmatmul.bf16.gmra.mxu0 %v2942
    %v4049 = vpop.f32.mrf.mxu0
    %v4050 = vadd.f32 %v4001, %v4049
    %v4051 = vpop.f32.mrf.mxu0
    %v4052 = vadd.f32 %v4003, %v4051
    %4053 = vdwg.mxu0
    %4054 = vmatpush.bf16.msra.mxu0 %v3491
    %4055 = vmatpush.bf16.msra.mxu0 %v3484
    %4056 = vmatpush.bf16.msra.mxu0 %v3477
    %4057 = vmatpush.bf16.msra.mxu0 %v3470
    %4058 = vmatpush.bf16.msra.mxu0 %v3463
    %4059 = vmatpush.bf16.msra.mxu0 %v3456
    %4060 = vmatpush.bf16.msra.mxu0 %v3449
    %4061 = vmatpush.bf16.msra.mxu0 %v3442
    %4062 = vmatmul.bf16.gmra.mxu0 %v2927
    %v4063 = vpop.f32.mrf.mxu0
    %v4064 = vadd.f32 %v3076, %v4063
    %v4065 = vpop.f32.mrf.mxu0
    %v4066 = vadd.f32 %v3076, %v4065
    %4067 = vmatmul.bf16.gmra.mxu0 %v2929
    %v4068 = vpop.f32.mrf.mxu0
    %v4069 = vadd.f32 %v3076, %v4068
    %v4070 = vpop.f32.mrf.mxu0
    %v4071 = vadd.f32 %v3076, %v4070
    %4072 = vmatmul.bf16.gmra.mxu0 %v2931
    %v4073 = vpop.f32.mrf.mxu0
    %v4074 = vadd.f32 %v3076, %v4073
    %v4075 = vpop.f32.mrf.mxu0
    %v4076 = vadd.f32 %v3076, %v4075
    %4077 = vmatmul.bf16.gmra.mxu0 %v2933
    %v4078 = vpop.f32.mrf.mxu0
    %v4079 = vadd.f32 %v3076, %v4078
    %v4080 = vpop.f32.mrf.mxu0
    %v4081 = vadd.f32 %v3076, %v4080
    %4082 = vmatmul.bf16.gmra.mxu0 %v2935
    %v4083 = vpop.f32.mrf.mxu0
    %v4084 = vadd.f32 %v3076, %v4083
    %v4085 = vpop.f32.mrf.mxu0
    %v4086 = vadd.f32 %v3076, %v4085
    %4087 = vmatmul.bf16.gmra.mxu0 %v2937
    %v4088 = vpop.f32.mrf.mxu0
    %v4089 = vadd.f32 %v3076, %v4088
    %v4090 = vpop.f32.mrf.mxu0
    %v4091 = vadd.f32 %v3076, %v4090
    %4092 = vmatmul.bf16.gmra.mxu0 %v2939
    %v4093 = vpop.f32.mrf.mxu0
    %v4094 = vadd.f32 %v3076, %v4093
    %v4095 = vpop.f32.mrf.mxu0
    %v4096 = vadd.f32 %v3076, %v4095
    %4097 = vmatmul.bf16.gmra.mxu0 %v2941
    %v4098 = vpop.f32.mrf.mxu0
    %v4099 = vadd.f32 %v3076, %v4098
    %v4100 = vpop.f32.mrf.mxu0
    %v4101 = vadd.f32 %v3076, %v4100
    %4102 = vdwg.mxu0
    %4103 = vmatpush.bf16.msra.mxu0 %v3547
    %4104 = vmatpush.bf16.msra.mxu0 %v3540
    %4105 = vmatpush.bf16.msra.mxu0 %v3533
    %4106 = vmatpush.bf16.msra.mxu0 %v3526
    %4107 = vmatpush.bf16.msra.mxu0 %v3519
    %4108 = vmatpush.bf16.msra.mxu0 %v3512
    %4109 = vmatpush.bf16.msra.mxu0 %v3505
    %4110 = vmatpush.bf16.msra.mxu0 %v3498
    %4111 = vmatmul.bf16.gmra.mxu0 %v2928
    %v4112 = vpop.f32.mrf.mxu0
    %v4113 = vadd.f32 %v4064, %v4112
    %v4114 = vpop.f32.mrf.mxu0
    %v4115 = vadd.f32 %v4066, %v4114
    %4116 = vmatmul.bf16.gmra.mxu0 %v2930
    %v4117 = vpop.f32.mrf.mxu0
    %v4118 = vadd.f32 %v4069, %v4117
    %v4119 = vpop.f32.mrf.mxu0
    %v4120 = vadd.f32 %v4071, %v4119
    %4121 = vmatmul.bf16.gmra.mxu0 %v2932
    %v4122 = vpop.f32.mrf.mxu0
    %v4123 = vadd.f32 %v4074, %v4122
    %v4124 = vpop.f32.mrf.mxu0
    %v4125 = vadd.f32 %v4076, %v4124
    %4126 = vmatmul.bf16.gmra.mxu0 %v2934
    %v4127 = vpop.f32.mrf.mxu0
    %v4128 = vadd.f32 %v4079, %v4127
    %v4129 = vpop.f32.mrf.mxu0
    %v4130 = vadd.f32 %v4081, %v4129
    %4131 = vmatmul.bf16.gmra.mxu0 %v2936
    %v4132 = vpop.f32.mrf.mxu0
    %v4133 = vadd.f32 %v4084, %v4132
    %v4134 = vpop.f32.mrf.mxu0
    %v4135 = vadd.f32 %v4086, %v4134
    %4136 = vmatmul.bf16.gmra.mxu0 %v2938
    %v4137 = vpop.f32.mrf.mxu0
    %v4138 = vadd.f32 %v4089, %v4137
    %v4139 = vpop.f32.mrf.mxu0
    %v4140 = vadd.f32 %v4091, %v4139
    %4141 = vmatmul.bf16.gmra.mxu0 %v2940
    %v4142 = vpop.f32.mrf.mxu0
    %v4143 = vadd.f32 %v4094, %v4142
    %v4144 = vpop.f32.mrf.mxu0
    %v4145 = vadd.f32 %v4096, %v4144
    %4146 = vmatmul.bf16.gmra.mxu0 %v2942
    %v4147 = vpop.f32.mrf.mxu0
    %v4148 = vadd.f32 %v4099, %v4147
    %v4149 = vpop.f32.mrf.mxu0
    %v4150 = vadd.f32 %v4101, %v4149
    %4151 = vdwg.mxu0
    %4152 = vmatpush.bf16.msra.mxu0 %v3492
    %4153 = vmatpush.bf16.msra.mxu0 %v3485
    %4154 = vmatpush.bf16.msra.mxu0 %v3478
    %4155 = vmatpush.bf16.msra.mxu0 %v3471
    %4156 = vmatpush.bf16.msra.mxu0 %v3464
    %4157 = vmatpush.bf16.msra.mxu0 %v3457
    %4158 = vmatpush.bf16.msra.mxu0 %v3450
    %4159 = vmatpush.bf16.msra.mxu0 %v3443
    %4160 = vmatmul.bf16.gmra.mxu0 %v2927
    %v4161 = vpop.f32.mrf.mxu0
    %v4162 = vadd.f32 %v3077, %v4161
    %v4163 = vpop.f32.mrf.mxu0
    %v4164 = vadd.f32 %v3077, %v4163
    %4165 = vmatmul.bf16.gmra.mxu0 %v2929
    %v4166 = vpop.f32.mrf.mxu0
    %v4167 = vadd.f32 %v3077, %v4166
    %v4168 = vpop.f32.mrf.mxu0
    %v4169 = vadd.f32 %v3077, %v4168
    %4170 = vmatmul.bf16.gmra.mxu0 %v2931
    %v4171 = vpop.f32.mrf.mxu0
    %v4172 = vadd.f32 %v3077, %v4171
    %v4173 = vpop.f32.mrf.mxu0
    %v4174 = vadd.f32 %v3077, %v4173
    %4175 = vmatmul.bf16.gmra.mxu0 %v2933
    %v4176 = vpop.f32.mrf.mxu0
    %v4177 = vadd.f32 %v3077, %v4176
    %v4178 = vpop.f32.mrf.mxu0
    %v4179 = vadd.f32 %v3077, %v4178
    %4180 = vmatmul.bf16.gmra.mxu0 %v2935
    %v4181 = vpop.f32.mrf.mxu0
    %v4182 = vadd.f32 %v3077, %v4181
    %v4183 = vpop.f32.mrf.mxu0
    %v4184 = vadd.f32 %v3077, %v4183
    %4185 = vmatmul.bf16.gmra.mxu0 %v2937
    %v4186 = vpop.f32.mrf.mxu0
    %v4187 = vadd.f32 %v3077, %v4186
    %v4188 = vpop.f32.mrf.mxu0
    %v4189 = vadd.f32 %v3077, %v4188
    %4190 = vmatmul.bf16.gmra.mxu0 %v2939
    %v4191 = vpop.f32.mrf.mxu0
    %v4192 = vadd.f32 %v3077, %v4191
    %v4193 = vpop.f32.mrf.mxu0
    %v4194 = vadd.f32 %v3077, %v4193
    %4195 = vmatmul.bf16.gmra.mxu0 %v2941
    %v4196 = vpop.f32.mrf.mxu0
    %v4197 = vadd.f32 %v3077, %v4196
    %v4198 = vpop.f32.mrf.mxu0
    %v4199 = vadd.f32 %v3077, %v4198
    %4200 = vdwg.mxu0
    %4201 = vmatpush.bf16.msra.mxu0 %v3548
    %4202 = vmatpush.bf16.msra.mxu0 %v3541
    %4203 = vmatpush.bf16.msra.mxu0 %v3534
    %4204 = vmatpush.bf16.msra.mxu0 %v3527
    %4205 = vmatpush.bf16.msra.mxu0 %v3520
    %4206 = vmatpush.bf16.msra.mxu0 %v3513
    %4207 = vmatpush.bf16.msra.mxu0 %v3506
    %4208 = vmatpush.bf16.msra.mxu0 %v3499
    %4209 = vmatmul.bf16.gmra.mxu0 %v2928
    %v4210 = vpop.f32.mrf.mxu0
    %v4211 = vadd.f32 %v4162, %v4210
    %v4212 = vpop.f32.mrf.mxu0
    %v4213 = vadd.f32 %v4164, %v4212
    %4214 = vmatmul.bf16.gmra.mxu0 %v2930
    %v4215 = vpop.f32.mrf.mxu0
    %v4216 = vadd.f32 %v4167, %v4215
    %v4217 = vpop.f32.mrf.mxu0
    %v4218 = vadd.f32 %v4169, %v4217
    %4219 = vmatmul.bf16.gmra.mxu0 %v2932
    %v4220 = vpop.f32.mrf.mxu0
    %v4221 = vadd.f32 %v4172, %v4220
    %v4222 = vpop.f32.mrf.mxu0
    %v4223 = vadd.f32 %v4174, %v4222
    %4224 = vmatmul.bf16.gmra.mxu0 %v2934
    %v4225 = vpop.f32.mrf.mxu0
    %v4226 = vadd.f32 %v4177, %v4225
    %v4227 = vpop.f32.mrf.mxu0
    %v4228 = vadd.f32 %v4179, %v4227
    %4229 = vmatmul.bf16.gmra.mxu0 %v2936
    %v4230 = vpop.f32.mrf.mxu0
    %v4231 = vadd.f32 %v4182, %v4230
    %v4232 = vpop.f32.mrf.mxu0
    %v4233 = vadd.f32 %v4184, %v4232
    %4234 = vmatmul.bf16.gmra.mxu0 %v2938
    %v4235 = vpop.f32.mrf.mxu0
    %v4236 = vadd.f32 %v4187, %v4235
    %v4237 = vpop.f32.mrf.mxu0
    %v4238 = vadd.f32 %v4189, %v4237
    %4239 = vmatmul.bf16.gmra.mxu0 %v2940
    %v4240 = vpop.f32.mrf.mxu0
    %v4241 = vadd.f32 %v4192, %v4240
    %v4242 = vpop.f32.mrf.mxu0
    %v4243 = vadd.f32 %v4194, %v4242
    %4244 = vmatmul.bf16.gmra.mxu0 %v2942
    %v4245 = vpop.f32.mrf.mxu0
    %v4246 = vadd.f32 %v4197, %v4245
    %v4247 = vpop.f32.mrf.mxu0
    %v4248 = vadd.f32 %v4199, %v4247
    %4249 = vdwg.mxu0
    %4250 = vmatpush.bf16.msra.mxu0 %v3493
    %4251 = vmatpush.bf16.msra.mxu0 %v3486
    %4252 = vmatpush.bf16.msra.mxu0 %v3479
    %4253 = vmatpush.bf16.msra.mxu0 %v3472
    %4254 = vmatpush.bf16.msra.mxu0 %v3465
    %4255 = vmatpush.bf16.msra.mxu0 %v3458
    %4256 = vmatpush.bf16.msra.mxu0 %v3451
    %4257 = vmatpush.bf16.msra.mxu0 %v3444
    %4258 = vmatmul.bf16.gmra.mxu0 %v2927
    %v4259 = vpop.f32.mrf.mxu0
    %v4260 = vadd.f32 %v3078, %v4259
    %v4261 = vpop.f32.mrf.mxu0
    %v4262 = vadd.f32 %v3078, %v4261
    %4263 = vmatmul.bf16.gmra.mxu0 %v2929
    %v4264 = vpop.f32.mrf.mxu0
    %v4265 = vadd.f32 %v3078, %v4264
    %v4266 = vpop.f32.mrf.mxu0
    %v4267 = vadd.f32 %v3078, %v4266
    %4268 = vmatmul.bf16.gmra.mxu0 %v2931
    %v4269 = vpop.f32.mrf.mxu0
    %v4270 = vadd.f32 %v3078, %v4269
    %v4271 = vpop.f32.mrf.mxu0
    %v4272 = vadd.f32 %v3078, %v4271
    %4273 = vmatmul.bf16.gmra.mxu0 %v2933
    %v4274 = vpop.f32.mrf.mxu0
    %v4275 = vadd.f32 %v3078, %v4274
    %v4276 = vpop.f32.mrf.mxu0
    %v4277 = vadd.f32 %v3078, %v4276
    %4278 = vmatmul.bf16.gmra.mxu0 %v2935
    %v4279 = vpop.f32.mrf.mxu0
    %v4280 = vadd.f32 %v3078, %v4279
    %v4281 = vpop.f32.mrf.mxu0
    %v4282 = vadd.f32 %v3078, %v4281
    %4283 = vmatmul.bf16.gmra.mxu0 %v2937
    %v4284 = vpop.f32.mrf.mxu0
    %v4285 = vadd.f32 %v3078, %v4284
    %v4286 = vpop.f32.mrf.mxu0
    %v4287 = vadd.f32 %v3078, %v4286
    %4288 = vmatmul.bf16.gmra.mxu0 %v2939
    %v4289 = vpop.f32.mrf.mxu0
    %v4290 = vadd.f32 %v3078, %v4289
    %v4291 = vpop.f32.mrf.mxu0
    %v4292 = vadd.f32 %v3078, %v4291
    %4293 = vmatmul.bf16.gmra.mxu0 %v2941
    %v4294 = vpop.f32.mrf.mxu0
    %v4295 = vadd.f32 %v3078, %v4294
    %v4296 = vpop.f32.mrf.mxu0
    %v4297 = vadd.f32 %v3078, %v4296
    %4298 = vdwg.mxu0
    %4299 = vmatpush.bf16.msra.mxu0 %v3549
    %4300 = vmatpush.bf16.msra.mxu0 %v3542
    %4301 = vmatpush.bf16.msra.mxu0 %v3535
    %4302 = vmatpush.bf16.msra.mxu0 %v3528
    %4303 = vmatpush.bf16.msra.mxu0 %v3521
    %4304 = vmatpush.bf16.msra.mxu0 %v3514
    %4305 = vmatpush.bf16.msra.mxu0 %v3507
    %4306 = vmatpush.bf16.msra.mxu0 %v3500
    %4307 = vmatmul.bf16.gmra.mxu0 %v2928
    %v4308 = vpop.f32.mrf.mxu0
    %v4309 = vadd.f32 %v4260, %v4308
    %v4310 = vpop.f32.mrf.mxu0
    %v4311 = vadd.f32 %v4262, %v4310
    %4312 = vmatmul.bf16.gmra.mxu0 %v2930
    %v4313 = vpop.f32.mrf.mxu0
    %v4314 = vadd.f32 %v4265, %v4313
    %v4315 = vpop.f32.mrf.mxu0
    %v4316 = vadd.f32 %v4267, %v4315
    %4317 = vmatmul.bf16.gmra.mxu0 %v2932
    %v4318 = vpop.f32.mrf.mxu0
    %v4319 = vadd.f32 %v4270, %v4318
    %v4320 = vpop.f32.mrf.mxu0
    %v4321 = vadd.f32 %v4272, %v4320
    %4322 = vmatmul.bf16.gmra.mxu0 %v2934
    %v4323 = vpop.f32.mrf.mxu0
    %v4324 = vadd.f32 %v4275, %v4323
    %v4325 = vpop.f32.mrf.mxu0
    %v4326 = vadd.f32 %v4277, %v4325
    %4327 = vmatmul.bf16.gmra.mxu0 %v2936
    %v4328 = vpop.f32.mrf.mxu0
    %v4329 = vadd.f32 %v4280, %v4328
    %v4330 = vpop.f32.mrf.mxu0
    %v4331 = vadd.f32 %v4282, %v4330
    %4332 = vmatmul.bf16.gmra.mxu0 %v2938
    %v4333 = vpop.f32.mrf.mxu0
    %v4334 = vadd.f32 %v4285, %v4333
    %v4335 = vpop.f32.mrf.mxu0
    %v4336 = vadd.f32 %v4287, %v4335
    %4337 = vmatmul.bf16.gmra.mxu0 %v2940
    %v4338 = vpop.f32.mrf.mxu0
    %v4339 = vadd.f32 %v4290, %v4338
    %v4340 = vpop.f32.mrf.mxu0
    %v4341 = vadd.f32 %v4292, %v4340
    %4342 = vmatmul.bf16.gmra.mxu0 %v2942
    %v4343 = vpop.f32.mrf.mxu0
    %v4344 = vadd.f32 %v4295, %v4343
    %v4345 = vpop.f32.mrf.mxu0
    %v4346 = vadd.f32 %v4297, %v4345
    %4347 = vdwg.mxu0
    %v4348 = vxor.u32 %v3721, 2147483648
    %v4349 = vxor.u32 %v3819, 2147483648
    %v4350 = vxor.u32 %v3917, 2147483648
    %v4351 = vxor.u32 %v4015, 2147483648
    %v4352 = vxor.u32 %v4113, 2147483648
    %v4353 = vxor.u32 %v4211, 2147483648
    %v4354 = vxor.u32 %v4309, 2147483648
    %v4355 = vxor.u32 %v3723, 2147483648
    %v4356 = vxor.u32 %v3821, 2147483648
    %v4357 = vxor.u32 %v3919, 2147483648
    %v4358 = vxor.u32 %v4017, 2147483648
    %v4359 = vxor.u32 %v4115, 2147483648
    %v4360 = vxor.u32 %v4213, 2147483648
    %v4361 = vxor.u32 %v4311, 2147483648
    %v4362 = vxor.u32 %v3726, 2147483648
    %v4363 = vxor.u32 %v3824, 2147483648
    %v4364 = vxor.u32 %v3922, 2147483648
    %v4365 = vxor.u32 %v4020, 2147483648
    %v4366 = vxor.u32 %v4118, 2147483648
    %v4367 = vxor.u32 %v4216, 2147483648
    %v4368 = vxor.u32 %v4314, 2147483648
    %v4369 = vxor.u32 %v3728, 2147483648
    %v4370 = vxor.u32 %v3826, 2147483648
    %v4371 = vxor.u32 %v3924, 2147483648
    %v4372 = vxor.u32 %v4022, 2147483648
    %v4373 = vxor.u32 %v4120, 2147483648
    %v4374 = vxor.u32 %v4218, 2147483648
    %v4375 = vxor.u32 %v4316, 2147483648
    %v4376 = vxor.u32 %v3731, 2147483648
    %v4377 = vxor.u32 %v3829, 2147483648
    %v4378 = vxor.u32 %v3927, 2147483648
    %v4379 = vxor.u32 %v4025, 2147483648
    %v4380 = vxor.u32 %v4123, 2147483648
    %v4381 = vxor.u32 %v4221, 2147483648
    %v4382 = vxor.u32 %v4319, 2147483648
    %v4383 = vxor.u32 %v3733, 2147483648
    %v4384 = vxor.u32 %v3831, 2147483648
    %v4385 = vxor.u32 %v3929, 2147483648
    %v4386 = vxor.u32 %v4027, 2147483648
    %v4387 = vxor.u32 %v4125, 2147483648
    %v4388 = vxor.u32 %v4223, 2147483648
    %v4389 = vxor.u32 %v4321, 2147483648
    %v4390 = vxor.u32 %v3736, 2147483648
    %v4391 = vxor.u32 %v3834, 2147483648
    %v4392 = vxor.u32 %v3932, 2147483648
    %v4393 = vxor.u32 %v4030, 2147483648
    %v4394 = vxor.u32 %v4128, 2147483648
    %v4395 = vxor.u32 %v4226, 2147483648
    %v4396 = vxor.u32 %v4324, 2147483648
    %v4397 = vxor.u32 %v3738, 2147483648
    %v4398 = vxor.u32 %v3836, 2147483648
    %v4399 = vxor.u32 %v3934, 2147483648
    %v4400 = vxor.u32 %v4032, 2147483648
    %v4401 = vxor.u32 %v4130, 2147483648
    %v4402 = vxor.u32 %v4228, 2147483648
    %v4403 = vxor.u32 %v4326, 2147483648
    %v4404 = vxor.u32 %v3741, 2147483648
    %v4405 = vxor.u32 %v3839, 2147483648
    %v4406 = vxor.u32 %v3937, 2147483648
    %v4407 = vxor.u32 %v4035, 2147483648
    %v4408 = vxor.u32 %v4133, 2147483648
    %v4409 = vxor.u32 %v4231, 2147483648
    %v4410 = vxor.u32 %v4329, 2147483648
    %v4411 = vxor.u32 %v3743, 2147483648
    %v4412 = vxor.u32 %v3841, 2147483648
    %v4413 = vxor.u32 %v3939, 2147483648
    %v4414 = vxor.u32 %v4037, 2147483648
    %v4415 = vxor.u32 %v4135, 2147483648
    %v4416 = vxor.u32 %v4233, 2147483648
    %v4417 = vxor.u32 %v4331, 2147483648
    %v4418 = vxor.u32 %v3746, 2147483648
    %v4419 = vxor.u32 %v3844, 2147483648
    %v4420 = vxor.u32 %v3942, 2147483648
    %v4421 = vxor.u32 %v4040, 2147483648
    %v4422 = vxor.u32 %v4138, 2147483648
    %v4423 = vxor.u32 %v4236, 2147483648
    %v4424 = vxor.u32 %v4334, 2147483648
    %v4425 = vxor.u32 %v3748, 2147483648
    %v4426 = vxor.u32 %v3846, 2147483648
    %v4427 = vxor.u32 %v3944, 2147483648
    %v4428 = vxor.u32 %v4042, 2147483648
    %v4429 = vxor.u32 %v4140, 2147483648
    %v4430 = vxor.u32 %v4238, 2147483648
    %v4431 = vxor.u32 %v4336, 2147483648
    %v4432 = vxor.u32 %v3751, 2147483648
    %v4433 = vxor.u32 %v3849, 2147483648
    %v4434 = vxor.u32 %v3947, 2147483648
    %v4435 = vxor.u32 %v4045, 2147483648
    %v4436 = vxor.u32 %v4143, 2147483648
    %v4437 = vxor.u32 %v4241, 2147483648
    %v4438 = vxor.u32 %v4339, 2147483648
    %v4439 = vxor.u32 %v3753, 2147483648
    %v4440 = vxor.u32 %v3851, 2147483648
    %v4441 = vxor.u32 %v3949, 2147483648
    %v4442 = vxor.u32 %v4047, 2147483648
    %v4443 = vxor.u32 %v4145, 2147483648
    %v4444 = vxor.u32 %v4243, 2147483648
    %v4445 = vxor.u32 %v4341, 2147483648
    %v4446 = vxor.u32 %v3756, 2147483648
    %v4447 = vxor.u32 %v3854, 2147483648
    %v4448 = vxor.u32 %v3952, 2147483648
    %v4449 = vxor.u32 %v4050, 2147483648
    %v4450 = vxor.u32 %v4148, 2147483648
    %v4451 = vxor.u32 %v4246, 2147483648
    %v4452 = vxor.u32 %v4344, 2147483648
    %v4453 = vxor.u32 %v3758, 2147483648
    %v4454 = vxor.u32 %v3856, 2147483648
    %v4455 = vxor.u32 %v3954, 2147483648
    %v4456 = vxor.u32 %v4052, 2147483648
    %v4457 = vxor.u32 %v4150, 2147483648
    %v4458 = vxor.u32 %v4248, 2147483648
    %v4459 = vxor.u32 %v4346, 2147483648
    %v4460 = vmul.f32 %v4348, 1.442695
    %v4461 = vpow.pop %v4460
    %v4462 = vmul.f32 %v4349, 1.442695
    %v4463 = vpow.pop %v4462
    %v4464 = vmul.f32 %v4350, 1.442695
    %v4465 = vpow.pop %v4464
    %v4466 = vmul.f32 %v4351, 1.442695
    %v4467 = vpow.pop %v4466
    %v4468 = vmul.f32 %v4352, 1.442695
    %v4469 = vpow.pop %v4468
    %v4470 = vmul.f32 %v4353, 1.442695
    %v4471 = vpow.pop %v4470
    %v4472 = vmul.f32 %v4354, 1.442695
    %v4473 = vpow.pop %v4472
    %v4474 = vmul.f32 %v4355, 1.442695
    %v4475 = vpow.pop %v4474
    %v4476 = vmul.f32 %v4356, 1.442695
    %v4477 = vpow.pop %v4476
    %v4478 = vmul.f32 %v4357, 1.442695
    %v4479 = vpow.pop %v4478
    %v4480 = vmul.f32 %v4358, 1.442695
    %v4481 = vpow.pop %v4480
    %v4482 = vmul.f32 %v4359, 1.442695
    %v4483 = vpow.pop %v4482
    %v4484 = vmul.f32 %v4360, 1.442695
    %v4485 = vpow.pop %v4484
    %v4486 = vmul.f32 %v4361, 1.442695
    %v4487 = vpow.pop %v4486
    %v4488 = vmul.f32 %v4362, 1.442695
    %v4489 = vpow.pop %v4488
    %v4490 = vmul.f32 %v4363, 1.442695
    %v4491 = vpow.pop %v4490
    %v4492 = vmul.f32 %v4364, 1.442695
    %v4493 = vpow.pop %v4492
    %v4494 = vmul.f32 %v4365, 1.442695
    %v4495 = vpow.pop %v4494
    %v4496 = vmul.f32 %v4366, 1.442695
    %v4497 = vpow.pop %v4496
    %v4498 = vmul.f32 %v4367, 1.442695
    %v4499 = vpow.pop %v4498
    %v4500 = vmul.f32 %v4368, 1.442695
    %v4501 = vpow.pop %v4500
    %v4502 = vmul.f32 %v4369, 1.442695
    %v4503 = vpow.pop %v4502
    %v4504 = vmul.f32 %v4370, 1.442695
    %v4505 = vpow.pop %v4504
    %v4506 = vmul.f32 %v4371, 1.442695
    %v4507 = vpow.pop %v4506
    %v4508 = vmul.f32 %v4372, 1.442695
    %v4509 = vpow.pop %v4508
    %v4510 = vmul.f32 %v4373, 1.442695
    %v4511 = vpow.pop %v4510
    %v4512 = vmul.f32 %v4374, 1.442695
    %v4513 = vpow.pop %v4512
    %v4514 = vmul.f32 %v4375, 1.442695
    %v4515 = vpow.pop %v4514
    %v4516 = vmul.f32 %v4376, 1.442695
    %v4517 = vpow.pop %v4516
    %v4518 = vmul.f32 %v4377, 1.442695
    %v4519 = vpow.pop %v4518
    %v4520 = vmul.f32 %v4378, 1.442695
    %v4521 = vpow.pop %v4520
    %v4522 = vmul.f32 %v4379, 1.442695
    %v4523 = vpow.pop %v4522
    %v4524 = vmul.f32 %v4380, 1.442695
    %v4525 = vpow.pop %v4524
    %v4526 = vmul.f32 %v4381, 1.442695
    %v4527 = vpow.pop %v4526
    %v4528 = vmul.f32 %v4382, 1.442695
    %v4529 = vpow.pop %v4528
    %v4530 = vmul.f32 %v4383, 1.442695
    %v4531 = vpow.pop %v4530
    %v4532 = vmul.f32 %v4384, 1.442695
    %v4533 = vpow.pop %v4532
    %v4534 = vmul.f32 %v4385, 1.442695
    %v4535 = vpow.pop %v4534
    %v4536 = vmul.f32 %v4386, 1.442695
    %v4537 = vpow.pop %v4536
    %v4538 = vmul.f32 %v4387, 1.442695
    %v4539 = vpow.pop %v4538
    %v4540 = vmul.f32 %v4388, 1.442695
    %v4541 = vpow.pop %v4540
    %v4542 = vmul.f32 %v4389, 1.442695
    %v4543 = vpow.pop %v4542
    %v4544 = vmul.f32 %v4390, 1.442695
    %v4545 = vpow.pop %v4544
    %v4546 = vmul.f32 %v4391, 1.442695
    %v4547 = vpow.pop %v4546
    %v4548 = vmul.f32 %v4392, 1.442695
    %v4549 = vpow.pop %v4548
    %v4550 = vmul.f32 %v4393, 1.442695
    %v4551 = vpow.pop %v4550
    %v4552 = vmul.f32 %v4394, 1.442695
    %v4553 = vpow.pop %v4552
    %v4554 = vmul.f32 %v4395, 1.442695
    %v4555 = vpow.pop %v4554
    %v4556 = vmul.f32 %v4396, 1.442695
    %v4557 = vpow.pop %v4556
    %v4558 = vmul.f32 %v4397, 1.442695
    %v4559 = vpow.pop %v4558
    %v4560 = vmul.f32 %v4398, 1.442695
    %v4561 = vpow.pop %v4560
    %v4562 = vmul.f32 %v4399, 1.442695
    %v4563 = vpow.pop %v4562
    %v4564 = vmul.f32 %v4400, 1.442695
    %v4565 = vpow.pop %v4564
    %v4566 = vmul.f32 %v4401, 1.442695
    %v4567 = vpow.pop %v4566
    %v4568 = vmul.f32 %v4402, 1.442695
    %v4569 = vpow.pop %v4568
    %v4570 = vmul.f32 %v4403, 1.442695
    %v4571 = vpow.pop %v4570
    %v4572 = vmul.f32 %v4404, 1.442695
    %v4573 = vpow.pop %v4572
    %v4574 = vmul.f32 %v4405, 1.442695
    %v4575 = vpow.pop %v4574
    %v4576 = vmul.f32 %v4406, 1.442695
    %v4577 = vpow.pop %v4576
    %v4578 = vmul.f32 %v4407, 1.442695
    %v4579 = vpow.pop %v4578
    %v4580 = vmul.f32 %v4408, 1.442695
    %v4581 = vpow.pop %v4580
    %v4582 = vmul.f32 %v4409, 1.442695
    %v4583 = vpow.pop %v4582
    %v4584 = vmul.f32 %v4410, 1.442695
    %v4585 = vpow.pop %v4584
    %v4586 = vmul.f32 %v4411, 1.442695
    %v4587 = vpow.pop %v4586
    %v4588 = vmul.f32 %v4412, 1.442695
    %v4589 = vpow.pop %v4588
    %v4590 = vmul.f32 %v4413, 1.442695
    %v4591 = vpow.pop %v4590
    %v4592 = vmul.f32 %v4414, 1.442695
    %v4593 = vpow.pop %v4592
    %v4594 = vmul.f32 %v4415, 1.442695
    %v4595 = vpow.pop %v4594
    %v4596 = vmul.f32 %v4416, 1.442695
    %v4597 = vpow.pop %v4596
    %v4598 = vmul.f32 %v4417, 1.442695
    %v4599 = vpow.pop %v4598
    %v4600 = vmul.f32 %v4418, 1.442695
    %v4601 = vpow.pop %v4600
    %v4602 = vmul.f32 %v4419, 1.442695
    %v4603 = vpow.pop %v4602
    %v4604 = vmul.f32 %v4420, 1.442695
    %v4605 = vpow.pop %v4604
    %v4606 = vmul.f32 %v4421, 1.442695
    %v4607 = vpow.pop %v4606
    %v4608 = vmul.f32 %v4422, 1.442695
    %v4609 = vpow.pop %v4608
    %v4610 = vmul.f32 %v4423, 1.442695
    %v4611 = vpow.pop %v4610
    %v4612 = vmul.f32 %v4424, 1.442695
    %v4613 = vpow.pop %v4612
    %v4614 = vmul.f32 %v4425, 1.442695
    %v4615 = vpow.pop %v4614
    %v4616 = vmul.f32 %v4426, 1.442695
    %v4617 = vpow.pop %v4616
    %v4618 = vmul.f32 %v4427, 1.442695
    %v4619 = vpow.pop %v4618
    %v4620 = vmul.f32 %v4428, 1.442695
    %v4621 = vpow.pop %v4620
    %v4622 = vmul.f32 %v4429, 1.442695
    %v4623 = vpow.pop %v4622
    %v4624 = vmul.f32 %v4430, 1.442695
    %v4625 = vpow.pop %v4624
    %v4626 = vmul.f32 %v4431, 1.442695
    %v4627 = vpow.pop %v4626
    %v4628 = vmul.f32 %v4432, 1.442695
    %v4629 = vpow.pop %v4628
    %v4630 = vmul.f32 %v4433, 1.442695
    %v4631 = vpow.pop %v4630
    %v4632 = vmul.f32 %v4434, 1.442695
    %v4633 = vpow.pop %v4632
    %v4634 = vmul.f32 %v4435, 1.442695
    %v4635 = vpow.pop %v4634
    %v4636 = vmul.f32 %v4436, 1.442695
    %v4637 = vpow.pop %v4636
    %v4638 = vmul.f32 %v4437, 1.442695
    %v4639 = vpow.pop %v4638
    %v4640 = vmul.f32 %v4438, 1.442695
    %v4641 = vpow.pop %v4640
    %v4642 = vmul.f32 %v4439, 1.442695
    %v4643 = vpow.pop %v4642
    %v4644 = vmul.f32 %v4440, 1.442695
    %v4645 = vpow.pop %v4644
    %v4646 = vmul.f32 %v4441, 1.442695
    %v4647 = vpow.pop %v4646
    %v4648 = vmul.f32 %v4442, 1.442695
    %v4649 = vpow.pop %v4648
    %v4650 = vmul.f32 %v4443, 1.442695
    %v4651 = vpow.pop %v4650
    %v4652 = vmul.f32 %v4444, 1.442695
    %v4653 = vpow.pop %v4652
    %v4654 = vmul.f32 %v4445, 1.442695
    %v4655 = vpow.pop %v4654
    %v4656 = vmul.f32 %v4446, 1.442695
    %v4657 = vpow.pop %v4656
    %v4658 = vmul.f32 %v4447, 1.442695
    %v4659 = vpow.pop %v4658
    %v4660 = vmul.f32 %v4448, 1.442695
    %v4661 = vpow.pop %v4660
    %v4662 = vmul.f32 %v4449, 1.442695
    %v4663 = vpow.pop %v4662
    %v4664 = vmul.f32 %v4450, 1.442695
    %v4665 = vpow.pop %v4664
    %v4666 = vmul.f32 %v4451, 1.442695
    %v4667 = vpow.pop %v4666
    %v4668 = vmul.f32 %v4452, 1.442695
    %v4669 = vpow.pop %v4668
    %v4670 = vmul.f32 %v4453, 1.442695
    %v4671 = vpow.pop %v4670
    %v4672 = vmul.f32 %v4454, 1.442695
    %v4673 = vpow.pop %v4672
    %v4674 = vmul.f32 %v4455, 1.442695
    %v4675 = vpow.pop %v4674
    %v4676 = vmul.f32 %v4456, 1.442695
    %v4677 = vpow.pop %v4676
    %v4678 = vmul.f32 %v4457, 1.442695
    %v4679 = vpow.pop %v4678
    %v4680 = vmul.f32 %v4458, 1.442695
    %v4681 = vpow.pop %v4680
    %v4682 = vmul.f32 %v4459, 1.442695
    %v4683 = vpow.pop %v4682
    %v4684 = vadd.f32 %v4461, 1.0
    %v4685 = vadd.f32 %v4463, 1.0
    %v4686 = vadd.f32 %v4465, 1.0
    %v4687 = vadd.f32 %v4467, 1.0
    %v4688 = vadd.f32 %v4469, 1.0
    %v4689 = vadd.f32 %v4471, 1.0
    %v4690 = vadd.f32 %v4473, 1.0
    %v4691 = vadd.f32 %v4475, 1.0
    %v4692 = vadd.f32 %v4477, 1.0
    %v4693 = vadd.f32 %v4479, 1.0
    %v4694 = vadd.f32 %v4481, 1.0
    %v4695 = vadd.f32 %v4483, 1.0
    %v4696 = vadd.f32 %v4485, 1.0
    %v4697 = vadd.f32 %v4487, 1.0
    %v4698 = vadd.f32 %v4489, 1.0
    %v4699 = vadd.f32 %v4491, 1.0
    %v4700 = vadd.f32 %v4493, 1.0
    %v4701 = vadd.f32 %v4495, 1.0
    %v4702 = vadd.f32 %v4497, 1.0
    %v4703 = vadd.f32 %v4499, 1.0
    %v4704 = vadd.f32 %v4501, 1.0
    %v4705 = vadd.f32 %v4503, 1.0
    %v4706 = vadd.f32 %v4505, 1.0
    %v4707 = vadd.f32 %v4507, 1.0
    %v4708 = vadd.f32 %v4509, 1.0
    %v4709 = vadd.f32 %v4511, 1.0
    %v4710 = vadd.f32 %v4513, 1.0
    %v4711 = vadd.f32 %v4515, 1.0
    %v4712 = vadd.f32 %v4517, 1.0
    %v4713 = vadd.f32 %v4519, 1.0
    %v4714 = vadd.f32 %v4521, 1.0
    %v4715 = vadd.f32 %v4523, 1.0
    %v4716 = vadd.f32 %v4525, 1.0
    %v4717 = vadd.f32 %v4527, 1.0
    %v4718 = vadd.f32 %v4529, 1.0
    %v4719 = vadd.f32 %v4531, 1.0
    %v4720 = vadd.f32 %v4533, 1.0
    %v4721 = vadd.f32 %v4535, 1.0
    %v4722 = vadd.f32 %v4537, 1.0
    %v4723 = vadd.f32 %v4539, 1.0
    %v4724 = vadd.f32 %v4541, 1.0
    %v4725 = vadd.f32 %v4543, 1.0
    %v4726 = vadd.f32 %v4545, 1.0
    %v4727 = vadd.f32 %v4547, 1.0
    %v4728 = vadd.f32 %v4549, 1.0
    %v4729 = vadd.f32 %v4551, 1.0
    %v4730 = vadd.f32 %v4553, 1.0
    %v4731 = vadd.f32 %v4555, 1.0
    %v4732 = vadd.f32 %v4557, 1.0
    %v4733 = vadd.f32 %v4559, 1.0
    %v4734 = vadd.f32 %v4561, 1.0
    %v4735 = vadd.f32 %v4563, 1.0
    %v4736 = vadd.f32 %v4565, 1.0
    %v4737 = vadd.f32 %v4567, 1.0
    %v4738 = vadd.f32 %v4569, 1.0
    %v4739 = vadd.f32 %v4571, 1.0
    %v4740 = vadd.f32 %v4573, 1.0
    %v4741 = vadd.f32 %v4575, 1.0
    %v4742 = vadd.f32 %v4577, 1.0
    %v4743 = vadd.f32 %v4579, 1.0
    %v4744 = vadd.f32 %v4581, 1.0
    %v4745 = vadd.f32 %v4583, 1.0
    %v4746 = vadd.f32 %v4585, 1.0
    %v4747 = vadd.f32 %v4587, 1.0
    %v4748 = vadd.f32 %v4589, 1.0
    %v4749 = vadd.f32 %v4591, 1.0
    %v4750 = vadd.f32 %v4593, 1.0
    %v4751 = vadd.f32 %v4595, 1.0
    %v4752 = vadd.f32 %v4597, 1.0
    %v4753 = vadd.f32 %v4599, 1.0
    %v4754 = vadd.f32 %v4601, 1.0
    %v4755 = vadd.f32 %v4603, 1.0
    %v4756 = vadd.f32 %v4605, 1.0
    %v4757 = vadd.f32 %v4607, 1.0
    %v4758 = vadd.f32 %v4609, 1.0
    %v4759 = vadd.f32 %v4611, 1.0
    %v4760 = vadd.f32 %v4613, 1.0
    %v4761 = vadd.f32 %v4615, 1.0
    %v4762 = vadd.f32 %v4617, 1.0
    %v4763 = vadd.f32 %v4619, 1.0
    %v4764 = vadd.f32 %v4621, 1.0
    %v4765 = vadd.f32 %v4623, 1.0
    %v4766 = vadd.f32 %v4625, 1.0
    %v4767 = vadd.f32 %v4627, 1.0
    %v4768 = vadd.f32 %v4629, 1.0
    %v4769 = vadd.f32 %v4631, 1.0
    %v4770 = vadd.f32 %v4633, 1.0
    %v4771 = vadd.f32 %v4635, 1.0
    %v4772 = vadd.f32 %v4637, 1.0
    %v4773 = vadd.f32 %v4639, 1.0
    %v4774 = vadd.f32 %v4641, 1.0
    %v4775 = vadd.f32 %v4643, 1.0
    %v4776 = vadd.f32 %v4645, 1.0
    %v4777 = vadd.f32 %v4647, 1.0
    %v4778 = vadd.f32 %v4649, 1.0
    %v4779 = vadd.f32 %v4651, 1.0
    %v4780 = vadd.f32 %v4653, 1.0
    %v4781 = vadd.f32 %v4655, 1.0
    %v4782 = vadd.f32 %v4657, 1.0
    %v4783 = vadd.f32 %v4659, 1.0
    %v4784 = vadd.f32 %v4661, 1.0
    %v4785 = vadd.f32 %v4663, 1.0
    %v4786 = vadd.f32 %v4665, 1.0
    %v4787 = vadd.f32 %v4667, 1.0
    %v4788 = vadd.f32 %v4669, 1.0
    %v4789 = vadd.f32 %v4671, 1.0
    %v4790 = vadd.f32 %v4673, 1.0
    %v4791 = vadd.f32 %v4675, 1.0
    %v4792 = vadd.f32 %v4677, 1.0
    %v4793 = vadd.f32 %v4679, 1.0
    %v4794 = vadd.f32 %v4681, 1.0
    %v4795 = vadd.f32 %v4683, 1.0
    %v4796 = vrcp.pop %v4684
    %v4797 = vmul.f32 %v4684, %v4796
    %v4798 = vsub.f32 1.0, %v4797
    %v4799 = vmul.f32 %v4796, %v4798
    %v4800 = vadd.f32 %v4796, %v4799
    %vm4801 = vweird.f32 %v4684
    %vm4802 = vweird.f32 %v4796
    %vm4803 = vmor %vm4801, %vm4802
    %v4804 = vsel %vm4803, %v4796, %v4800
    %v4805 = vand.u32 2147483647, %v4684
    %vm4806 = vcmp.eq.f32.partialorder %v4805, 8.507059e+37
    %v4807 = vand.u32 %v4684, 2147483648
    %v4808 = vor.u32 1.1754944e-38, %v4807
    %v4809 = vsel %vm4806, %v4808, %v4804
    %v4810 = vmul.f32 1.0, %v4809
    %v4811 = vrcp.pop %v4685
    %v4812 = vmul.f32 %v4685, %v4811
    %v4813 = vsub.f32 1.0, %v4812
    %v4814 = vmul.f32 %v4811, %v4813
    %v4815 = vadd.f32 %v4811, %v4814
    %vm4816 = vweird.f32 %v4685
    %vm4817 = vweird.f32 %v4811
    %vm4818 = vmor %vm4816, %vm4817
    %v4819 = vsel %vm4818, %v4811, %v4815
    %v4820 = vand.u32 2147483647, %v4685
    %vm4821 = vcmp.eq.f32.partialorder %v4820, 8.507059e+37
    %v4822 = vand.u32 %v4685, 2147483648
    %v4823 = vor.u32 1.1754944e-38, %v4822
    %v4824 = vsel %vm4821, %v4823, %v4819
    %v4825 = vmul.f32 1.0, %v4824
    %v4826 = vrcp.pop %v4686
    %v4827 = vmul.f32 %v4686, %v4826
    %v4828 = vsub.f32 1.0, %v4827
    %v4829 = vmul.f32 %v4826, %v4828
    %v4830 = vadd.f32 %v4826, %v4829
    %vm4831 = vweird.f32 %v4686
    %vm4832 = vweird.f32 %v4826
    %vm4833 = vmor %vm4831, %vm4832
    %v4834 = vsel %vm4833, %v4826, %v4830
    %v4835 = vand.u32 2147483647, %v4686
    %vm4836 = vcmp.eq.f32.partialorder %v4835, 8.507059e+37
    %v4837 = vand.u32 %v4686, 2147483648
    %v4838 = vor.u32 1.1754944e-38, %v4837
    %v4839 = vsel %vm4836, %v4838, %v4834
    %v4840 = vmul.f32 1.0, %v4839
    %v4841 = vrcp.pop %v4687
    %v4842 = vmul.f32 %v4687, %v4841
    %v4843 = vsub.f32 1.0, %v4842
    %v4844 = vmul.f32 %v4841, %v4843
    %v4845 = vadd.f32 %v4841, %v4844
    %vm4846 = vweird.f32 %v4687
    %vm4847 = vweird.f32 %v4841
    %vm4848 = vmor %vm4846, %vm4847
    %v4849 = vsel %vm4848, %v4841, %v4845
    %v4850 = vand.u32 2147483647, %v4687
    %vm4851 = vcmp.eq.f32.partialorder %v4850, 8.507059e+37
    %v4852 = vand.u32 %v4687, 2147483648
    %v4853 = vor.u32 1.1754944e-38, %v4852
    %v4854 = vsel %vm4851, %v4853, %v4849
    %v4855 = vmul.f32 1.0, %v4854
    %v4856 = vrcp.pop %v4688
    %v4857 = vmul.f32 %v4688, %v4856
    %v4858 = vsub.f32 1.0, %v4857
    %v4859 = vmul.f32 %v4856, %v4858
    %v4860 = vadd.f32 %v4856, %v4859
    %vm4861 = vweird.f32 %v4688
    %vm4862 = vweird.f32 %v4856
    %vm4863 = vmor %vm4861, %vm4862
    %v4864 = vsel %vm4863, %v4856, %v4860
    %v4865 = vand.u32 2147483647, %v4688
    %vm4866 = vcmp.eq.f32.partialorder %v4865, 8.507059e+37
    %v4867 = vand.u32 %v4688, 2147483648
    %v4868 = vor.u32 1.1754944e-38, %v4867
    %v4869 = vsel %vm4866, %v4868, %v4864
    %v4870 = vmul.f32 1.0, %v4869
    %v4871 = vrcp.pop %v4689
    %v4872 = vmul.f32 %v4689, %v4871
    %v4873 = vsub.f32 1.0, %v4872
    %v4874 = vmul.f32 %v4871, %v4873
    %v4875 = vadd.f32 %v4871, %v4874
    %vm4876 = vweird.f32 %v4689
    %vm4877 = vweird.f32 %v4871
    %vm4878 = vmor %vm4876, %vm4877
    %v4879 = vsel %vm4878, %v4871, %v4875
    %v4880 = vand.u32 2147483647, %v4689
    %vm4881 = vcmp.eq.f32.partialorder %v4880, 8.507059e+37
    %v4882 = vand.u32 %v4689, 2147483648
    %v4883 = vor.u32 1.1754944e-38, %v4882
    %v4884 = vsel %vm4881, %v4883, %v4879
    %v4885 = vmul.f32 1.0, %v4884
    %v4886 = vrcp.pop %v4690
    %v4887 = vmul.f32 %v4690, %v4886
    %v4888 = vsub.f32 1.0, %v4887
    %v4889 = vmul.f32 %v4886, %v4888
    %v4890 = vadd.f32 %v4886, %v4889
    %vm4891 = vweird.f32 %v4690
    %vm4892 = vweird.f32 %v4886
    %vm4893 = vmor %vm4891, %vm4892
    %v4894 = vsel %vm4893, %v4886, %v4890
    %v4895 = vand.u32 2147483647, %v4690
    %vm4896 = vcmp.eq.f32.partialorder %v4895, 8.507059e+37
    %v4897 = vand.u32 %v4690, 2147483648
    %v4898 = vor.u32 1.1754944e-38, %v4897
    %v4899 = vsel %vm4896, %v4898, %v4894
    %v4900 = vmul.f32 1.0, %v4899
    %v4901 = vrcp.pop %v4691
    %v4902 = vmul.f32 %v4691, %v4901
    %v4903 = vsub.f32 1.0, %v4902
    %v4904 = vmul.f32 %v4901, %v4903
    %v4905 = vadd.f32 %v4901, %v4904
    %vm4906 = vweird.f32 %v4691
    %vm4907 = vweird.f32 %v4901
    %vm4908 = vmor %vm4906, %vm4907
    %v4909 = vsel %vm4908, %v4901, %v4905
    %v4910 = vand.u32 2147483647, %v4691
    %vm4911 = vcmp.eq.f32.partialorder %v4910, 8.507059e+37
    %v4912 = vand.u32 %v4691, 2147483648
    %v4913 = vor.u32 1.1754944e-38, %v4912
    %v4914 = vsel %vm4911, %v4913, %v4909
    %v4915 = vmul.f32 1.0, %v4914
    %v4916 = vrcp.pop %v4692
    %v4917 = vmul.f32 %v4692, %v4916
    %v4918 = vsub.f32 1.0, %v4917
    %v4919 = vmul.f32 %v4916, %v4918
    %v4920 = vadd.f32 %v4916, %v4919
    %vm4921 = vweird.f32 %v4692
    %vm4922 = vweird.f32 %v4916
    %vm4923 = vmor %vm4921, %vm4922
    %v4924 = vsel %vm4923, %v4916, %v4920
    %v4925 = vand.u32 2147483647, %v4692
    %vm4926 = vcmp.eq.f32.partialorder %v4925, 8.507059e+37
    %v4927 = vand.u32 %v4692, 2147483648
    %v4928 = vor.u32 1.1754944e-38, %v4927
    %v4929 = vsel %vm4926, %v4928, %v4924
    %v4930 = vmul.f32 1.0, %v4929
    %v4931 = vrcp.pop %v4693
    %v4932 = vmul.f32 %v4693, %v4931
    %v4933 = vsub.f32 1.0, %v4932
    %v4934 = vmul.f32 %v4931, %v4933
    %v4935 = vadd.f32 %v4931, %v4934
    %vm4936 = vweird.f32 %v4693
    %vm4937 = vweird.f32 %v4931
    %vm4938 = vmor %vm4936, %vm4937
    %v4939 = vsel %vm4938, %v4931, %v4935
    %v4940 = vand.u32 2147483647, %v4693
    %vm4941 = vcmp.eq.f32.partialorder %v4940, 8.507059e+37
    %v4942 = vand.u32 %v4693, 2147483648
    %v4943 = vor.u32 1.1754944e-38, %v4942
    %v4944 = vsel %vm4941, %v4943, %v4939
    %v4945 = vmul.f32 1.0, %v4944
    %v4946 = vrcp.pop %v4694
    %v4947 = vmul.f32 %v4694, %v4946
    %v4948 = vsub.f32 1.0, %v4947
    %v4949 = vmul.f32 %v4946, %v4948
    %v4950 = vadd.f32 %v4946, %v4949
    %vm4951 = vweird.f32 %v4694
    %vm4952 = vweird.f32 %v4946
    %vm4953 = vmor %vm4951, %vm4952
    %v4954 = vsel %vm4953, %v4946, %v4950
    %v4955 = vand.u32 2147483647, %v4694
    %vm4956 = vcmp.eq.f32.partialorder %v4955, 8.507059e+37
    %v4957 = vand.u32 %v4694, 2147483648
    %v4958 = vor.u32 1.1754944e-38, %v4957
    %v4959 = vsel %vm4956, %v4958, %v4954
    %v4960 = vmul.f32 1.0, %v4959
    %v4961 = vrcp.pop %v4695
    %v4962 = vmul.f32 %v4695, %v4961
    %v4963 = vsub.f32 1.0, %v4962
    %v4964 = vmul.f32 %v4961, %v4963
    %v4965 = vadd.f32 %v4961, %v4964
    %vm4966 = vweird.f32 %v4695
    %vm4967 = vweird.f32 %v4961
    %vm4968 = vmor %vm4966, %vm4967
    %v4969 = vsel %vm4968, %v4961, %v4965
    %v4970 = vand.u32 2147483647, %v4695
    %vm4971 = vcmp.eq.f32.partialorder %v4970, 8.507059e+37
    %v4972 = vand.u32 %v4695, 2147483648
    %v4973 = vor.u32 1.1754944e-38, %v4972
    %v4974 = vsel %vm4971, %v4973, %v4969
    %v4975 = vmul.f32 1.0, %v4974
    %v4976 = vrcp.pop %v4696
    %v4977 = vmul.f32 %v4696, %v4976
    %v4978 = vsub.f32 1.0, %v4977
    %v4979 = vmul.f32 %v4976, %v4978
    %v4980 = vadd.f32 %v4976, %v4979
    %vm4981 = vweird.f32 %v4696
    %vm4982 = vweird.f32 %v4976
    %vm4983 = vmor %vm4981, %vm4982
    %v4984 = vsel %vm4983, %v4976, %v4980
    %v4985 = vand.u32 2147483647, %v4696
    %vm4986 = vcmp.eq.f32.partialorder %v4985, 8.507059e+37
    %v4987 = vand.u32 %v4696, 2147483648
    %v4988 = vor.u32 1.1754944e-38, %v4987
    %v4989 = vsel %vm4986, %v4988, %v4984
    %v4990 = vmul.f32 1.0, %v4989
    %v4991 = vrcp.pop %v4697
    %v4992 = vmul.f32 %v4697, %v4991
    %v4993 = vsub.f32 1.0, %v4992
    %v4994 = vmul.f32 %v4991, %v4993
    %v4995 = vadd.f32 %v4991, %v4994
    %vm4996 = vweird.f32 %v4697
    %vm4997 = vweird.f32 %v4991
    %vm4998 = vmor %vm4996, %vm4997
    %v4999 = vsel %vm4998, %v4991, %v4995
    %v5000 = vand.u32 2147483647, %v4697
    %vm5001 = vcmp.eq.f32.partialorder %v5000, 8.507059e+37
    %v5002 = vand.u32 %v4697, 2147483648
    %v5003 = vor.u32 1.1754944e-38, %v5002
    %v5004 = vsel %vm5001, %v5003, %v4999
    %v5005 = vmul.f32 1.0, %v5004
    %v5006 = vrcp.pop %v4698
    %v5007 = vmul.f32 %v4698, %v5006
    %v5008 = vsub.f32 1.0, %v5007
    %v5009 = vmul.f32 %v5006, %v5008
    %v5010 = vadd.f32 %v5006, %v5009
    %vm5011 = vweird.f32 %v4698
    %vm5012 = vweird.f32 %v5006
    %vm5013 = vmor %vm5011, %vm5012
    %v5014 = vsel %vm5013, %v5006, %v5010
    %v5015 = vand.u32 2147483647, %v4698
    %vm5016 = vcmp.eq.f32.partialorder %v5015, 8.507059e+37
    %v5017 = vand.u32 %v4698, 2147483648
    %v5018 = vor.u32 1.1754944e-38, %v5017
    %v5019 = vsel %vm5016, %v5018, %v5014
    %v5020 = vmul.f32 1.0, %v5019
    %v5021 = vrcp.pop %v4699
    %v5022 = vmul.f32 %v4699, %v5021
    %v5023 = vsub.f32 1.0, %v5022
    %v5024 = vmul.f32 %v5021, %v5023
    %v5025 = vadd.f32 %v5021, %v5024
    %vm5026 = vweird.f32 %v4699
    %vm5027 = vweird.f32 %v5021
    %vm5028 = vmor %vm5026, %vm5027
    %v5029 = vsel %vm5028, %v5021, %v5025
    %v5030 = vand.u32 2147483647, %v4699
    %vm5031 = vcmp.eq.f32.partialorder %v5030, 8.507059e+37
    %v5032 = vand.u32 %v4699, 2147483648
    %v5033 = vor.u32 1.1754944e-38, %v5032
    %v5034 = vsel %vm5031, %v5033, %v5029
    %v5035 = vmul.f32 1.0, %v5034
    %v5036 = vrcp.pop %v4700
    %v5037 = vmul.f32 %v4700, %v5036
    %v5038 = vsub.f32 1.0, %v5037
    %v5039 = vmul.f32 %v5036, %v5038
    %v5040 = vadd.f32 %v5036, %v5039
    %vm5041 = vweird.f32 %v4700
    %vm5042 = vweird.f32 %v5036
    %vm5043 = vmor %vm5041, %vm5042
    %v5044 = vsel %vm5043, %v5036, %v5040
    %v5045 = vand.u32 2147483647, %v4700
    %vm5046 = vcmp.eq.f32.partialorder %v5045, 8.507059e+37
    %v5047 = vand.u32 %v4700, 2147483648
    %v5048 = vor.u32 1.1754944e-38, %v5047
    %v5049 = vsel %vm5046, %v5048, %v5044
    %v5050 = vmul.f32 1.0, %v5049
    %v5051 = vrcp.pop %v4701
    %v5052 = vmul.f32 %v4701, %v5051
    %v5053 = vsub.f32 1.0, %v5052
    %v5054 = vmul.f32 %v5051, %v5053
    %v5055 = vadd.f32 %v5051, %v5054
    %vm5056 = vweird.f32 %v4701
    %vm5057 = vweird.f32 %v5051
    %vm5058 = vmor %vm5056, %vm5057
    %v5059 = vsel %vm5058, %v5051, %v5055
    %v5060 = vand.u32 2147483647, %v4701
    %vm5061 = vcmp.eq.f32.partialorder %v5060, 8.507059e+37
    %v5062 = vand.u32 %v4701, 2147483648
    %v5063 = vor.u32 1.1754944e-38, %v5062
    %v5064 = vsel %vm5061, %v5063, %v5059
    %v5065 = vmul.f32 1.0, %v5064
    %v5066 = vrcp.pop %v4702
    %v5067 = vmul.f32 %v4702, %v5066
    %v5068 = vsub.f32 1.0, %v5067
    %v5069 = vmul.f32 %v5066, %v5068
    %v5070 = vadd.f32 %v5066, %v5069
    %vm5071 = vweird.f32 %v4702
    %vm5072 = vweird.f32 %v5066
    %vm5073 = vmor %vm5071, %vm5072
    %v5074 = vsel %vm5073, %v5066, %v5070
    %v5075 = vand.u32 2147483647, %v4702
    %vm5076 = vcmp.eq.f32.partialorder %v5075, 8.507059e+37
    %v5077 = vand.u32 %v4702, 2147483648
    %v5078 = vor.u32 1.1754944e-38, %v5077
    %v5079 = vsel %vm5076, %v5078, %v5074
    %v5080 = vmul.f32 1.0, %v5079
    %v5081 = vrcp.pop %v4703
    %v5082 = vmul.f32 %v4703, %v5081
    %v5083 = vsub.f32 1.0, %v5082
    %v5084 = vmul.f32 %v5081, %v5083
    %v5085 = vadd.f32 %v5081, %v5084
    %vm5086 = vweird.f32 %v4703
    %vm5087 = vweird.f32 %v5081
    %vm5088 = vmor %vm5086, %vm5087
    %v5089 = vsel %vm5088, %v5081, %v5085
    %v5090 = vand.u32 2147483647, %v4703
    %vm5091 = vcmp.eq.f32.partialorder %v5090, 8.507059e+37
    %v5092 = vand.u32 %v4703, 2147483648
    %v5093 = vor.u32 1.1754944e-38, %v5092
    %v5094 = vsel %vm5091, %v5093, %v5089
    %v5095 = vmul.f32 1.0, %v5094
    %v5096 = vrcp.pop %v4704
    %v5097 = vmul.f32 %v4704, %v5096
    %v5098 = vsub.f32 1.0, %v5097
    %v5099 = vmul.f32 %v5096, %v5098
    %v5100 = vadd.f32 %v5096, %v5099
    %vm5101 = vweird.f32 %v4704
    %vm5102 = vweird.f32 %v5096
    %vm5103 = vmor %vm5101, %vm5102
    %v5104 = vsel %vm5103, %v5096, %v5100
    %v5105 = vand.u32 2147483647, %v4704
    %vm5106 = vcmp.eq.f32.partialorder %v5105, 8.507059e+37
    %v5107 = vand.u32 %v4704, 2147483648
    %v5108 = vor.u32 1.1754944e-38, %v5107
    %v5109 = vsel %vm5106, %v5108, %v5104
    %v5110 = vmul.f32 1.0, %v5109
    %v5111 = vrcp.pop %v4705
    %v5112 = vmul.f32 %v4705, %v5111
    %v5113 = vsub.f32 1.0, %v5112
    %v5114 = vmul.f32 %v5111, %v5113
    %v5115 = vadd.f32 %v5111, %v5114
    %vm5116 = vweird.f32 %v4705
    %vm5117 = vweird.f32 %v5111
    %vm5118 = vmor %vm5116, %vm5117
    %v5119 = vsel %vm5118, %v5111, %v5115
    %v5120 = vand.u32 2147483647, %v4705
    %vm5121 = vcmp.eq.f32.partialorder %v5120, 8.507059e+37
    %v5122 = vand.u32 %v4705, 2147483648
    %v5123 = vor.u32 1.1754944e-38, %v5122
    %v5124 = vsel %vm5121, %v5123, %v5119
    %v5125 = vmul.f32 1.0, %v5124
    %v5126 = vrcp.pop %v4706
    %v5127 = vmul.f32 %v4706, %v5126
    %v5128 = vsub.f32 1.0, %v5127
    %v5129 = vmul.f32 %v5126, %v5128
    %v5130 = vadd.f32 %v5126, %v5129
    %vm5131 = vweird.f32 %v4706
    %vm5132 = vweird.f32 %v5126
    %vm5133 = vmor %vm5131, %vm5132
    %v5134 = vsel %vm5133, %v5126, %v5130
    %v5135 = vand.u32 2147483647, %v4706
    %vm5136 = vcmp.eq.f32.partialorder %v5135, 8.507059e+37
    %v5137 = vand.u32 %v4706, 2147483648
    %v5138 = vor.u32 1.1754944e-38, %v5137
    %v5139 = vsel %vm5136, %v5138, %v5134
    %v5140 = vmul.f32 1.0, %v5139
    %v5141 = vrcp.pop %v4707
    %v5142 = vmul.f32 %v4707, %v5141
    %v5143 = vsub.f32 1.0, %v5142
    %v5144 = vmul.f32 %v5141, %v5143
    %v5145 = vadd.f32 %v5141, %v5144
    %vm5146 = vweird.f32 %v4707
    %vm5147 = vweird.f32 %v5141
    %vm5148 = vmor %vm5146, %vm5147
    %v5149 = vsel %vm5148, %v5141, %v5145
    %v5150 = vand.u32 2147483647, %v4707
    %vm5151 = vcmp.eq.f32.partialorder %v5150, 8.507059e+37
    %v5152 = vand.u32 %v4707, 2147483648
    %v5153 = vor.u32 1.1754944e-38, %v5152
    %v5154 = vsel %vm5151, %v5153, %v5149
    %v5155 = vmul.f32 1.0, %v5154
    %v5156 = vrcp.pop %v4708
    %v5157 = vmul.f32 %v4708, %v5156
    %v5158 = vsub.f32 1.0, %v5157
    %v5159 = vmul.f32 %v5156, %v5158
    %v5160 = vadd.f32 %v5156, %v5159
    %vm5161 = vweird.f32 %v4708
    %vm5162 = vweird.f32 %v5156
    %vm5163 = vmor %vm5161, %vm5162
    %v5164 = vsel %vm5163, %v5156, %v5160
    %v5165 = vand.u32 2147483647, %v4708
    %vm5166 = vcmp.eq.f32.partialorder %v5165, 8.507059e+37
    %v5167 = vand.u32 %v4708, 2147483648
    %v5168 = vor.u32 1.1754944e-38, %v5167
    %v5169 = vsel %vm5166, %v5168, %v5164
    %v5170 = vmul.f32 1.0, %v5169
    %v5171 = vrcp.pop %v4709
    %v5172 = vmul.f32 %v4709, %v5171
    %v5173 = vsub.f32 1.0, %v5172
    %v5174 = vmul.f32 %v5171, %v5173
    %v5175 = vadd.f32 %v5171, %v5174
    %vm5176 = vweird.f32 %v4709
    %vm5177 = vweird.f32 %v5171
    %vm5178 = vmor %vm5176, %vm5177
    %v5179 = vsel %vm5178, %v5171, %v5175
    %v5180 = vand.u32 2147483647, %v4709
    %vm5181 = vcmp.eq.f32.partialorder %v5180, 8.507059e+37
    %v5182 = vand.u32 %v4709, 2147483648
    %v5183 = vor.u32 1.1754944e-38, %v5182
    %v5184 = vsel %vm5181, %v5183, %v5179
    %v5185 = vmul.f32 1.0, %v5184
    %v5186 = vrcp.pop %v4710
    %v5187 = vmul.f32 %v4710, %v5186
    %v5188 = vsub.f32 1.0, %v5187
    %v5189 = vmul.f32 %v5186, %v5188
    %v5190 = vadd.f32 %v5186, %v5189
    %vm5191 = vweird.f32 %v4710
    %vm5192 = vweird.f32 %v5186
    %vm5193 = vmor %vm5191, %vm5192
    %v5194 = vsel %vm5193, %v5186, %v5190
    %v5195 = vand.u32 2147483647, %v4710
    %vm5196 = vcmp.eq.f32.partialorder %v5195, 8.507059e+37
    %v5197 = vand.u32 %v4710, 2147483648
    %v5198 = vor.u32 1.1754944e-38, %v5197
    %v5199 = vsel %vm5196, %v5198, %v5194
    %v5200 = vmul.f32 1.0, %v5199
    %v5201 = vrcp.pop %v4711
    %v5202 = vmul.f32 %v4711, %v5201
    %v5203 = vsub.f32 1.0, %v5202
    %v5204 = vmul.f32 %v5201, %v5203
    %v5205 = vadd.f32 %v5201, %v5204
    %vm5206 = vweird.f32 %v4711
    %vm5207 = vweird.f32 %v5201
    %vm5208 = vmor %vm5206, %vm5207
    %v5209 = vsel %vm5208, %v5201, %v5205
    %v5210 = vand.u32 2147483647, %v4711
    %vm5211 = vcmp.eq.f32.partialorder %v5210, 8.507059e+37
    %v5212 = vand.u32 %v4711, 2147483648
    %v5213 = vor.u32 1.1754944e-38, %v5212
    %v5214 = vsel %vm5211, %v5213, %v5209
    %v5215 = vmul.f32 1.0, %v5214
    %v5216 = vrcp.pop %v4712
    %v5217 = vmul.f32 %v4712, %v5216
    %v5218 = vsub.f32 1.0, %v5217
    %v5219 = vmul.f32 %v5216, %v5218
    %v5220 = vadd.f32 %v5216, %v5219
    %vm5221 = vweird.f32 %v4712
    %vm5222 = vweird.f32 %v5216
    %vm5223 = vmor %vm5221, %vm5222
    %v5224 = vsel %vm5223, %v5216, %v5220
    %v5225 = vand.u32 2147483647, %v4712
    %vm5226 = vcmp.eq.f32.partialorder %v5225, 8.507059e+37
    %v5227 = vand.u32 %v4712, 2147483648
    %v5228 = vor.u32 1.1754944e-38, %v5227
    %v5229 = vsel %vm5226, %v5228, %v5224
    %v5230 = vmul.f32 1.0, %v5229
    %v5231 = vrcp.pop %v4713
    %v5232 = vmul.f32 %v4713, %v5231
    %v5233 = vsub.f32 1.0, %v5232
    %v5234 = vmul.f32 %v5231, %v5233
    %v5235 = vadd.f32 %v5231, %v5234
    %vm5236 = vweird.f32 %v4713
    %vm5237 = vweird.f32 %v5231
    %vm5238 = vmor %vm5236, %vm5237
    %v5239 = vsel %vm5238, %v5231, %v5235
    %v5240 = vand.u32 2147483647, %v4713
    %vm5241 = vcmp.eq.f32.partialorder %v5240, 8.507059e+37
    %v5242 = vand.u32 %v4713, 2147483648
    %v5243 = vor.u32 1.1754944e-38, %v5242
    %v5244 = vsel %vm5241, %v5243, %v5239
    %v5245 = vmul.f32 1.0, %v5244
    %v5246 = vrcp.pop %v4714
    %v5247 = vmul.f32 %v4714, %v5246
    %v5248 = vsub.f32 1.0, %v5247
    %v5249 = vmul.f32 %v5246, %v5248
    %v5250 = vadd.f32 %v5246, %v5249
    %vm5251 = vweird.f32 %v4714
    %vm5252 = vweird.f32 %v5246
    %vm5253 = vmor %vm5251, %vm5252
    %v5254 = vsel %vm5253, %v5246, %v5250
    %v5255 = vand.u32 2147483647, %v4714
    %vm5256 = vcmp.eq.f32.partialorder %v5255, 8.507059e+37
    %v5257 = vand.u32 %v4714, 2147483648
    %v5258 = vor.u32 1.1754944e-38, %v5257
    %v5259 = vsel %vm5256, %v5258, %v5254
    %v5260 = vmul.f32 1.0, %v5259
    %v5261 = vrcp.pop %v4715
    %v5262 = vmul.f32 %v4715, %v5261
    %v5263 = vsub.f32 1.0, %v5262
    %v5264 = vmul.f32 %v5261, %v5263
    %v5265 = vadd.f32 %v5261, %v5264
    %vm5266 = vweird.f32 %v4715
    %vm5267 = vweird.f32 %v5261
    %vm5268 = vmor %vm5266, %vm5267
    %v5269 = vsel %vm5268, %v5261, %v5265
    %v5270 = vand.u32 2147483647, %v4715
    %vm5271 = vcmp.eq.f32.partialorder %v5270, 8.507059e+37
    %v5272 = vand.u32 %v4715, 2147483648
    %v5273 = vor.u32 1.1754944e-38, %v5272
    %v5274 = vsel %vm5271, %v5273, %v5269
    %v5275 = vmul.f32 1.0, %v5274
    %v5276 = vrcp.pop %v4716
    %v5277 = vmul.f32 %v4716, %v5276
    %v5278 = vsub.f32 1.0, %v5277
    %v5279 = vmul.f32 %v5276, %v5278
    %v5280 = vadd.f32 %v5276, %v5279
    %vm5281 = vweird.f32 %v4716
    %vm5282 = vweird.f32 %v5276
    %vm5283 = vmor %vm5281, %vm5282
    %v5284 = vsel %vm5283, %v5276, %v5280
    %v5285 = vand.u32 2147483647, %v4716
    %vm5286 = vcmp.eq.f32.partialorder %v5285, 8.507059e+37
    %v5287 = vand.u32 %v4716, 2147483648
    %v5288 = vor.u32 1.1754944e-38, %v5287
    %v5289 = vsel %vm5286, %v5288, %v5284
    %v5290 = vmul.f32 1.0, %v5289
    %v5291 = vrcp.pop %v4717
    %v5292 = vmul.f32 %v4717, %v5291
    %v5293 = vsub.f32 1.0, %v5292
    %v5294 = vmul.f32 %v5291, %v5293
    %v5295 = vadd.f32 %v5291, %v5294
    %vm5296 = vweird.f32 %v4717
    %vm5297 = vweird.f32 %v5291
    %vm5298 = vmor %vm5296, %vm5297
    %v5299 = vsel %vm5298, %v5291, %v5295
    %v5300 = vand.u32 2147483647, %v4717
    %vm5301 = vcmp.eq.f32.partialorder %v5300, 8.507059e+37
    %v5302 = vand.u32 %v4717, 2147483648
    %v5303 = vor.u32 1.1754944e-38, %v5302
    %v5304 = vsel %vm5301, %v5303, %v5299
    %v5305 = vmul.f32 1.0, %v5304
    %v5306 = vrcp.pop %v4718
    %v5307 = vmul.f32 %v4718, %v5306
    %v5308 = vsub.f32 1.0, %v5307
    %v5309 = vmul.f32 %v5306, %v5308
    %v5310 = vadd.f32 %v5306, %v5309
    %vm5311 = vweird.f32 %v4718
    %vm5312 = vweird.f32 %v5306
    %vm5313 = vmor %vm5311, %vm5312
    %v5314 = vsel %vm5313, %v5306, %v5310
    %v5315 = vand.u32 2147483647, %v4718
    %vm5316 = vcmp.eq.f32.partialorder %v5315, 8.507059e+37
    %v5317 = vand.u32 %v4718, 2147483648
    %v5318 = vor.u32 1.1754944e-38, %v5317
    %v5319 = vsel %vm5316, %v5318, %v5314
    %v5320 = vmul.f32 1.0, %v5319
    %v5321 = vrcp.pop %v4719
    %v5322 = vmul.f32 %v4719, %v5321
    %v5323 = vsub.f32 1.0, %v5322
    %v5324 = vmul.f32 %v5321, %v5323
    %v5325 = vadd.f32 %v5321, %v5324
    %vm5326 = vweird.f32 %v4719
    %vm5327 = vweird.f32 %v5321
    %vm5328 = vmor %vm5326, %vm5327
    %v5329 = vsel %vm5328, %v5321, %v5325
    %v5330 = vand.u32 2147483647, %v4719
    %vm5331 = vcmp.eq.f32.partialorder %v5330, 8.507059e+37
    %v5332 = vand.u32 %v4719, 2147483648
    %v5333 = vor.u32 1.1754944e-38, %v5332
    %v5334 = vsel %vm5331, %v5333, %v5329
    %v5335 = vmul.f32 1.0, %v5334
    %v5336 = vrcp.pop %v4720
    %v5337 = vmul.f32 %v4720, %v5336
    %v5338 = vsub.f32 1.0, %v5337
    %v5339 = vmul.f32 %v5336, %v5338
    %v5340 = vadd.f32 %v5336, %v5339
    %vm5341 = vweird.f32 %v4720
    %vm5342 = vweird.f32 %v5336
    %vm5343 = vmor %vm5341, %vm5342
    %v5344 = vsel %vm5343, %v5336, %v5340
    %v5345 = vand.u32 2147483647, %v4720
    %vm5346 = vcmp.eq.f32.partialorder %v5345, 8.507059e+37
    %v5347 = vand.u32 %v4720, 2147483648
    %v5348 = vor.u32 1.1754944e-38, %v5347
    %v5349 = vsel %vm5346, %v5348, %v5344
    %v5350 = vmul.f32 1.0, %v5349
    %v5351 = vrcp.pop %v4721
    %v5352 = vmul.f32 %v4721, %v5351
    %v5353 = vsub.f32 1.0, %v5352
    %v5354 = vmul.f32 %v5351, %v5353
    %v5355 = vadd.f32 %v5351, %v5354
    %vm5356 = vweird.f32 %v4721
    %vm5357 = vweird.f32 %v5351
    %vm5358 = vmor %vm5356, %vm5357
    %v5359 = vsel %vm5358, %v5351, %v5355
    %v5360 = vand.u32 2147483647, %v4721
    %vm5361 = vcmp.eq.f32.partialorder %v5360, 8.507059e+37
    %v5362 = vand.u32 %v4721, 2147483648
    %v5363 = vor.u32 1.1754944e-38, %v5362
    %v5364 = vsel %vm5361, %v5363, %v5359
    %v5365 = vmul.f32 1.0, %v5364
    %v5366 = vrcp.pop %v4722
    %v5367 = vmul.f32 %v4722, %v5366
    %v5368 = vsub.f32 1.0, %v5367
    %v5369 = vmul.f32 %v5366, %v5368
    %v5370 = vadd.f32 %v5366, %v5369
    %vm5371 = vweird.f32 %v4722
    %vm5372 = vweird.f32 %v5366
    %vm5373 = vmor %vm5371, %vm5372
    %v5374 = vsel %vm5373, %v5366, %v5370
    %v5375 = vand.u32 2147483647, %v4722
    %vm5376 = vcmp.eq.f32.partialorder %v5375, 8.507059e+37
    %v5377 = vand.u32 %v4722, 2147483648
    %v5378 = vor.u32 1.1754944e-38, %v5377
    %v5379 = vsel %vm5376, %v5378, %v5374
    %v5380 = vmul.f32 1.0, %v5379
    %v5381 = vrcp.pop %v4723
    %v5382 = vmul.f32 %v4723, %v5381
    %v5383 = vsub.f32 1.0, %v5382
    %v5384 = vmul.f32 %v5381, %v5383
    %v5385 = vadd.f32 %v5381, %v5384
    %vm5386 = vweird.f32 %v4723
    %vm5387 = vweird.f32 %v5381
    %vm5388 = vmor %vm5386, %vm5387
    %v5389 = vsel %vm5388, %v5381, %v5385
    %v5390 = vand.u32 2147483647, %v4723
    %vm5391 = vcmp.eq.f32.partialorder %v5390, 8.507059e+37
    %v5392 = vand.u32 %v4723, 2147483648
    %v5393 = vor.u32 1.1754944e-38, %v5392
    %v5394 = vsel %vm5391, %v5393, %v5389
    %v5395 = vmul.f32 1.0, %v5394
    %v5396 = vrcp.pop %v4724
    %v5397 = vmul.f32 %v4724, %v5396
    %v5398 = vsub.f32 1.0, %v5397
    %v5399 = vmul.f32 %v5396, %v5398
    %v5400 = vadd.f32 %v5396, %v5399
    %vm5401 = vweird.f32 %v4724
    %vm5402 = vweird.f32 %v5396
    %vm5403 = vmor %vm5401, %vm5402
    %v5404 = vsel %vm5403, %v5396, %v5400
    %v5405 = vand.u32 2147483647, %v4724
    %vm5406 = vcmp.eq.f32.partialorder %v5405, 8.507059e+37
    %v5407 = vand.u32 %v4724, 2147483648
    %v5408 = vor.u32 1.1754944e-38, %v5407
    %v5409 = vsel %vm5406, %v5408, %v5404
    %v5410 = vmul.f32 1.0, %v5409
    %v5411 = vrcp.pop %v4725
    %v5412 = vmul.f32 %v4725, %v5411
    %v5413 = vsub.f32 1.0, %v5412
    %v5414 = vmul.f32 %v5411, %v5413
    %v5415 = vadd.f32 %v5411, %v5414
    %vm5416 = vweird.f32 %v4725
    %vm5417 = vweird.f32 %v5411
    %vm5418 = vmor %vm5416, %vm5417
    %v5419 = vsel %vm5418, %v5411, %v5415
    %v5420 = vand.u32 2147483647, %v4725
    %vm5421 = vcmp.eq.f32.partialorder %v5420, 8.507059e+37
    %v5422 = vand.u32 %v4725, 2147483648
    %v5423 = vor.u32 1.1754944e-38, %v5422
    %v5424 = vsel %vm5421, %v5423, %v5419
    %v5425 = vmul.f32 1.0, %v5424
    %v5426 = vrcp.pop %v4726
    %v5427 = vmul.f32 %v4726, %v5426
    %v5428 = vsub.f32 1.0, %v5427
    %v5429 = vmul.f32 %v5426, %v5428
    %v5430 = vadd.f32 %v5426, %v5429
    %vm5431 = vweird.f32 %v4726
    %vm5432 = vweird.f32 %v5426
    %vm5433 = vmor %vm5431, %vm5432
    %v5434 = vsel %vm5433, %v5426, %v5430
    %v5435 = vand.u32 2147483647, %v4726
    %vm5436 = vcmp.eq.f32.partialorder %v5435, 8.507059e+37
    %v5437 = vand.u32 %v4726, 2147483648
    %v5438 = vor.u32 1.1754944e-38, %v5437
    %v5439 = vsel %vm5436, %v5438, %v5434
    %v5440 = vmul.f32 1.0, %v5439
    %v5441 = vrcp.pop %v4727
    %v5442 = vmul.f32 %v4727, %v5441
    %v5443 = vsub.f32 1.0, %v5442
    %v5444 = vmul.f32 %v5441, %v5443
    %v5445 = vadd.f32 %v5441, %v5444
    %vm5446 = vweird.f32 %v4727
    %vm5447 = vweird.f32 %v5441
    %vm5448 = vmor %vm5446, %vm5447
    %v5449 = vsel %vm5448, %v5441, %v5445
    %v5450 = vand.u32 2147483647, %v4727
    %vm5451 = vcmp.eq.f32.partialorder %v5450, 8.507059e+37
    %v5452 = vand.u32 %v4727, 2147483648
    %v5453 = vor.u32 1.1754944e-38, %v5452
    %v5454 = vsel %vm5451, %v5453, %v5449
    %v5455 = vmul.f32 1.0, %v5454
    %v5456 = vrcp.pop %v4728
    %v5457 = vmul.f32 %v4728, %v5456
    %v5458 = vsub.f32 1.0, %v5457
    %v5459 = vmul.f32 %v5456, %v5458
    %v5460 = vadd.f32 %v5456, %v5459
    %vm5461 = vweird.f32 %v4728
    %vm5462 = vweird.f32 %v5456
    %vm5463 = vmor %vm5461, %vm5462
    %v5464 = vsel %vm5463, %v5456, %v5460
    %v5465 = vand.u32 2147483647, %v4728
    %vm5466 = vcmp.eq.f32.partialorder %v5465, 8.507059e+37
    %v5467 = vand.u32 %v4728, 2147483648
    %v5468 = vor.u32 1.1754944e-38, %v5467
    %v5469 = vsel %vm5466, %v5468, %v5464
    %v5470 = vmul.f32 1.0, %v5469
    %v5471 = vrcp.pop %v4729
    %v5472 = vmul.f32 %v4729, %v5471
    %v5473 = vsub.f32 1.0, %v5472
    %v5474 = vmul.f32 %v5471, %v5473
    %v5475 = vadd.f32 %v5471, %v5474
    %vm5476 = vweird.f32 %v4729
    %vm5477 = vweird.f32 %v5471
    %vm5478 = vmor %vm5476, %vm5477
    %v5479 = vsel %vm5478, %v5471, %v5475
    %v5480 = vand.u32 2147483647, %v4729
    %vm5481 = vcmp.eq.f32.partialorder %v5480, 8.507059e+37
    %v5482 = vand.u32 %v4729, 2147483648
    %v5483 = vor.u32 1.1754944e-38, %v5482
    %v5484 = vsel %vm5481, %v5483, %v5479
    %v5485 = vmul.f32 1.0, %v5484
    %v5486 = vrcp.pop %v4730
    %v5487 = vmul.f32 %v4730, %v5486
    %v5488 = vsub.f32 1.0, %v5487
    %v5489 = vmul.f32 %v5486, %v5488
    %v5490 = vadd.f32 %v5486, %v5489
    %vm5491 = vweird.f32 %v4730
    %vm5492 = vweird.f32 %v5486
    %vm5493 = vmor %vm5491, %vm5492
    %v5494 = vsel %vm5493, %v5486, %v5490
    %v5495 = vand.u32 2147483647, %v4730
    %vm5496 = vcmp.eq.f32.partialorder %v5495, 8.507059e+37
    %v5497 = vand.u32 %v4730, 2147483648
    %v5498 = vor.u32 1.1754944e-38, %v5497
    %v5499 = vsel %vm5496, %v5498, %v5494
    %v5500 = vmul.f32 1.0, %v5499
    %v5501 = vrcp.pop %v4731
    %v5502 = vmul.f32 %v4731, %v5501
    %v5503 = vsub.f32 1.0, %v5502
    %v5504 = vmul.f32 %v5501, %v5503
    %v5505 = vadd.f32 %v5501, %v5504
    %vm5506 = vweird.f32 %v4731
    %vm5507 = vweird.f32 %v5501
    %vm5508 = vmor %vm5506, %vm5507
    %v5509 = vsel %vm5508, %v5501, %v5505
    %v5510 = vand.u32 2147483647, %v4731
    %vm5511 = vcmp.eq.f32.partialorder %v5510, 8.507059e+37
    %v5512 = vand.u32 %v4731, 2147483648
    %v5513 = vor.u32 1.1754944e-38, %v5512
    %v5514 = vsel %vm5511, %v5513, %v5509
    %v5515 = vmul.f32 1.0, %v5514
    %v5516 = vrcp.pop %v4732
    %v5517 = vmul.f32 %v4732, %v5516
    %v5518 = vsub.f32 1.0, %v5517
    %v5519 = vmul.f32 %v5516, %v5518
    %v5520 = vadd.f32 %v5516, %v5519
    %vm5521 = vweird.f32 %v4732
    %vm5522 = vweird.f32 %v5516
    %vm5523 = vmor %vm5521, %vm5522
    %v5524 = vsel %vm5523, %v5516, %v5520
    %v5525 = vand.u32 2147483647, %v4732
    %vm5526 = vcmp.eq.f32.partialorder %v5525, 8.507059e+37
    %v5527 = vand.u32 %v4732, 2147483648
    %v5528 = vor.u32 1.1754944e-38, %v5527
    %v5529 = vsel %vm5526, %v5528, %v5524
    %v5530 = vmul.f32 1.0, %v5529
    %v5531 = vrcp.pop %v4733
    %v5532 = vmul.f32 %v4733, %v5531
    %v5533 = vsub.f32 1.0, %v5532
    %v5534 = vmul.f32 %v5531, %v5533
    %v5535 = vadd.f32 %v5531, %v5534
    %vm5536 = vweird.f32 %v4733
    %vm5537 = vweird.f32 %v5531
    %vm5538 = vmor %vm5536, %vm5537
    %v5539 = vsel %vm5538, %v5531, %v5535
    %v5540 = vand.u32 2147483647, %v4733
    %vm5541 = vcmp.eq.f32.partialorder %v5540, 8.507059e+37
    %v5542 = vand.u32 %v4733, 2147483648
    %v5543 = vor.u32 1.1754944e-38, %v5542
    %v5544 = vsel %vm5541, %v5543, %v5539
    %v5545 = vmul.f32 1.0, %v5544
    %v5546 = vrcp.pop %v4734
    %v5547 = vmul.f32 %v4734, %v5546
    %v5548 = vsub.f32 1.0, %v5547
    %v5549 = vmul.f32 %v5546, %v5548
    %v5550 = vadd.f32 %v5546, %v5549
    %vm5551 = vweird.f32 %v4734
    %vm5552 = vweird.f32 %v5546
    %vm5553 = vmor %vm5551, %vm5552
    %v5554 = vsel %vm5553, %v5546, %v5550
    %v5555 = vand.u32 2147483647, %v4734
    %vm5556 = vcmp.eq.f32.partialorder %v5555, 8.507059e+37
    %v5557 = vand.u32 %v4734, 2147483648
    %v5558 = vor.u32 1.1754944e-38, %v5557
    %v5559 = vsel %vm5556, %v5558, %v5554
    %v5560 = vmul.f32 1.0, %v5559
    %v5561 = vrcp.pop %v4735
    %v5562 = vmul.f32 %v4735, %v5561
    %v5563 = vsub.f32 1.0, %v5562
    %v5564 = vmul.f32 %v5561, %v5563
    %v5565 = vadd.f32 %v5561, %v5564
    %vm5566 = vweird.f32 %v4735
    %vm5567 = vweird.f32 %v5561
    %vm5568 = vmor %vm5566, %vm5567
    %v5569 = vsel %vm5568, %v5561, %v5565
    %v5570 = vand.u32 2147483647, %v4735
    %vm5571 = vcmp.eq.f32.partialorder %v5570, 8.507059e+37
    %v5572 = vand.u32 %v4735, 2147483648
    %v5573 = vor.u32 1.1754944e-38, %v5572
    %v5574 = vsel %vm5571, %v5573, %v5569
    %v5575 = vmul.f32 1.0, %v5574
    %v5576 = vrcp.pop %v4736
    %v5577 = vmul.f32 %v4736, %v5576
    %v5578 = vsub.f32 1.0, %v5577
    %v5579 = vmul.f32 %v5576, %v5578
    %v5580 = vadd.f32 %v5576, %v5579
    %vm5581 = vweird.f32 %v4736
    %vm5582 = vweird.f32 %v5576
    %vm5583 = vmor %vm5581, %vm5582
    %v5584 = vsel %vm5583, %v5576, %v5580
    %v5585 = vand.u32 2147483647, %v4736
    %vm5586 = vcmp.eq.f32.partialorder %v5585, 8.507059e+37
    %v5587 = vand.u32 %v4736, 2147483648
    %v5588 = vor.u32 1.1754944e-38, %v5587
    %v5589 = vsel %vm5586, %v5588, %v5584
    %v5590 = vmul.f32 1.0, %v5589
    %v5591 = vrcp.pop %v4737
    %v5592 = vmul.f32 %v4737, %v5591
    %v5593 = vsub.f32 1.0, %v5592
    %v5594 = vmul.f32 %v5591, %v5593
    %v5595 = vadd.f32 %v5591, %v5594
    %vm5596 = vweird.f32 %v4737
    %vm5597 = vweird.f32 %v5591
    %vm5598 = vmor %vm5596, %vm5597
    %v5599 = vsel %vm5598, %v5591, %v5595
    %v5600 = vand.u32 2147483647, %v4737
    %vm5601 = vcmp.eq.f32.partialorder %v5600, 8.507059e+37
    %v5602 = vand.u32 %v4737, 2147483648
    %v5603 = vor.u32 1.1754944e-38, %v5602
    %v5604 = vsel %vm5601, %v5603, %v5599
    %v5605 = vmul.f32 1.0, %v5604
    %v5606 = vrcp.pop %v4738
    %v5607 = vmul.f32 %v4738, %v5606
    %v5608 = vsub.f32 1.0, %v5607
    %v5609 = vmul.f32 %v5606, %v5608
    %v5610 = vadd.f32 %v5606, %v5609
    %vm5611 = vweird.f32 %v4738
    %vm5612 = vweird.f32 %v5606
    %vm5613 = vmor %vm5611, %vm5612
    %v5614 = vsel %vm5613, %v5606, %v5610
    %v5615 = vand.u32 2147483647, %v4738
    %vm5616 = vcmp.eq.f32.partialorder %v5615, 8.507059e+37
    %v5617 = vand.u32 %v4738, 2147483648
    %v5618 = vor.u32 1.1754944e-38, %v5617
    %v5619 = vsel %vm5616, %v5618, %v5614
    %v5620 = vmul.f32 1.0, %v5619
    %v5621 = vrcp.pop %v4739
    %v5622 = vmul.f32 %v4739, %v5621
    %v5623 = vsub.f32 1.0, %v5622
    %v5624 = vmul.f32 %v5621, %v5623
    %v5625 = vadd.f32 %v5621, %v5624
    %vm5626 = vweird.f32 %v4739
    %vm5627 = vweird.f32 %v5621
    %vm5628 = vmor %vm5626, %vm5627
    %v5629 = vsel %vm5628, %v5621, %v5625
    %v5630 = vand.u32 2147483647, %v4739
    %vm5631 = vcmp.eq.f32.partialorder %v5630, 8.507059e+37
    %v5632 = vand.u32 %v4739, 2147483648
    %v5633 = vor.u32 1.1754944e-38, %v5632
    %v5634 = vsel %vm5631, %v5633, %v5629
    %v5635 = vmul.f32 1.0, %v5634
    %v5636 = vrcp.pop %v4740
    %v5637 = vmul.f32 %v4740, %v5636
    %v5638 = vsub.f32 1.0, %v5637
    %v5639 = vmul.f32 %v5636, %v5638
    %v5640 = vadd.f32 %v5636, %v5639
    %vm5641 = vweird.f32 %v4740
    %vm5642 = vweird.f32 %v5636
    %vm5643 = vmor %vm5641, %vm5642
    %v5644 = vsel %vm5643, %v5636, %v5640
    %v5645 = vand.u32 2147483647, %v4740
    %vm5646 = vcmp.eq.f32.partialorder %v5645, 8.507059e+37
    %v5647 = vand.u32 %v4740, 2147483648
    %v5648 = vor.u32 1.1754944e-38, %v5647
    %v5649 = vsel %vm5646, %v5648, %v5644
    %v5650 = vmul.f32 1.0, %v5649
    %v5651 = vrcp.pop %v4741
    %v5652 = vmul.f32 %v4741, %v5651
    %v5653 = vsub.f32 1.0, %v5652
    %v5654 = vmul.f32 %v5651, %v5653
    %v5655 = vadd.f32 %v5651, %v5654
    %vm5656 = vweird.f32 %v4741
    %vm5657 = vweird.f32 %v5651
    %vm5658 = vmor %vm5656, %vm5657
    %v5659 = vsel %vm5658, %v5651, %v5655
    %v5660 = vand.u32 2147483647, %v4741
    %vm5661 = vcmp.eq.f32.partialorder %v5660, 8.507059e+37
    %v5662 = vand.u32 %v4741, 2147483648
    %v5663 = vor.u32 1.1754944e-38, %v5662
    %v5664 = vsel %vm5661, %v5663, %v5659
    %v5665 = vmul.f32 1.0, %v5664
    %v5666 = vrcp.pop %v4742
    %v5667 = vmul.f32 %v4742, %v5666
    %v5668 = vsub.f32 1.0, %v5667
    %v5669 = vmul.f32 %v5666, %v5668
    %v5670 = vadd.f32 %v5666, %v5669
    %vm5671 = vweird.f32 %v4742
    %vm5672 = vweird.f32 %v5666
    %vm5673 = vmor %vm5671, %vm5672
    %v5674 = vsel %vm5673, %v5666, %v5670
    %v5675 = vand.u32 2147483647, %v4742
    %vm5676 = vcmp.eq.f32.partialorder %v5675, 8.507059e+37
    %v5677 = vand.u32 %v4742, 2147483648
    %v5678 = vor.u32 1.1754944e-38, %v5677
    %v5679 = vsel %vm5676, %v5678, %v5674
    %v5680 = vmul.f32 1.0, %v5679
    %v5681 = vrcp.pop %v4743
    %v5682 = vmul.f32 %v4743, %v5681
    %v5683 = vsub.f32 1.0, %v5682
    %v5684 = vmul.f32 %v5681, %v5683
    %v5685 = vadd.f32 %v5681, %v5684
    %vm5686 = vweird.f32 %v4743
    %vm5687 = vweird.f32 %v5681
    %vm5688 = vmor %vm5686, %vm5687
    %v5689 = vsel %vm5688, %v5681, %v5685
    %v5690 = vand.u32 2147483647, %v4743
    %vm5691 = vcmp.eq.f32.partialorder %v5690, 8.507059e+37
    %v5692 = vand.u32 %v4743, 2147483648
    %v5693 = vor.u32 1.1754944e-38, %v5692
    %v5694 = vsel %vm5691, %v5693, %v5689
    %v5695 = vmul.f32 1.0, %v5694
    %v5696 = vrcp.pop %v4744
    %v5697 = vmul.f32 %v4744, %v5696
    %v5698 = vsub.f32 1.0, %v5697
    %v5699 = vmul.f32 %v5696, %v5698
    %v5700 = vadd.f32 %v5696, %v5699
    %vm5701 = vweird.f32 %v4744
    %vm5702 = vweird.f32 %v5696
    %vm5703 = vmor %vm5701, %vm5702
    %v5704 = vsel %vm5703, %v5696, %v5700
    %v5705 = vand.u32 2147483647, %v4744
    %vm5706 = vcmp.eq.f32.partialorder %v5705, 8.507059e+37
    %v5707 = vand.u32 %v4744, 2147483648
    %v5708 = vor.u32 1.1754944e-38, %v5707
    %v5709 = vsel %vm5706, %v5708, %v5704
    %v5710 = vmul.f32 1.0, %v5709
    %v5711 = vrcp.pop %v4745
    %v5712 = vmul.f32 %v4745, %v5711
    %v5713 = vsub.f32 1.0, %v5712
    %v5714 = vmul.f32 %v5711, %v5713
    %v5715 = vadd.f32 %v5711, %v5714
    %vm5716 = vweird.f32 %v4745
    %vm5717 = vweird.f32 %v5711
    %vm5718 = vmor %vm5716, %vm5717
    %v5719 = vsel %vm5718, %v5711, %v5715
    %v5720 = vand.u32 2147483647, %v4745
    %vm5721 = vcmp.eq.f32.partialorder %v5720, 8.507059e+37
    %v5722 = vand.u32 %v4745, 2147483648
    %v5723 = vor.u32 1.1754944e-38, %v5722
    %v5724 = vsel %vm5721, %v5723, %v5719
    %v5725 = vmul.f32 1.0, %v5724
    %v5726 = vrcp.pop %v4746
    %v5727 = vmul.f32 %v4746, %v5726
    %v5728 = vsub.f32 1.0, %v5727
    %v5729 = vmul.f32 %v5726, %v5728
    %v5730 = vadd.f32 %v5726, %v5729
    %vm5731 = vweird.f32 %v4746
    %vm5732 = vweird.f32 %v5726
    %vm5733 = vmor %vm5731, %vm5732
    %v5734 = vsel %vm5733, %v5726, %v5730
    %v5735 = vand.u32 2147483647, %v4746
    %vm5736 = vcmp.eq.f32.partialorder %v5735, 8.507059e+37
    %v5737 = vand.u32 %v4746, 2147483648
    %v5738 = vor.u32 1.1754944e-38, %v5737
    %v5739 = vsel %vm5736, %v5738, %v5734
    %v5740 = vmul.f32 1.0, %v5739
    %v5741 = vrcp.pop %v4747
    %v5742 = vmul.f32 %v4747, %v5741
    %v5743 = vsub.f32 1.0, %v5742
    %v5744 = vmul.f32 %v5741, %v5743
    %v5745 = vadd.f32 %v5741, %v5744
    %vm5746 = vweird.f32 %v4747
    %vm5747 = vweird.f32 %v5741
    %vm5748 = vmor %vm5746, %vm5747
    %v5749 = vsel %vm5748, %v5741, %v5745
    %v5750 = vand.u32 2147483647, %v4747
    %vm5751 = vcmp.eq.f32.partialorder %v5750, 8.507059e+37
    %v5752 = vand.u32 %v4747, 2147483648
    %v5753 = vor.u32 1.1754944e-38, %v5752
    %v5754 = vsel %vm5751, %v5753, %v5749
    %v5755 = vmul.f32 1.0, %v5754
    %v5756 = vrcp.pop %v4748
    %v5757 = vmul.f32 %v4748, %v5756
    %v5758 = vsub.f32 1.0, %v5757
    %v5759 = vmul.f32 %v5756, %v5758
    %v5760 = vadd.f32 %v5756, %v5759
    %vm5761 = vweird.f32 %v4748
    %vm5762 = vweird.f32 %v5756
    %vm5763 = vmor %vm5761, %vm5762
    %v5764 = vsel %vm5763, %v5756, %v5760
    %v5765 = vand.u32 2147483647, %v4748
    %vm5766 = vcmp.eq.f32.partialorder %v5765, 8.507059e+37
    %v5767 = vand.u32 %v4748, 2147483648
    %v5768 = vor.u32 1.1754944e-38, %v5767
    %v5769 = vsel %vm5766, %v5768, %v5764
    %v5770 = vmul.f32 1.0, %v5769
    %v5771 = vrcp.pop %v4749
    %v5772 = vmul.f32 %v4749, %v5771
    %v5773 = vsub.f32 1.0, %v5772
    %v5774 = vmul.f32 %v5771, %v5773
    %v5775 = vadd.f32 %v5771, %v5774
    %vm5776 = vweird.f32 %v4749
    %vm5777 = vweird.f32 %v5771
    %vm5778 = vmor %vm5776, %vm5777
    %v5779 = vsel %vm5778, %v5771, %v5775
    %v5780 = vand.u32 2147483647, %v4749
    %vm5781 = vcmp.eq.f32.partialorder %v5780, 8.507059e+37
    %v5782 = vand.u32 %v4749, 2147483648
    %v5783 = vor.u32 1.1754944e-38, %v5782
    %v5784 = vsel %vm5781, %v5783, %v5779
    %v5785 = vmul.f32 1.0, %v5784
    %v5786 = vrcp.pop %v4750
    %v5787 = vmul.f32 %v4750, %v5786
    %v5788 = vsub.f32 1.0, %v5787
    %v5789 = vmul.f32 %v5786, %v5788
    %v5790 = vadd.f32 %v5786, %v5789
    %vm5791 = vweird.f32 %v4750
    %vm5792 = vweird.f32 %v5786
    %vm5793 = vmor %vm5791, %vm5792
    %v5794 = vsel %vm5793, %v5786, %v5790
    %v5795 = vand.u32 2147483647, %v4750
    %vm5796 = vcmp.eq.f32.partialorder %v5795, 8.507059e+37
    %v5797 = vand.u32 %v4750, 2147483648
    %v5798 = vor.u32 1.1754944e-38, %v5797
    %v5799 = vsel %vm5796, %v5798, %v5794
    %v5800 = vmul.f32 1.0, %v5799
    %v5801 = vrcp.pop %v4751
    %v5802 = vmul.f32 %v4751, %v5801
    %v5803 = vsub.f32 1.0, %v5802
    %v5804 = vmul.f32 %v5801, %v5803
    %v5805 = vadd.f32 %v5801, %v5804
    %vm5806 = vweird.f32 %v4751
    %vm5807 = vweird.f32 %v5801
    %vm5808 = vmor %vm5806, %vm5807
    %v5809 = vsel %vm5808, %v5801, %v5805
    %v5810 = vand.u32 2147483647, %v4751
    %vm5811 = vcmp.eq.f32.partialorder %v5810, 8.507059e+37
    %v5812 = vand.u32 %v4751, 2147483648
    %v5813 = vor.u32 1.1754944e-38, %v5812
    %v5814 = vsel %vm5811, %v5813, %v5809
    %v5815 = vmul.f32 1.0, %v5814
    %v5816 = vrcp.pop %v4752
    %v5817 = vmul.f32 %v4752, %v5816
    %v5818 = vsub.f32 1.0, %v5817
    %v5819 = vmul.f32 %v5816, %v5818
    %v5820 = vadd.f32 %v5816, %v5819
    %vm5821 = vweird.f32 %v4752
    %vm5822 = vweird.f32 %v5816
    %vm5823 = vmor %vm5821, %vm5822
    %v5824 = vsel %vm5823, %v5816, %v5820
    %v5825 = vand.u32 2147483647, %v4752
    %vm5826 = vcmp.eq.f32.partialorder %v5825, 8.507059e+37
    %v5827 = vand.u32 %v4752, 2147483648
    %v5828 = vor.u32 1.1754944e-38, %v5827
    %v5829 = vsel %vm5826, %v5828, %v5824
    %v5830 = vmul.f32 1.0, %v5829
    %v5831 = vrcp.pop %v4753
    %v5832 = vmul.f32 %v4753, %v5831
    %v5833 = vsub.f32 1.0, %v5832
    %v5834 = vmul.f32 %v5831, %v5833
    %v5835 = vadd.f32 %v5831, %v5834
    %vm5836 = vweird.f32 %v4753
    %vm5837 = vweird.f32 %v5831
    %vm5838 = vmor %vm5836, %vm5837
    %v5839 = vsel %vm5838, %v5831, %v5835
    %v5840 = vand.u32 2147483647, %v4753
    %vm5841 = vcmp.eq.f32.partialorder %v5840, 8.507059e+37
    %v5842 = vand.u32 %v4753, 2147483648
    %v5843 = vor.u32 1.1754944e-38, %v5842
    %v5844 = vsel %vm5841, %v5843, %v5839
    %v5845 = vmul.f32 1.0, %v5844
    %v5846 = vrcp.pop %v4754
    %v5847 = vmul.f32 %v4754, %v5846
    %v5848 = vsub.f32 1.0, %v5847
    %v5849 = vmul.f32 %v5846, %v5848
    %v5850 = vadd.f32 %v5846, %v5849
    %vm5851 = vweird.f32 %v4754
    %vm5852 = vweird.f32 %v5846
    %vm5853 = vmor %vm5851, %vm5852
    %v5854 = vsel %vm5853, %v5846, %v5850
    %v5855 = vand.u32 2147483647, %v4754
    %vm5856 = vcmp.eq.f32.partialorder %v5855, 8.507059e+37
    %v5857 = vand.u32 %v4754, 2147483648
    %v5858 = vor.u32 1.1754944e-38, %v5857
    %v5859 = vsel %vm5856, %v5858, %v5854
    %v5860 = vmul.f32 1.0, %v5859
    %v5861 = vrcp.pop %v4755
    %v5862 = vmul.f32 %v4755, %v5861
    %v5863 = vsub.f32 1.0, %v5862
    %v5864 = vmul.f32 %v5861, %v5863
    %v5865 = vadd.f32 %v5861, %v5864
    %vm5866 = vweird.f32 %v4755
    %vm5867 = vweird.f32 %v5861
    %vm5868 = vmor %vm5866, %vm5867
    %v5869 = vsel %vm5868, %v5861, %v5865
    %v5870 = vand.u32 2147483647, %v4755
    %vm5871 = vcmp.eq.f32.partialorder %v5870, 8.507059e+37
    %v5872 = vand.u32 %v4755, 2147483648
    %v5873 = vor.u32 1.1754944e-38, %v5872
    %v5874 = vsel %vm5871, %v5873, %v5869
    %v5875 = vmul.f32 1.0, %v5874
    %v5876 = vrcp.pop %v4756
    %v5877 = vmul.f32 %v4756, %v5876
    %v5878 = vsub.f32 1.0, %v5877
    %v5879 = vmul.f32 %v5876, %v5878
    %v5880 = vadd.f32 %v5876, %v5879
    %vm5881 = vweird.f32 %v4756
    %vm5882 = vweird.f32 %v5876
    %vm5883 = vmor %vm5881, %vm5882
    %v5884 = vsel %vm5883, %v5876, %v5880
    %v5885 = vand.u32 2147483647, %v4756
    %vm5886 = vcmp.eq.f32.partialorder %v5885, 8.507059e+37
    %v5887 = vand.u32 %v4756, 2147483648
    %v5888 = vor.u32 1.1754944e-38, %v5887
    %v5889 = vsel %vm5886, %v5888, %v5884
    %v5890 = vmul.f32 1.0, %v5889
    %v5891 = vrcp.pop %v4757
    %v5892 = vmul.f32 %v4757, %v5891
    %v5893 = vsub.f32 1.0, %v5892
    %v5894 = vmul.f32 %v5891, %v5893
    %v5895 = vadd.f32 %v5891, %v5894
    %vm5896 = vweird.f32 %v4757
    %vm5897 = vweird.f32 %v5891
    %vm5898 = vmor %vm5896, %vm5897
    %v5899 = vsel %vm5898, %v5891, %v5895
    %v5900 = vand.u32 2147483647, %v4757
    %vm5901 = vcmp.eq.f32.partialorder %v5900, 8.507059e+37
    %v5902 = vand.u32 %v4757, 2147483648
    %v5903 = vor.u32 1.1754944e-38, %v5902
    %v5904 = vsel %vm5901, %v5903, %v5899
    %v5905 = vmul.f32 1.0, %v5904
    %v5906 = vrcp.pop %v4758
    %v5907 = vmul.f32 %v4758, %v5906
    %v5908 = vsub.f32 1.0, %v5907
    %v5909 = vmul.f32 %v5906, %v5908
    %v5910 = vadd.f32 %v5906, %v5909
    %vm5911 = vweird.f32 %v4758
    %vm5912 = vweird.f32 %v5906
    %vm5913 = vmor %vm5911, %vm5912
    %v5914 = vsel %vm5913, %v5906, %v5910
    %v5915 = vand.u32 2147483647, %v4758
    %vm5916 = vcmp.eq.f32.partialorder %v5915, 8.507059e+37
    %v5917 = vand.u32 %v4758, 2147483648
    %v5918 = vor.u32 1.1754944e-38, %v5917
    %v5919 = vsel %vm5916, %v5918, %v5914
    %v5920 = vmul.f32 1.0, %v5919
    %v5921 = vrcp.pop %v4759
    %v5922 = vmul.f32 %v4759, %v5921
    %v5923 = vsub.f32 1.0, %v5922
    %v5924 = vmul.f32 %v5921, %v5923
    %v5925 = vadd.f32 %v5921, %v5924
    %vm5926 = vweird.f32 %v4759
    %vm5927 = vweird.f32 %v5921
    %vm5928 = vmor %vm5926, %vm5927
    %v5929 = vsel %vm5928, %v5921, %v5925
    %v5930 = vand.u32 2147483647, %v4759
    %vm5931 = vcmp.eq.f32.partialorder %v5930, 8.507059e+37
    %v5932 = vand.u32 %v4759, 2147483648
    %v5933 = vor.u32 1.1754944e-38, %v5932
    %v5934 = vsel %vm5931, %v5933, %v5929
    %v5935 = vmul.f32 1.0, %v5934
    %v5936 = vrcp.pop %v4760
    %v5937 = vmul.f32 %v4760, %v5936
    %v5938 = vsub.f32 1.0, %v5937
    %v5939 = vmul.f32 %v5936, %v5938
    %v5940 = vadd.f32 %v5936, %v5939
    %vm5941 = vweird.f32 %v4760
    %vm5942 = vweird.f32 %v5936
    %vm5943 = vmor %vm5941, %vm5942
    %v5944 = vsel %vm5943, %v5936, %v5940
    %v5945 = vand.u32 2147483647, %v4760
    %vm5946 = vcmp.eq.f32.partialorder %v5945, 8.507059e+37
    %v5947 = vand.u32 %v4760, 2147483648
    %v5948 = vor.u32 1.1754944e-38, %v5947
    %v5949 = vsel %vm5946, %v5948, %v5944
    %v5950 = vmul.f32 1.0, %v5949
    %v5951 = vrcp.pop %v4761
    %v5952 = vmul.f32 %v4761, %v5951
    %v5953 = vsub.f32 1.0, %v5952
    %v5954 = vmul.f32 %v5951, %v5953
    %v5955 = vadd.f32 %v5951, %v5954
    %vm5956 = vweird.f32 %v4761
    %vm5957 = vweird.f32 %v5951
    %vm5958 = vmor %vm5956, %vm5957
    %v5959 = vsel %vm5958, %v5951, %v5955
    %v5960 = vand.u32 2147483647, %v4761
    %vm5961 = vcmp.eq.f32.partialorder %v5960, 8.507059e+37
    %v5962 = vand.u32 %v4761, 2147483648
    %v5963 = vor.u32 1.1754944e-38, %v5962
    %v5964 = vsel %vm5961, %v5963, %v5959
    %v5965 = vmul.f32 1.0, %v5964
    %v5966 = vrcp.pop %v4762
    %v5967 = vmul.f32 %v4762, %v5966
    %v5968 = vsub.f32 1.0, %v5967
    %v5969 = vmul.f32 %v5966, %v5968
    %v5970 = vadd.f32 %v5966, %v5969
    %vm5971 = vweird.f32 %v4762
    %vm5972 = vweird.f32 %v5966
    %vm5973 = vmor %vm5971, %vm5972
    %v5974 = vsel %vm5973, %v5966, %v5970
    %v5975 = vand.u32 2147483647, %v4762
    %vm5976 = vcmp.eq.f32.partialorder %v5975, 8.507059e+37
    %v5977 = vand.u32 %v4762, 2147483648
    %v5978 = vor.u32 1.1754944e-38, %v5977
    %v5979 = vsel %vm5976, %v5978, %v5974
    %v5980 = vmul.f32 1.0, %v5979
    %v5981 = vrcp.pop %v4763
    %v5982 = vmul.f32 %v4763, %v5981
    %v5983 = vsub.f32 1.0, %v5982
    %v5984 = vmul.f32 %v5981, %v5983
    %v5985 = vadd.f32 %v5981, %v5984
    %vm5986 = vweird.f32 %v4763
    %vm5987 = vweird.f32 %v5981
    %vm5988 = vmor %vm5986, %vm5987
    %v5989 = vsel %vm5988, %v5981, %v5985
    %v5990 = vand.u32 2147483647, %v4763
    %vm5991 = vcmp.eq.f32.partialorder %v5990, 8.507059e+37
    %v5992 = vand.u32 %v4763, 2147483648
    %v5993 = vor.u32 1.1754944e-38, %v5992
    %v5994 = vsel %vm5991, %v5993, %v5989
    %v5995 = vmul.f32 1.0, %v5994
    %v5996 = vrcp.pop %v4764
    %v5997 = vmul.f32 %v4764, %v5996
    %v5998 = vsub.f32 1.0, %v5997
    %v5999 = vmul.f32 %v5996, %v5998
    %v6000 = vadd.f32 %v5996, %v5999
    %vm6001 = vweird.f32 %v4764
    %vm6002 = vweird.f32 %v5996
    %vm6003 = vmor %vm6001, %vm6002
    %v6004 = vsel %vm6003, %v5996, %v6000
    %v6005 = vand.u32 2147483647, %v4764
    %vm6006 = vcmp.eq.f32.partialorder %v6005, 8.507059e+37
    %v6007 = vand.u32 %v4764, 2147483648
    %v6008 = vor.u32 1.1754944e-38, %v6007
    %v6009 = vsel %vm6006, %v6008, %v6004
    %v6010 = vmul.f32 1.0, %v6009
    %v6011 = vrcp.pop %v4765
    %v6012 = vmul.f32 %v4765, %v6011
    %v6013 = vsub.f32 1.0, %v6012
    %v6014 = vmul.f32 %v6011, %v6013
    %v6015 = vadd.f32 %v6011, %v6014
    %vm6016 = vweird.f32 %v4765
    %vm6017 = vweird.f32 %v6011
    %vm6018 = vmor %vm6016, %vm6017
    %v6019 = vsel %vm6018, %v6011, %v6015
    %v6020 = vand.u32 2147483647, %v4765
    %vm6021 = vcmp.eq.f32.partialorder %v6020, 8.507059e+37
    %v6022 = vand.u32 %v4765, 2147483648
    %v6023 = vor.u32 1.1754944e-38, %v6022
    %v6024 = vsel %vm6021, %v6023, %v6019
    %v6025 = vmul.f32 1.0, %v6024
    %v6026 = vrcp.pop %v4766
    %v6027 = vmul.f32 %v4766, %v6026
    %v6028 = vsub.f32 1.0, %v6027
    %v6029 = vmul.f32 %v6026, %v6028
    %v6030 = vadd.f32 %v6026, %v6029
    %vm6031 = vweird.f32 %v4766
    %vm6032 = vweird.f32 %v6026
    %vm6033 = vmor %vm6031, %vm6032
    %v6034 = vsel %vm6033, %v6026, %v6030
    %v6035 = vand.u32 2147483647, %v4766
    %vm6036 = vcmp.eq.f32.partialorder %v6035, 8.507059e+37
    %v6037 = vand.u32 %v4766, 2147483648
    %v6038 = vor.u32 1.1754944e-38, %v6037
    %v6039 = vsel %vm6036, %v6038, %v6034
    %v6040 = vmul.f32 1.0, %v6039
    %v6041 = vrcp.pop %v4767
    %v6042 = vmul.f32 %v4767, %v6041
    %v6043 = vsub.f32 1.0, %v6042
    %v6044 = vmul.f32 %v6041, %v6043
    %v6045 = vadd.f32 %v6041, %v6044
    %vm6046 = vweird.f32 %v4767
    %vm6047 = vweird.f32 %v6041
    %vm6048 = vmor %vm6046, %vm6047
    %v6049 = vsel %vm6048, %v6041, %v6045
    %v6050 = vand.u32 2147483647, %v4767
    %vm6051 = vcmp.eq.f32.partialorder %v6050, 8.507059e+37
    %v6052 = vand.u32 %v4767, 2147483648
    %v6053 = vor.u32 1.1754944e-38, %v6052
    %v6054 = vsel %vm6051, %v6053, %v6049
    %v6055 = vmul.f32 1.0, %v6054
    %v6056 = vrcp.pop %v4768
    %v6057 = vmul.f32 %v4768, %v6056
    %v6058 = vsub.f32 1.0, %v6057
    %v6059 = vmul.f32 %v6056, %v6058
    %v6060 = vadd.f32 %v6056, %v6059
    %vm6061 = vweird.f32 %v4768
    %vm6062 = vweird.f32 %v6056
    %vm6063 = vmor %vm6061, %vm6062
    %v6064 = vsel %vm6063, %v6056, %v6060
    %v6065 = vand.u32 2147483647, %v4768
    %vm6066 = vcmp.eq.f32.partialorder %v6065, 8.507059e+37
    %v6067 = vand.u32 %v4768, 2147483648
    %v6068 = vor.u32 1.1754944e-38, %v6067
    %v6069 = vsel %vm6066, %v6068, %v6064
    %v6070 = vmul.f32 1.0, %v6069
    %v6071 = vrcp.pop %v4769
    %v6072 = vmul.f32 %v4769, %v6071
    %v6073 = vsub.f32 1.0, %v6072
    %v6074 = vmul.f32 %v6071, %v6073
    %v6075 = vadd.f32 %v6071, %v6074
    %vm6076 = vweird.f32 %v4769
    %vm6077 = vweird.f32 %v6071
    %vm6078 = vmor %vm6076, %vm6077
    %v6079 = vsel %vm6078, %v6071, %v6075
    %v6080 = vand.u32 2147483647, %v4769
    %vm6081 = vcmp.eq.f32.partialorder %v6080, 8.507059e+37
    %v6082 = vand.u32 %v4769, 2147483648
    %v6083 = vor.u32 1.1754944e-38, %v6082
    %v6084 = vsel %vm6081, %v6083, %v6079
    %v6085 = vmul.f32 1.0, %v6084
    %v6086 = vrcp.pop %v4770
    %v6087 = vmul.f32 %v4770, %v6086
    %v6088 = vsub.f32 1.0, %v6087
    %v6089 = vmul.f32 %v6086, %v6088
    %v6090 = vadd.f32 %v6086, %v6089
    %vm6091 = vweird.f32 %v4770
    %vm6092 = vweird.f32 %v6086
    %vm6093 = vmor %vm6091, %vm6092
    %v6094 = vsel %vm6093, %v6086, %v6090
    %v6095 = vand.u32 2147483647, %v4770
    %vm6096 = vcmp.eq.f32.partialorder %v6095, 8.507059e+37
    %v6097 = vand.u32 %v4770, 2147483648
    %v6098 = vor.u32 1.1754944e-38, %v6097
    %v6099 = vsel %vm6096, %v6098, %v6094
    %v6100 = vmul.f32 1.0, %v6099
    %v6101 = vrcp.pop %v4771
    %v6102 = vmul.f32 %v4771, %v6101
    %v6103 = vsub.f32 1.0, %v6102
    %v6104 = vmul.f32 %v6101, %v6103
    %v6105 = vadd.f32 %v6101, %v6104
    %vm6106 = vweird.f32 %v4771
    %vm6107 = vweird.f32 %v6101
    %vm6108 = vmor %vm6106, %vm6107
    %v6109 = vsel %vm6108, %v6101, %v6105
    %v6110 = vand.u32 2147483647, %v4771
    %vm6111 = vcmp.eq.f32.partialorder %v6110, 8.507059e+37
    %v6112 = vand.u32 %v4771, 2147483648
    %v6113 = vor.u32 1.1754944e-38, %v6112
    %v6114 = vsel %vm6111, %v6113, %v6109
    %v6115 = vmul.f32 1.0, %v6114
    %v6116 = vrcp.pop %v4772
    %v6117 = vmul.f32 %v4772, %v6116
    %v6118 = vsub.f32 1.0, %v6117
    %v6119 = vmul.f32 %v6116, %v6118
    %v6120 = vadd.f32 %v6116, %v6119
    %vm6121 = vweird.f32 %v4772
    %vm6122 = vweird.f32 %v6116
    %vm6123 = vmor %vm6121, %vm6122
    %v6124 = vsel %vm6123, %v6116, %v6120
    %v6125 = vand.u32 2147483647, %v4772
    %vm6126 = vcmp.eq.f32.partialorder %v6125, 8.507059e+37
    %v6127 = vand.u32 %v4772, 2147483648
    %v6128 = vor.u32 1.1754944e-38, %v6127
    %v6129 = vsel %vm6126, %v6128, %v6124
    %v6130 = vmul.f32 1.0, %v6129
    %v6131 = vrcp.pop %v4773
    %v6132 = vmul.f32 %v4773, %v6131
    %v6133 = vsub.f32 1.0, %v6132
    %v6134 = vmul.f32 %v6131, %v6133
    %v6135 = vadd.f32 %v6131, %v6134
    %vm6136 = vweird.f32 %v4773
    %vm6137 = vweird.f32 %v6131
    %vm6138 = vmor %vm6136, %vm6137
    %v6139 = vsel %vm6138, %v6131, %v6135
    %v6140 = vand.u32 2147483647, %v4773
    %vm6141 = vcmp.eq.f32.partialorder %v6140, 8.507059e+37
    %v6142 = vand.u32 %v4773, 2147483648
    %v6143 = vor.u32 1.1754944e-38, %v6142
    %v6144 = vsel %vm6141, %v6143, %v6139
    %v6145 = vmul.f32 1.0, %v6144
    %v6146 = vrcp.pop %v4774
    %v6147 = vmul.f32 %v4774, %v6146
    %v6148 = vsub.f32 1.0, %v6147
    %v6149 = vmul.f32 %v6146, %v6148
    %v6150 = vadd.f32 %v6146, %v6149
    %vm6151 = vweird.f32 %v4774
    %vm6152 = vweird.f32 %v6146
    %vm6153 = vmor %vm6151, %vm6152
    %v6154 = vsel %vm6153, %v6146, %v6150
    %v6155 = vand.u32 2147483647, %v4774
    %vm6156 = vcmp.eq.f32.partialorder %v6155, 8.507059e+37
    %v6157 = vand.u32 %v4774, 2147483648
    %v6158 = vor.u32 1.1754944e-38, %v6157
    %v6159 = vsel %vm6156, %v6158, %v6154
    %v6160 = vmul.f32 1.0, %v6159
    %v6161 = vrcp.pop %v4775
    %v6162 = vmul.f32 %v4775, %v6161
    %v6163 = vsub.f32 1.0, %v6162
    %v6164 = vmul.f32 %v6161, %v6163
    %v6165 = vadd.f32 %v6161, %v6164
    %vm6166 = vweird.f32 %v4775
    %vm6167 = vweird.f32 %v6161
    %vm6168 = vmor %vm6166, %vm6167
    %v6169 = vsel %vm6168, %v6161, %v6165
    %v6170 = vand.u32 2147483647, %v4775
    %vm6171 = vcmp.eq.f32.partialorder %v6170, 8.507059e+37
    %v6172 = vand.u32 %v4775, 2147483648
    %v6173 = vor.u32 1.1754944e-38, %v6172
    %v6174 = vsel %vm6171, %v6173, %v6169
    %v6175 = vmul.f32 1.0, %v6174
    %v6176 = vrcp.pop %v4776
    %v6177 = vmul.f32 %v4776, %v6176
    %v6178 = vsub.f32 1.0, %v6177
    %v6179 = vmul.f32 %v6176, %v6178
    %v6180 = vadd.f32 %v6176, %v6179
    %vm6181 = vweird.f32 %v4776
    %vm6182 = vweird.f32 %v6176
    %vm6183 = vmor %vm6181, %vm6182
    %v6184 = vsel %vm6183, %v6176, %v6180
    %v6185 = vand.u32 2147483647, %v4776
    %vm6186 = vcmp.eq.f32.partialorder %v6185, 8.507059e+37
    %v6187 = vand.u32 %v4776, 2147483648
    %v6188 = vor.u32 1.1754944e-38, %v6187
    %v6189 = vsel %vm6186, %v6188, %v6184
    %v6190 = vmul.f32 1.0, %v6189
    %v6191 = vrcp.pop %v4777
    %v6192 = vmul.f32 %v4777, %v6191
    %v6193 = vsub.f32 1.0, %v6192
    %v6194 = vmul.f32 %v6191, %v6193
    %v6195 = vadd.f32 %v6191, %v6194
    %vm6196 = vweird.f32 %v4777
    %vm6197 = vweird.f32 %v6191
    %vm6198 = vmor %vm6196, %vm6197
    %v6199 = vsel %vm6198, %v6191, %v6195
    %v6200 = vand.u32 2147483647, %v4777
    %vm6201 = vcmp.eq.f32.partialorder %v6200, 8.507059e+37
    %v6202 = vand.u32 %v4777, 2147483648
    %v6203 = vor.u32 1.1754944e-38, %v6202
    %v6204 = vsel %vm6201, %v6203, %v6199
    %v6205 = vmul.f32 1.0, %v6204
    %v6206 = vrcp.pop %v4778
    %v6207 = vmul.f32 %v4778, %v6206
    %v6208 = vsub.f32 1.0, %v6207
    %v6209 = vmul.f32 %v6206, %v6208
    %v6210 = vadd.f32 %v6206, %v6209
    %vm6211 = vweird.f32 %v4778
    %vm6212 = vweird.f32 %v6206
    %vm6213 = vmor %vm6211, %vm6212
    %v6214 = vsel %vm6213, %v6206, %v6210
    %v6215 = vand.u32 2147483647, %v4778
    %vm6216 = vcmp.eq.f32.partialorder %v6215, 8.507059e+37
    %v6217 = vand.u32 %v4778, 2147483648
    %v6218 = vor.u32 1.1754944e-38, %v6217
    %v6219 = vsel %vm6216, %v6218, %v6214
    %v6220 = vmul.f32 1.0, %v6219
    %v6221 = vrcp.pop %v4779
    %v6222 = vmul.f32 %v4779, %v6221
    %v6223 = vsub.f32 1.0, %v6222
    %v6224 = vmul.f32 %v6221, %v6223
    %v6225 = vadd.f32 %v6221, %v6224
    %vm6226 = vweird.f32 %v4779
    %vm6227 = vweird.f32 %v6221
    %vm6228 = vmor %vm6226, %vm6227
    %v6229 = vsel %vm6228, %v6221, %v6225
    %v6230 = vand.u32 2147483647, %v4779
    %vm6231 = vcmp.eq.f32.partialorder %v6230, 8.507059e+37
    %v6232 = vand.u32 %v4779, 2147483648
    %v6233 = vor.u32 1.1754944e-38, %v6232
    %v6234 = vsel %vm6231, %v6233, %v6229
    %v6235 = vmul.f32 1.0, %v6234
    %v6236 = vrcp.pop %v4780
    %v6237 = vmul.f32 %v4780, %v6236
    %v6238 = vsub.f32 1.0, %v6237
    %v6239 = vmul.f32 %v6236, %v6238
    %v6240 = vadd.f32 %v6236, %v6239
    %vm6241 = vweird.f32 %v4780
    %vm6242 = vweird.f32 %v6236
    %vm6243 = vmor %vm6241, %vm6242
    %v6244 = vsel %vm6243, %v6236, %v6240
    %v6245 = vand.u32 2147483647, %v4780
    %vm6246 = vcmp.eq.f32.partialorder %v6245, 8.507059e+37
    %v6247 = vand.u32 %v4780, 2147483648
    %v6248 = vor.u32 1.1754944e-38, %v6247
    %v6249 = vsel %vm6246, %v6248, %v6244
    %v6250 = vmul.f32 1.0, %v6249
    %v6251 = vrcp.pop %v4781
    %v6252 = vmul.f32 %v4781, %v6251
    %v6253 = vsub.f32 1.0, %v6252
    %v6254 = vmul.f32 %v6251, %v6253
    %v6255 = vadd.f32 %v6251, %v6254
    %vm6256 = vweird.f32 %v4781
    %vm6257 = vweird.f32 %v6251
    %vm6258 = vmor %vm6256, %vm6257
    %v6259 = vsel %vm6258, %v6251, %v6255
    %v6260 = vand.u32 2147483647, %v4781
    %vm6261 = vcmp.eq.f32.partialorder %v6260, 8.507059e+37
    %v6262 = vand.u32 %v4781, 2147483648
    %v6263 = vor.u32 1.1754944e-38, %v6262
    %v6264 = vsel %vm6261, %v6263, %v6259
    %v6265 = vmul.f32 1.0, %v6264
    %v6266 = vrcp.pop %v4782
    %v6267 = vmul.f32 %v4782, %v6266
    %v6268 = vsub.f32 1.0, %v6267
    %v6269 = vmul.f32 %v6266, %v6268
    %v6270 = vadd.f32 %v6266, %v6269
    %vm6271 = vweird.f32 %v4782
    %vm6272 = vweird.f32 %v6266
    %vm6273 = vmor %vm6271, %vm6272
    %v6274 = vsel %vm6273, %v6266, %v6270
    %v6275 = vand.u32 2147483647, %v4782
    %vm6276 = vcmp.eq.f32.partialorder %v6275, 8.507059e+37
    %v6277 = vand.u32 %v4782, 2147483648
    %v6278 = vor.u32 1.1754944e-38, %v6277
    %v6279 = vsel %vm6276, %v6278, %v6274
    %v6280 = vmul.f32 1.0, %v6279
    %v6281 = vrcp.pop %v4783
    %v6282 = vmul.f32 %v4783, %v6281
    %v6283 = vsub.f32 1.0, %v6282
    %v6284 = vmul.f32 %v6281, %v6283
    %v6285 = vadd.f32 %v6281, %v6284
    %vm6286 = vweird.f32 %v4783
    %vm6287 = vweird.f32 %v6281
    %vm6288 = vmor %vm6286, %vm6287
    %v6289 = vsel %vm6288, %v6281, %v6285
    %v6290 = vand.u32 2147483647, %v4783
    %vm6291 = vcmp.eq.f32.partialorder %v6290, 8.507059e+37
    %v6292 = vand.u32 %v4783, 2147483648
    %v6293 = vor.u32 1.1754944e-38, %v6292
    %v6294 = vsel %vm6291, %v6293, %v6289
    %v6295 = vmul.f32 1.0, %v6294
    %v6296 = vrcp.pop %v4784
    %v6297 = vmul.f32 %v4784, %v6296
    %v6298 = vsub.f32 1.0, %v6297
    %v6299 = vmul.f32 %v6296, %v6298
    %v6300 = vadd.f32 %v6296, %v6299
    %vm6301 = vweird.f32 %v4784
    %vm6302 = vweird.f32 %v6296
    %vm6303 = vmor %vm6301, %vm6302
    %v6304 = vsel %vm6303, %v6296, %v6300
    %v6305 = vand.u32 2147483647, %v4784
    %vm6306 = vcmp.eq.f32.partialorder %v6305, 8.507059e+37
    %v6307 = vand.u32 %v4784, 2147483648
    %v6308 = vor.u32 1.1754944e-38, %v6307
    %v6309 = vsel %vm6306, %v6308, %v6304
    %v6310 = vmul.f32 1.0, %v6309
    %v6311 = vrcp.pop %v4785
    %v6312 = vmul.f32 %v4785, %v6311
    %v6313 = vsub.f32 1.0, %v6312
    %v6314 = vmul.f32 %v6311, %v6313
    %v6315 = vadd.f32 %v6311, %v6314
    %vm6316 = vweird.f32 %v4785
    %vm6317 = vweird.f32 %v6311
    %vm6318 = vmor %vm6316, %vm6317
    %v6319 = vsel %vm6318, %v6311, %v6315
    %v6320 = vand.u32 2147483647, %v4785
    %vm6321 = vcmp.eq.f32.partialorder %v6320, 8.507059e+37
    %v6322 = vand.u32 %v4785, 2147483648
    %v6323 = vor.u32 1.1754944e-38, %v6322
    %v6324 = vsel %vm6321, %v6323, %v6319
    %v6325 = vmul.f32 1.0, %v6324
    %v6326 = vrcp.pop %v4786
    %v6327 = vmul.f32 %v4786, %v6326
    %v6328 = vsub.f32 1.0, %v6327
    %v6329 = vmul.f32 %v6326, %v6328
    %v6330 = vadd.f32 %v6326, %v6329
    %vm6331 = vweird.f32 %v4786
    %vm6332 = vweird.f32 %v6326
    %vm6333 = vmor %vm6331, %vm6332
    %v6334 = vsel %vm6333, %v6326, %v6330
    %v6335 = vand.u32 2147483647, %v4786
    %vm6336 = vcmp.eq.f32.partialorder %v6335, 8.507059e+37
    %v6337 = vand.u32 %v4786, 2147483648
    %v6338 = vor.u32 1.1754944e-38, %v6337
    %v6339 = vsel %vm6336, %v6338, %v6334
    %v6340 = vmul.f32 1.0, %v6339
    %v6341 = vrcp.pop %v4787
    %v6342 = vmul.f32 %v4787, %v6341
    %v6343 = vsub.f32 1.0, %v6342
    %v6344 = vmul.f32 %v6341, %v6343
    %v6345 = vadd.f32 %v6341, %v6344
    %vm6346 = vweird.f32 %v4787
    %vm6347 = vweird.f32 %v6341
    %vm6348 = vmor %vm6346, %vm6347
    %v6349 = vsel %vm6348, %v6341, %v6345
    %v6350 = vand.u32 2147483647, %v4787
    %vm6351 = vcmp.eq.f32.partialorder %v6350, 8.507059e+37
    %v6352 = vand.u32 %v4787, 2147483648
    %v6353 = vor.u32 1.1754944e-38, %v6352
    %v6354 = vsel %vm6351, %v6353, %v6349
    %v6355 = vmul.f32 1.0, %v6354
    %v6356 = vrcp.pop %v4788
    %v6357 = vmul.f32 %v4788, %v6356
    %v6358 = vsub.f32 1.0, %v6357
    %v6359 = vmul.f32 %v6356, %v6358
    %v6360 = vadd.f32 %v6356, %v6359
    %vm6361 = vweird.f32 %v4788
    %vm6362 = vweird.f32 %v6356
    %vm6363 = vmor %vm6361, %vm6362
    %v6364 = vsel %vm6363, %v6356, %v6360
    %v6365 = vand.u32 2147483647, %v4788
    %vm6366 = vcmp.eq.f32.partialorder %v6365, 8.507059e+37
    %v6367 = vand.u32 %v4788, 2147483648
    %v6368 = vor.u32 1.1754944e-38, %v6367
    %v6369 = vsel %vm6366, %v6368, %v6364
    %v6370 = vmul.f32 1.0, %v6369
    %v6371 = vrcp.pop %v4789
    %v6372 = vmul.f32 %v4789, %v6371
    %v6373 = vsub.f32 1.0, %v6372
    %v6374 = vmul.f32 %v6371, %v6373
    %v6375 = vadd.f32 %v6371, %v6374
    %vm6376 = vweird.f32 %v4789
    %vm6377 = vweird.f32 %v6371
    %vm6378 = vmor %vm6376, %vm6377
    %v6379 = vsel %vm6378, %v6371, %v6375
    %v6380 = vand.u32 2147483647, %v4789
    %vm6381 = vcmp.eq.f32.partialorder %v6380, 8.507059e+37
    %v6382 = vand.u32 %v4789, 2147483648
    %v6383 = vor.u32 1.1754944e-38, %v6382
    %v6384 = vsel %vm6381, %v6383, %v6379
    %v6385 = vmul.f32 1.0, %v6384
    %v6386 = vrcp.pop %v4790
    %v6387 = vmul.f32 %v4790, %v6386
    %v6388 = vsub.f32 1.0, %v6387
    %v6389 = vmul.f32 %v6386, %v6388
    %v6390 = vadd.f32 %v6386, %v6389
    %vm6391 = vweird.f32 %v4790
    %vm6392 = vweird.f32 %v6386
    %vm6393 = vmor %vm6391, %vm6392
    %v6394 = vsel %vm6393, %v6386, %v6390
    %v6395 = vand.u32 2147483647, %v4790
    %vm6396 = vcmp.eq.f32.partialorder %v6395, 8.507059e+37
    %v6397 = vand.u32 %v4790, 2147483648
    %v6398 = vor.u32 1.1754944e-38, %v6397
    %v6399 = vsel %vm6396, %v6398, %v6394
    %v6400 = vmul.f32 1.0, %v6399
    %v6401 = vrcp.pop %v4791
    %v6402 = vmul.f32 %v4791, %v6401
    %v6403 = vsub.f32 1.0, %v6402
    %v6404 = vmul.f32 %v6401, %v6403
    %v6405 = vadd.f32 %v6401, %v6404
    %vm6406 = vweird.f32 %v4791
    %vm6407 = vweird.f32 %v6401
    %vm6408 = vmor %vm6406, %vm6407
    %v6409 = vsel %vm6408, %v6401, %v6405
    %v6410 = vand.u32 2147483647, %v4791
    %vm6411 = vcmp.eq.f32.partialorder %v6410, 8.507059e+37
    %v6412 = vand.u32 %v4791, 2147483648
    %v6413 = vor.u32 1.1754944e-38, %v6412
    %v6414 = vsel %vm6411, %v6413, %v6409
    %v6415 = vmul.f32 1.0, %v6414
    %v6416 = vrcp.pop %v4792
    %v6417 = vmul.f32 %v4792, %v6416
    %v6418 = vsub.f32 1.0, %v6417
    %v6419 = vmul.f32 %v6416, %v6418
    %v6420 = vadd.f32 %v6416, %v6419
    %vm6421 = vweird.f32 %v4792
    %vm6422 = vweird.f32 %v6416
    %vm6423 = vmor %vm6421, %vm6422
    %v6424 = vsel %vm6423, %v6416, %v6420
    %v6425 = vand.u32 2147483647, %v4792
    %vm6426 = vcmp.eq.f32.partialorder %v6425, 8.507059e+37
    %v6427 = vand.u32 %v4792, 2147483648
    %v6428 = vor.u32 1.1754944e-38, %v6427
    %v6429 = vsel %vm6426, %v6428, %v6424
    %v6430 = vmul.f32 1.0, %v6429
    %v6431 = vrcp.pop %v4793
    %v6432 = vmul.f32 %v4793, %v6431
    %v6433 = vsub.f32 1.0, %v6432
    %v6434 = vmul.f32 %v6431, %v6433
    %v6435 = vadd.f32 %v6431, %v6434
    %vm6436 = vweird.f32 %v4793
    %vm6437 = vweird.f32 %v6431
    %vm6438 = vmor %vm6436, %vm6437
    %v6439 = vsel %vm6438, %v6431, %v6435
    %v6440 = vand.u32 2147483647, %v4793
    %vm6441 = vcmp.eq.f32.partialorder %v6440, 8.507059e+37
    %v6442 = vand.u32 %v4793, 2147483648
    %v6443 = vor.u32 1.1754944e-38, %v6442
    %v6444 = vsel %vm6441, %v6443, %v6439
    %v6445 = vmul.f32 1.0, %v6444
    %v6446 = vrcp.pop %v4794
    %v6447 = vmul.f32 %v4794, %v6446
    %v6448 = vsub.f32 1.0, %v6447
    %v6449 = vmul.f32 %v6446, %v6448
    %v6450 = vadd.f32 %v6446, %v6449
    %vm6451 = vweird.f32 %v4794
    %vm6452 = vweird.f32 %v6446
    %vm6453 = vmor %vm6451, %vm6452
    %v6454 = vsel %vm6453, %v6446, %v6450
    %v6455 = vand.u32 2147483647, %v4794
    %vm6456 = vcmp.eq.f32.partialorder %v6455, 8.507059e+37
    %v6457 = vand.u32 %v4794, 2147483648
    %v6458 = vor.u32 1.1754944e-38, %v6457
    %v6459 = vsel %vm6456, %v6458, %v6454
    %v6460 = vmul.f32 1.0, %v6459
    %v6461 = vrcp.pop %v4795
    %v6462 = vmul.f32 %v4795, %v6461
    %v6463 = vsub.f32 1.0, %v6462
    %v6464 = vmul.f32 %v6461, %v6463
    %v6465 = vadd.f32 %v6461, %v6464
    %vm6466 = vweird.f32 %v4795
    %vm6467 = vweird.f32 %v6461
    %vm6468 = vmor %vm6466, %vm6467
    %v6469 = vsel %vm6468, %v6461, %v6465
    %v6470 = vand.u32 2147483647, %v4795
    %vm6471 = vcmp.eq.f32.partialorder %v6470, 8.507059e+37
    %v6472 = vand.u32 %v4795, 2147483648
    %v6473 = vor.u32 1.1754944e-38, %v6472
    %v6474 = vsel %vm6471, %v6473, %v6469
    %v6475 = vmul.f32 1.0, %v6474
    %6476 = vst [vmem:[#allocation2] sm:$0xff] %v4810
    %6477 = vst [vmem:[#allocation2 + $0x8] sm:$0xff] %v4825
    %6478 = vst [vmem:[#allocation2 + $0x10] sm:$0xff] %v4840
    %6479 = vst [vmem:[#allocation2 + $0x18] sm:$0xff] %v4855
    %6480 = vst [vmem:[#allocation2 + $0x20] sm:$0xff] %v4870
    %6481 = vst [vmem:[#allocation2 + $0x28] sm:$0xff] %v4885
    %6482 = vst [vmem:[#allocation2 + $0x30] sm:$0xff] %v4900
    %6483 = vst [vmem:[#allocation2 + $0x38] sm:$0xff] %v4915
    %6484 = vst [vmem:[#allocation2 + $0x40] sm:$0xff] %v4930
    %6485 = vst [vmem:[#allocation2 + $0x48] sm:$0xff] %v4945
    %6486 = vst [vmem:[#allocation2 + $0x50] sm:$0xff] %v4960
    %6487 = vst [vmem:[#allocation2 + $0x58] sm:$0xff] %v4975
    %6488 = vst [vmem:[#allocation2 + $0x60] sm:$0xff] %v4990
    %6489 = vst [vmem:[#allocation2 + $0x68] sm:$0xff] %v5005
    %6490 = vst [vmem:[#allocation2 + $0x70] sm:$0xff] %v5020
    %6491 = vst [vmem:[#allocation2 + $0x78] sm:$0xff] %v5035
    %6492 = vst [vmem:[#allocation2 + $0x80] sm:$0xff] %v5050
    %6493 = vst [vmem:[#allocation2 + $0x88] sm:$0xff] %v5065
    %6494 = vst [vmem:[#allocation2 + $0x90] sm:$0xff] %v5080
    %6495 = vst [vmem:[#allocation2 + $0x98] sm:$0xff] %v5095
    %6496 = vst [vmem:[#allocation2 + $0xa0] sm:$0xff] %v5110
    %6497 = vst [vmem:[#allocation2 + $0xa8] sm:$0xff] %v5125
    %6498 = vst [vmem:[#allocation2 + $0xb0] sm:$0xff] %v5140
    %6499 = vst [vmem:[#allocation2 + $0xb8] sm:$0xff] %v5155
    %6500 = vst [vmem:[#allocation2 + $0xc0] sm:$0xff] %v5170
    %6501 = vst [vmem:[#allocation2 + $0xc8] sm:$0xff] %v5185
    %6502 = vst [vmem:[#allocation2 + $0xd0] sm:$0xff] %v5200
    %6503 = vst [vmem:[#allocation2 + $0xd8] sm:$0xff] %v5215
    %6504 = vst [vmem:[#allocation2 + $0xe0] sm:$0xff] %v5230
    %6505 = vst [vmem:[#allocation2 + $0xe8] sm:$0xff] %v5245
    %6506 = vst [vmem:[#allocation2 + $0xf0] sm:$0xff] %v5260
    %6507 = vst [vmem:[#allocation2 + $0xf8] sm:$0xff] %v5275
    %6508 = vst [vmem:[#allocation2 + $0x100] sm:$0xff] %v5290
    %6509 = vst [vmem:[#allocation2 + $0x108] sm:$0xff] %v5305
    %6510 = vst [vmem:[#allocation2 + $0x110] sm:$0xff] %v5320
    %6511 = vst [vmem:[#allocation2 + $0x118] sm:$0xff] %v5335
    %6512 = vst [vmem:[#allocation2 + $0x120] sm:$0xff] %v5350
    %6513 = vst [vmem:[#allocation2 + $0x128] sm:$0xff] %v5365
    %6514 = vst [vmem:[#allocation2 + $0x130] sm:$0xff] %v5380
    %6515 = vst [vmem:[#allocation2 + $0x138] sm:$0xff] %v5395
    %6516 = vst [vmem:[#allocation2 + $0x140] sm:$0xff] %v5410
    %6517 = vst [vmem:[#allocation2 + $0x148] sm:$0xff] %v5425
    %6518 = vst [vmem:[#allocation2 + $0x150] sm:$0xff] %v5440
    %6519 = vst [vmem:[#allocation2 + $0x158] sm:$0xff] %v5455
    %6520 = vst [vmem:[#allocation2 + $0x160] sm:$0xff] %v5470
    %6521 = vst [vmem:[#allocation2 + $0x168] sm:$0xff] %v5485
    %6522 = vst [vmem:[#allocation2 + $0x170] sm:$0xff] %v5500
    %6523 = vst [vmem:[#allocation2 + $0x178] sm:$0xff] %v5515
    %6524 = vst [vmem:[#allocation2 + $0x180] sm:$0xff] %v5530
    %6525 = vst [vmem:[#allocation2 + $0x188] sm:$0xff] %v5545
    %6526 = vst [vmem:[#allocation2 + $0x190] sm:$0xff] %v5560
    %6527 = vst [vmem:[#allocation2 + $0x198] sm:$0xff] %v5575
    %6528 = vst [vmem:[#allocation2 + $0x1a0] sm:$0xff] %v5590
    %6529 = vst [vmem:[#allocation2 + $0x1a8] sm:$0xff] %v5605
    %6530 = vst [vmem:[#allocation2 + $0x1b0] sm:$0xff] %v5620
    %6531 = vst [vmem:[#allocation2 + $0x1b8] sm:$0xff] %v5635
    %6532 = vst [vmem:[#allocation2 + $0x1c0] sm:$0xff] %v5650
    %6533 = vst [vmem:[#allocation2 + $0x1c8] sm:$0xff] %v5665
    %6534 = vst [vmem:[#allocation2 + $0x1d0] sm:$0xff] %v5680
    %6535 = vst [vmem:[#allocation2 + $0x1d8] sm:$0xff] %v5695
    %6536 = vst [vmem:[#allocation2 + $0x1e0] sm:$0xff] %v5710
    %6537 = vst [vmem:[#allocation2 + $0x1e8] sm:$0xff] %v5725
    %6538 = vst [vmem:[#allocation2 + $0x1f0] sm:$0xff] %v5740
    %6539 = vst [vmem:[#allocation2 + $0x1f8] sm:$0xff] %v5755
    %6540 = vst [vmem:[#allocation2 + $0x200] sm:$0xff] %v5770
    %6541 = vst [vmem:[#allocation2 + $0x208] sm:$0xff] %v5785
    %6542 = vst [vmem:[#allocation2 + $0x210] sm:$0xff] %v5800
    %6543 = vst [vmem:[#allocation2 + $0x218] sm:$0xff] %v5815
    %6544 = vst [vmem:[#allocation2 + $0x220] sm:$0xff] %v5830
    %6545 = vst [vmem:[#allocation2 + $0x228] sm:$0xff] %v5845
    %6546 = vst [vmem:[#allocation2 + $0x230] sm:$0xff] %v5860
    %6547 = vst [vmem:[#allocation2 + $0x238] sm:$0xff] %v5875
    %6548 = vst [vmem:[#allocation2 + $0x240] sm:$0xff] %v5890
    %6549 = vst [vmem:[#allocation2 + $0x248] sm:$0xff] %v5905
    %6550 = vst [vmem:[#allocation2 + $0x250] sm:$0xff] %v5920
    %6551 = vst [vmem:[#allocation2 + $0x258] sm:$0xff] %v5935
    %6552 = vst [vmem:[#allocation2 + $0x260] sm:$0xff] %v5950
    %6553 = vst [vmem:[#allocation2 + $0x268] sm:$0xff] %v5965
    %6554 = vst [vmem:[#allocation2 + $0x270] sm:$0xff] %v5980
    %6555 = vst [vmem:[#allocation2 + $0x278] sm:$0xff] %v5995
    %6556 = vst [vmem:[#allocation2 + $0x280] sm:$0xff] %v6010
    %6557 = vst [vmem:[#allocation2 + $0x288] sm:$0xff] %v6025
    %6558 = vst [vmem:[#allocation2 + $0x290] sm:$0xff] %v6040
    %6559 = vst [vmem:[#allocation2 + $0x298] sm:$0xff] %v6055
    %6560 = vst [vmem:[#allocation2 + $0x2a0] sm:$0xff] %v6070
    %6561 = vst [vmem:[#allocation2 + $0x2a8] sm:$0xff] %v6085
    %6562 = vst [vmem:[#allocation2 + $0x2b0] sm:$0xff] %v6100
    %6563 = vst [vmem:[#allocation2 + $0x2b8] sm:$0xff] %v6115
    %6564 = vst [vmem:[#allocation2 + $0x2c0] sm:$0xff] %v6130
    %6565 = vst [vmem:[#allocation2 + $0x2c8] sm:$0xff] %v6145
    %6566 = vst [vmem:[#allocation2 + $0x2d0] sm:$0xff] %v6160
    %6567 = vst [vmem:[#allocation2 + $0x2d8] sm:$0xff] %v6175
    %6568 = vst [vmem:[#allocation2 + $0x2e0] sm:$0xff] %v6190
    %6569 = vst [vmem:[#allocation2 + $0x2e8] sm:$0xff] %v6205
    %6570 = vst [vmem:[#allocation2 + $0x2f0] sm:$0xff] %v6220
    %6571 = vst [vmem:[#allocation2 + $0x2f8] sm:$0xff] %v6235
    %6572 = vst [vmem:[#allocation2 + $0x300] sm:$0xff] %v6250
    %6573 = vst [vmem:[#allocation2 + $0x308] sm:$0xff] %v6265
    %6574 = vst [vmem:[#allocation2 + $0x310] sm:$0xff] %v6280
    %6575 = vst [vmem:[#allocation2 + $0x318] sm:$0xff] %v6295
    %6576 = vst [vmem:[#allocation2 + $0x320] sm:$0xff] %v6310
    %6577 = vst [vmem:[#allocation2 + $0x328] sm:$0xff] %v6325
    %6578 = vst [vmem:[#allocation2 + $0x330] sm:$0xff] %v6340
    %6579 = vst [vmem:[#allocation2 + $0x338] sm:$0xff] %v6355
    %6580 = vst [vmem:[#allocation2 + $0x340] sm:$0xff] %v6370
    %6581 = vst [vmem:[#allocation2 + $0x348] sm:$0xff] %v6385
    %6582 = vst [vmem:[#allocation2 + $0x350] sm:$0xff] %v6400
    %6583 = vst [vmem:[#allocation2 + $0x358] sm:$0xff] %v6415
    %6584 = vst [vmem:[#allocation2 + $0x360] sm:$0xff] %v6430
    %6585 = vst [vmem:[#allocation2 + $0x368] sm:$0xff] %v6445
    %6586 = vst [vmem:[#allocation2 + $0x370] sm:$0xff] %v6460
    %6587 = vst [vmem:[#allocation2 + $0x378] sm:$0xff] %v6475
    // Predicated region
    $region30: #{autoencoder_forward.1} parent=1 // pred_check
      _
    $region31: #{autoencoder_forward.1} parent=1 // pred_check_branch
      %6589 = sbr.rel (0) target = $region33
    $region32: #{autoencoder_forward.1} parent=1 // pred_region
      %6591 = vsyncadd [#allocation3], 0
      %s6592 = sshll.u32 [#allocation2], 4
      %s6593 = int_to_ptr.vmem [resolvable:$true] %s6592
      %s6594 = sshll.u32 %s7, 4
      %s6595 = int_to_ptr.hbm [resolvable:$true] %s6594
      %6600 = dma.vmem_to_hbm [thread:$0]  %s6593, 14336, %s6595, [#allocation3], 896, 896, 56
    $region33: #{autoencoder_forward.1} parent=1 // pred_fallthru
      _
    // Predicated region
    $region34: #{autoencoder_forward.1} parent=1 // pred_check
      _
    $region35: #{autoencoder_forward.1} parent=1 // pred_check_branch
      %6602 = sbr.rel (0) target = $region37
    $region36: #{autoencoder_forward.1} parent=1 // pred_region
      %6604 = dma.done [#allocation3], 14336
    $region37: #{autoencoder_forward.1} parent=1 // pred_fallthru
      _
    %6605 = vsyncpa [#allocation3], 1

</llo_original>
